<compile_context>
chip_gen: v7x
topology: tpu7x:2x2x1
jax: 0.10.0
libtpu: 0.0.40
codegen_flags: <defaults>
</compile_context>

<pallas_src>
import functools
import math

import jax
import jax.numpy as jnp
from jax.experimental import pallas as pl
from jax.experimental.pallas import tpu as pltpu

EPS = 1e-5  # torch.nn.LayerNorm default eps


def _layernorm(x, gamma, beta):
    mu = jnp.mean(x, axis=-1, keepdims=True)
    var = jnp.mean((x - mu) ** 2, axis=-1, keepdims=True)
    return (x - mu) * jax.lax.rsqrt(var + EPS) * gamma + beta


def _gelu_exact(x):
    # torch.nn.GELU default = exact erf formulation (kept for exact semantics;
    # the tanh approximation would move work to the EUP but changes results).
    return 0.5 * x * (1.0 + jax.lax.erf(x * (1.0 / jnp.sqrt(2.0)).astype(x.dtype)))


def transformer_kernel(n_heads,
                       x0_ref, vecs_ref, wqkv_ref, wo_ref, w1_ref, w2_ref,
                       out_ref, o_sc):
    layer = pl.program_id(1)
    Bt, N, D = out_ref.shape
    H = n_heads
    hd = D // H
    scale = 1.0 / (hd ** 0.5)

    # First depth step for this batch tile: seed the resident residual stream
    # with the (already LayerNorm'ed + pos-embedded) input from the wrapper.
    @pl.when(layer == 0)
    def _():
        out_ref[...] = x0_ref[...]

    x = out_ref[...]            # (Bt, N, D) f32, resident in VMEM across depth

    vecs = vecs_ref[0]          # (8, D) packed per-layer vectors
    aln_g, aln_b = vecs[0], vecs[1]
    fln_g, fln_b = vecs[2], vecs[3]
    b1, b2 = vecs[4], vecs[5]

    # ---------------- Attention2d sublayer:  x = x + attn(x) ----------------
    xn = _layernorm(x, aln_g, aln_b)
    xb = xn.reshape(Bt * N, D).astype(jnp.bfloat16)

    # Fused QKV projection: one full-lane (D, 3D)-wide MXU matmul.
    qkv = jnp.dot(xb, wqkv_ref[0], preferred_element_type=jnp.float32)
    q3 = (qkv[:, :D] * scale).reshape(Bt, N, D).astype(jnp.bfloat16)
    k3 = qkv[:, D:2 * D].reshape(Bt, N, D).astype(jnp.bfloat16)
    v3 = qkv[:, 2 * D:].reshape(Bt, N, D).astype(jnp.bfloat16)

    for h in range(H):                         # static unroll over heads
        lo, hi = h * hd, (h + 1) * hd
        qh, kh, vh = q3[:, :, lo:hi], k3[:, :, lo:hi], v3[:, :, lo:hi]
        s = jnp.einsum('bik,bjk->bij', qh, kh,
                       preferred_element_type=jnp.float32)        # (Bt, N, N)
        s = s - jnp.max(s, axis=-1, keepdims=True)
        e = jnp.exp(s)
        inv = pl.reciprocal(jnp.sum(e, axis=-1, keepdims=True), approx=True)
        a = (e * inv).astype(jnp.bfloat16)
        oh = jnp.einsum('bij,bjk->bik', a, vh,
                        preferred_element_type=jnp.float32)       # (Bt, N, hd)
        o_sc[:, lo:hi] = oh.reshape(Bt * N, hd).astype(jnp.bfloat16)

    # Single full-contraction output projection (K = D instead of H x K = hd).
    attn = jnp.dot(o_sc[...], wo_ref[0], preferred_element_type=jnp.float32)
    x = x + attn.reshape(Bt, N, D)

    # ---------------- FeedForward sublayer:  x = x + ff(x) ------------------
    xn = _layernorm(x, fln_g, fln_b)
    xb = xn.reshape(Bt * N, D).astype(jnp.bfloat16)
    h1 = jnp.dot(xb, w1_ref[0], preferred_element_type=jnp.float32) + b1
    h1 = _gelu_exact(h1).astype(jnp.bfloat16)
    h2 = jnp.dot(h1, w2_ref[0], preferred_element_type=jnp.float32) + b2
    x = x + h2.reshape(Bt, N, D)

    out_ref[...] = x


def _pick_batch_tile(B, N):
    """Smallest divisor of B giving >= 128 matmul rows, preferring an even
    (>= 2) parallel grid axis so v7x's two TensorCores stay balanced."""
    divisors = [d for d in range(1, B + 1) if B % d == 0]
    for d in divisors:
        if d * N >= 128 and (B // d) >= 2 and (B // d) % 2 == 0:
            return d
    for d in divisors:
        if d * N >= 128:
            return d
    return B


def transformer_forward(x, pos, params, n_heads, batch_tile=None):
    B, N, D = x.shape
    L = params['wq'].shape[0]
    H = n_heads
    assert D % H == 0, "dim must be divisible by n_heads"
    Dff = params['w1'].shape[-1]
    assert Dff == D, "packed bias layout assumes hidden_dim == dim (as in Transformer)"

    if batch_tile is None:
        batch_tile = _pick_batch_tile(B, N)
    assert B % batch_tile == 0
    n_bt = B // batch_tile

    # ---- hoisted prologue (plain JAX): initial LayerNorm + pos embedding ----
    x0 = (_layernorm(x.astype(jnp.float32), params['g0'][0], params['b0'][0])
          + pos.astype(jnp.float32))                               # (B, N, D)

    # ---- pack weights: fused QKV, bf16, packed per-layer vectors ------------
    wqkv = jnp.concatenate(
        [params['wq'], params['wk'], params['wv']], axis=-1).astype(jnp.bfloat16)
    wo = params['wo'].astype(jnp.bfloat16)
    w1 = params['w1'].astype(jnp.bfloat16)
    w2 = params['w2'].astype(jnp.bfloat16)
    vecs = jnp.stack([params['aln_g'], params['aln_b'],
                      params['fln_g'], params['fln_b'],
                      params['b1'], params['b2']], axis=1)         # (L, 6, D)
    vecs = jnp.pad(vecs, ((0, 0), (0, 2), (0, 0)))                 # (L, 8, D)

    resid = pl.BlockSpec((batch_tile, N, D), lambda b, l: (b, 0, 0))
    vecsL = pl.BlockSpec((1, 8, D), lambda b, l: (l, 0, 0))
    wqkvL = pl.BlockSpec((1, D, 3 * D), lambda b, l: (l, 0, 0))
    matL = pl.BlockSpec((1, D, D), lambda b, l: (l, 0, 0))

    # ---- explicit VMEM budget: blocks x buffer count, plus headroom ---------
    def nbytes(shape, dt):
        return math.prod(shape) * jnp.dtype(dt).itemsize

    block_bytes = (
        2 * nbytes((batch_tile, N, D), jnp.float32)        # x0 (double-buffered)
        + 2 * nbytes((batch_tile, N, D), jnp.float32)      # resident output
        + 2 * nbytes((1, 8, D), jnp.float32)               # packed vectors
        + 2 * nbytes((1, D, 3 * D), jnp.bfloat16)          # Wqkv
        + 2 * nbytes((1, D, D), jnp.bfloat16)              # Wo
        + 2 * nbytes((1, D, Dff), jnp.bfloat16)            # W1
        + 2 * nbytes((1, Dff, D), jnp.bfloat16)            # W2
        + nbytes((batch_tile * N, D), jnp.bfloat16)        # o_sc scratch
    )
    interm_bytes = (
        nbytes((batch_tile * N, 3 * D), jnp.float32)       # fused QKV slab
        + 3 * nbytes((batch_tile, N, N), jnp.float32)      # per-head scores/exp
        + nbytes((batch_tile * N, Dff), jnp.float32)       # FF hidden
    )
    vmem_limit = int(min(max(2 * (block_bytes + interm_bytes) + (8 << 20),
                             24 << 20), 48 << 20))

    return pl.pallas_call(
        functools.partial(transformer_kernel, n_heads),
        out_shape=jax.ShapeDtypeStruct((B, N, D), jnp.float32),
        grid_spec=pltpu.PrefetchScalarGridSpec(
            num_scalar_prefetch=0,
            grid=(n_bt, L),
            in_specs=[resid, vecsL, wqkvL, matL, matL, matL],
            out_specs=resid,
            scratch_shapes=[pltpu.VMEM((batch_tile * N, D), jnp.bfloat16)],
        ),
        compiler_params=pltpu.CompilerParams(
            dimension_semantics=("parallel", "arbitrary"),
            vmem_limit_bytes=vmem_limit),
    )(x0, vecs, wqkv, wo, w1, w2)


# ------------------------------ pure-JAX reference -----------------------------
def reference(x, pos, params, n_heads):
    def ln(z, g, b):
        mu = z.mean(-1, keepdims=True)
        var = ((z - mu) ** 2).mean(-1, keepdims=True)
        return (z - mu) / jnp.sqrt(var + EPS) * g + b

    B, N, D = x.shape
    hd = D // n_heads
    x = ln(x, params['g0'][0], params['b0'][0]) + pos
    for l in range(params['wq'].shape[0]):
        xn = ln(x, params['aln_g'][l], params['aln_b'][l])
        q = xn @ params['wq'][l]
        k = xn @ params['wk'][l]
        v = xn @ params['wv'][l]
        q = q.reshape(B, N, n_heads, hd).transpose(0, 2, 1, 3)
        k = k.reshape(B, N, n_heads, hd).transpose(0, 2, 1, 3)
        v = v.reshape(B, N, n_heads, hd).transpose(0, 2, 1, 3)
        s = jnp.einsum('bhik,bhjk->bhij', q, k) / (hd ** 0.5)
        a = jax.nn.softmax(s, axis=-1)
        o = jnp.einsum('bhij,bhjk->bhik', a, v)
        o = o.transpose(0, 2, 1, 3).reshape(B, N, D)
        x = x + o @ params['wo'][l]
        xn = ln(x, params['fln_g'][l], params['fln_b'][l])
        h = jax.nn.gelu(xn @ params['w1'][l] + params['b1'][l], approximate=False)
        x = x + (h @ params['w2'][l] + params['b2'][l])
    return x


# ------------------------------------ main --------------------------------------
if __name__ == "__main__":
    # Small config consistent with Transformer(dim, depth, heads, context=seq).
    # Sized so each batch tile gives >= 128 matmul rows (Bt*N = 128) and the
    # parallel batch-grid axis is 2 (even, for v7x megacore). head_dim = 32.
    B, N, D = 4, 64, 128
    depth, heads = 2, 4

    key = jax.random.PRNGKey(0)
    ks = jax.random.split(key, 20)

    def rnd(k, shape, scale=0.05):
        return (scale * jax.random.normal(k, shape)).astype(jnp.float32)

    params = {
        # first LayerNorm (stored as (1, D))
        'g0': 1.0 + rnd(ks[0], (1, D)),
        'b0': rnd(ks[1], (1, D)),
        # per-layer attention params, stacked along depth, stored (in, out)
        'aln_g': 1.0 + rnd(ks[2], (depth, D)),
        'aln_b': rnd(ks[3], (depth, D)),
        'wq': rnd(ks[4], (depth, D, D)),
        'wk': rnd(ks[5], (depth, D, D)),
        'wv': rnd(ks[6], (depth, D, D)),
        'wo': rnd(ks[7], (depth, D, D)),
        # per-layer feed-forward params (hidden_dim == dim, as in Transformer)
        'fln_g': 1.0 + rnd(ks[8], (depth, D)),
        'fln_b': rnd(ks[9], (depth, D)),
        'w1': rnd(ks[10], (depth, D, D)),
        'b1': rnd(ks[11], (depth, D)),
        'w2': rnd(ks[12], (depth, D, D)),
        'b2': rnd(ks[13], (depth, D)),
    }

    x = jax.random.normal(ks[14], (B, N, D), dtype=jnp.float32)
    pos = rnd(ks[15], (1, N, D), scale=1.0)  # positional_embedding with context=N

    out = transformer_forward(x, pos, params, heads)
    out = jax.block_until_ready(out)

    ref = reference(x, pos, params, heads)
    assert out.shape == (B, N, D)
    max_err = float(jnp.max(jnp.abs(out - ref)))
    # bf16 matmul operands (f32 accumulation) => loosened tolerance vs f32 ref.
    assert jnp.allclose(out, ref, atol=5e-2, rtol=5e-2), \
        f"mismatch vs reference (max abs err {max_err})"

    print("KERNEL_OK")
</pallas_src>

<mosaic_0001>
module attributes {stable_mosaic.version = 11 : i64} {
  func.func @transformer_kernel(%arg0: i32, %arg1: i32, %arg2: memref<2x64x128xf32, #tpu.memory_space<vmem>>, %arg3: memref<1x8x128xf32, #tpu.memory_space<vmem>>, %arg4: memref<1x128x384xbf16, #tpu.memory_space<vmem>>, %arg5: memref<1x128x128xbf16, #tpu.memory_space<vmem>>, %arg6: memref<1x128x128xbf16, #tpu.memory_space<vmem>>, %arg7: memref<1x128x128xbf16, #tpu.memory_space<vmem>>, %arg8: memref<2x64x128xf32, #tpu.memory_space<vmem>>, %arg9: memref<128x128xbf16, #tpu.memory_space<vmem>>) attributes {dimension_semantics = [#tpu.dimension_semantics<parallel>, #tpu.dimension_semantics<arbitrary>], iteration_bounds = array<i64: 2, 2>, scalar_prefetch = 0 : i64, scratch_operands = 1 : i64, tpu.core_type = #tpu.core_type<tc>, window_params = [{transform_indices = @transform_0, window_bounds = array<i64: 2, 64, 128>}, {transform_indices = @transform_1, window_bounds = array<i64: 1, 8, 128>}, {transform_indices = @transform_2, window_bounds = array<i64: 1, 128, 384>}, {transform_indices = @transform_3, window_bounds = array<i64: 1, 128, 128>}, {transform_indices = @transform_4, window_bounds = array<i64: 1, 128, 128>}, {transform_indices = @transform_5, window_bounds = array<i64: 1, 128, 128>}, {transform_indices = @transform_6, window_bounds = array<i64: 2, 64, 128>}]} {
    %c0_i32 = arith.constant 0 : i32
    %0 = arith.cmpi eq, %arg1, %c0_i32 : i32
    %1 = arith.extui %0 : i1 to i32
    %c0_i32_0 = arith.constant 0 : i32
    %2 = arith.cmpi ne, %1, %c0_i32_0 : i32
    scf.if %2 {
      %c0_62 = arith.constant 0 : index
      %c0_63 = arith.constant 0 : index
      %c0_64 = arith.constant 0 : index
      %192 = vector.load %arg2[%c0_62, %c0_63, %c0_64] : memref<2x64x128xf32, #tpu.memory_space<vmem>>, vector<2x64x128xf32>
      %c0_65 = arith.constant 0 : index
      %c0_66 = arith.constant 0 : index
      %c0_67 = arith.constant 0 : index
      %193 = vector.load %arg8[%c0_65, %c0_66, %c0_67] : memref<2x64x128xf32, #tpu.memory_space<vmem>>, vector<2x64x128xf32>
      tpu.vector_store %arg8[%c0_65, %c0_66, %c0_67], %192 {strides = array<i32>} : memref<2x64x128xf32, #tpu.memory_space<vmem>>, vector<2x64x128xf32>,
    } else {
    }
    %c0 = arith.constant 0 : index
    %c0_1 = arith.constant 0 : index
    %c0_2 = arith.constant 0 : index
    %3 = vector.load %arg8[%c0, %c0_1, %c0_2] : memref<2x64x128xf32, #tpu.memory_space<vmem>>, vector<2x64x128xf32>
    %c0_3 = arith.constant 0 : index
    %c0_4 = arith.constant 0 : index
    %c0_5 = arith.constant 0 : index
    %4 = vector.load %arg3[%c0_3, %c0_4, %c0_5] : memref<1x8x128xf32, #tpu.memory_space<vmem>>, vector<1x8x128xf32>
    %5 = vector.shape_cast %4 : vector<1x8x128xf32> to vector<8x128xf32>
    %6 = vector.extract_strided_slice %5 {offsets = [0, 0], sizes = [1, 128], strides = [1, 1]} : vector<8x128xf32> to vector<1x128xf32>
    %7 = vector.shape_cast %6 : vector<1x128xf32> to vector<128xf32>
    %8 = vector.extract_strided_slice %5 {offsets = [1, 0], sizes = [1, 128], strides = [1, 1]} : vector<8x128xf32> to vector<1x128xf32>
    %9 = vector.shape_cast %8 : vector<1x128xf32> to vector<128xf32>
    %10 = vector.extract_strided_slice %5 {offsets = [2, 0], sizes = [1, 128], strides = [1, 1]} : vector<8x128xf32> to vector<1x128xf32>
    %11 = vector.shape_cast %10 : vector<1x128xf32> to vector<128xf32>
    %12 = vector.extract_strided_slice %5 {offsets = [3, 0], sizes = [1, 128], strides = [1, 1]} : vector<8x128xf32> to vector<1x128xf32>
    %13 = vector.shape_cast %12 : vector<1x128xf32> to vector<128xf32>
    %14 = vector.extract_strided_slice %5 {offsets = [4, 0], sizes = [1, 128], strides = [1, 1]} : vector<8x128xf32> to vector<1x128xf32>
    %15 = vector.shape_cast %14 : vector<1x128xf32> to vector<128xf32>
    %16 = vector.extract_strided_slice %5 {offsets = [5, 0], sizes = [1, 128], strides = [1, 1]} : vector<8x128xf32> to vector<1x128xf32>
    %17 = vector.shape_cast %16 : vector<1x128xf32> to vector<128xf32>
    %cst = arith.constant dense<0.000000e+00> : vector<2x64xf32>
    %18 = vector.multi_reduction <add>, %3, %cst [2] : vector<2x64x128xf32> to vector<2x64xf32>
    %19 = vector.shape_cast %18 : vector<2x64xf32> to vector<2x64x1xf32>
    %cst_6 = arith.constant 1.280000e+02 : f32
    %20 = vector.broadcast %cst_6 : f32 to vector<2x64x1xf32>
    %21 = arith.divf %19, %20 : vector<2x64x1xf32>
    %22 = vector.broadcast %21 : vector<2x64x1xf32> to vector<2x64x128xf32>
    %23 = arith.subf %3, %22 : vector<2x64x128xf32>
    %24 = arith.mulf %23, %23 : vector<2x64x128xf32>
    %cst_7 = arith.constant dense<0.000000e+00> : vector<2x64xf32>
    %25 = vector.multi_reduction <add>, %24, %cst_7 [2] : vector<2x64x128xf32> to vector<2x64xf32>
    %26 = vector.shape_cast %25 : vector<2x64xf32> to vector<2x64x1xf32>
    %cst_8 = arith.constant 1.280000e+02 : f32
    %27 = vector.broadcast %cst_8 : f32 to vector<2x64x1xf32>
    %28 = arith.divf %26, %27 : vector<2x64x1xf32>
    %29 = vector.broadcast %21 : vector<2x64x1xf32> to vector<2x64x128xf32>
    %30 = arith.subf %3, %29 : vector<2x64x128xf32>
    %cst_9 = arith.constant 9.99999974E-6 : f32
    %31 = vector.broadcast %cst_9 : f32 to vector<2x64x1xf32>
    %32 = arith.addf %28, %31 : vector<2x64x1xf32>
    %33 = math.rsqrt %32 : vector<2x64x1xf32>
    %34 = vector.broadcast %33 : vector<2x64x1xf32> to vector<2x64x128xf32>
    %35 = arith.mulf %30, %34 : vector<2x64x128xf32>
    %36 = vector.shape_cast %7 : vector<128xf32> to vector<1x1x128xf32>
    %37 = vector.broadcast %36 : vector<1x1x128xf32> to vector<2x64x128xf32>
    %38 = arith.mulf %35, %37 : vector<2x64x128xf32>
    %39 = vector.shape_cast %9 : vector<128xf32> to vector<1x1x128xf32>
    %40 = vector.broadcast %39 : vector<1x1x128xf32> to vector<2x64x128xf32>
    %41 = arith.addf %38, %40 : vector<2x64x128xf32>
    %42 = vector.shape_cast %41 : vector<2x64x128xf32> to vector<128x128xf32>
    %43 = arith.truncf %42 : vector<128x128xf32> to vector<128x128xbf16>
    %c0_10 = arith.constant 0 : index
    %c0_11 = arith.constant 0 : index
    %c0_12 = arith.constant 0 : index
    %44 = vector.load %arg4[%c0_10, %c0_11, %c0_12] : memref<1x128x384xbf16, #tpu.memory_space<vmem>>, vector<1x128x384xbf16>
    %45 = vector.shape_cast %44 : vector<1x128x384xbf16> to vector<128x384xbf16>
    %cst_13 = arith.constant dense<0.000000e+00> : vector<128x384xf32>
    %46 = tpu.matmul %43, %45, %cst_13 {dimension_numbers = #tpu.dot_dimension_numbers<[1], [0], [0], [1], [0, 0, 1, 1], [], []>} : vector<128x128xbf16>, vector<128x384xbf16>, vector<128x384xf32> -> vector<128x384xf32>
    %47 = vector.extract_strided_slice %46 {offsets = [0, 0], sizes = [128, 128], strides = [1, 1]} : vector<128x384xf32> to vector<128x128xf32>
    %cst_14 = arith.constant 0.176776692 : f32
    %48 = vector.broadcast %cst_14 : f32 to vector<128x128xf32>
    %49 = arith.mulf %47, %48 : vector<128x128xf32>
    %50 = vector.shape_cast %49 : vector<128x128xf32> to vector<2x64x128xf32>
    %51 = arith.truncf %50 : vector<2x64x128xf32> to vector<2x64x128xbf16>
    %52 = vector.extract_strided_slice %46 {offsets = [0, 128], sizes = [128, 128], strides = [1, 1]} : vector<128x384xf32> to vector<128x128xf32>
    %53 = vector.shape_cast %52 : vector<128x128xf32> to vector<2x64x128xf32>
    %54 = arith.truncf %53 : vector<2x64x128xf32> to vector<2x64x128xbf16>
    %55 = vector.extract_strided_slice %46 {offsets = [0, 256], sizes = [128, 128], strides = [1, 1]} : vector<128x384xf32> to vector<128x128xf32>
    %56 = vector.shape_cast %55 : vector<128x128xf32> to vector<2x64x128xf32>
    %57 = arith.truncf %56 : vector<2x64x128xf32> to vector<2x64x128xbf16>
    %58 = vector.extract_strided_slice %51 {offsets = [0, 0, 0], sizes = [2, 64, 32], strides = [1, 1, 1]} : vector<2x64x128xbf16> to vector<2x64x32xbf16>
    %59 = vector.extract_strided_slice %54 {offsets = [0, 0, 0], sizes = [2, 64, 32], strides = [1, 1, 1]} : vector<2x64x128xbf16> to vector<2x64x32xbf16>
    %60 = vector.extract_strided_slice %57 {offsets = [0, 0, 0], sizes = [2, 64, 32], strides = [1, 1, 1]} : vector<2x64x128xbf16> to vector<2x64x32xbf16>
    "tpu.trace_start"() <{level = 10 : i32, message = "bik,bjk->bij"}> : () -> ()
    %cst_15 = arith.constant dense<0.000000e+00> : vector<2x64x64xf32>
    %61 = tpu.matmul %58, %59, %cst_15 {dimension_numbers = #tpu.dot_dimension_numbers<[2], [2], [1], [1], [0, 0, 0, 1, 1, 1], [0], [0]>} : vector<2x64x32xbf16>, vector<2x64x32xbf16>, vector<2x64x64xf32> -> vector<2x64x64xf32>
    "tpu.trace_stop"() : () -> ()
    %cst_16 = arith.constant dense<0xFF800000> : vector<2x64xf32>
    %62 = vector.multi_reduction <maximumf>, %61, %cst_16 [2] : vector<2x64x64xf32> to vector<2x64xf32>
    %63 = vector.shape_cast %62 : vector<2x64xf32> to vector<2x64x1xf32>
    %64 = vector.broadcast %63 : vector<2x64x1xf32> to vector<2x64x64xf32>
    %65 = arith.subf %61, %64 : vector<2x64x64xf32>
    %66 = math.exp %65 : vector<2x64x64xf32>
    %cst_17 = arith.constant dense<0.000000e+00> : vector<2x64xf32>
    %67 = vector.multi_reduction <add>, %66, %cst_17 [2] : vector<2x64x64xf32> to vector<2x64xf32>
    %68 = vector.shape_cast %67 : vector<2x64xf32> to vector<2x64x1xf32>
    %69 = tpu.reciprocal %68 {approx = true} : vector<2x64x1xf32> -> vector<2x64x1xf32>
    %70 = vector.broadcast %69 : vector<2x64x1xf32> to vector<2x64x64xf32>
    %71 = arith.mulf %66, %70 : vector<2x64x64xf32>
    %72 = arith.truncf %71 : vector<2x64x64xf32> to vector<2x64x64xbf16>
    "tpu.trace_start"() <{level = 10 : i32, message = "bij,bjk->bik"}> : () -> ()
    %cst_18 = arith.constant dense<0.000000e+00> : vector<2x64x32xf32>
    %73 = tpu.matmul %72, %60, %cst_18 {dimension_numbers = #tpu.dot_dimension_numbers<[2], [1], [1], [2], [0, 0, 0, 1, 1, 2], [0], [0]>} : vector<2x64x64xbf16>, vector<2x64x32xbf16>, vector<2x64x32xf32> -> vector<2x64x32xf32>
    "tpu.trace_stop"() : () -> ()
    %74 = vector.shape_cast %73 : vector<2x64x32xf32> to vector<128x32xf32>
    %75 = arith.truncf %74 : vector<128x32xf32> to vector<128x32xbf16>
    %c0_19 = arith.constant 0 : index
    %c0_20 = arith.constant 0 : index
    %76 = vector.load %arg9[%c0_19, %c0_20] : memref<128x128xbf16, #tpu.memory_space<vmem>>, vector<128x32xbf16>
    tpu.vector_store %arg9[%c0_19, %c0_20], %75 {strides = array<i32>} : memref<128x128xbf16, #tpu.memory_space<vmem>>, vector<128x32xbf16>,
    %77 = vector.extract_strided_slice %51 {offsets = [0, 0, 32], sizes = [2, 64, 32], strides = [1, 1, 1]} : vector<2x64x128xbf16> to vector<2x64x32xbf16>
    %78 = vector.extract_strided_slice %54 {offsets = [0, 0, 32], sizes = [2, 64, 32], strides = [1, 1, 1]} : vector<2x64x128xbf16> to vector<2x64x32xbf16>
    %79 = vector.extract_strided_slice %57 {offsets = [0, 0, 32], sizes = [2, 64, 32], strides = [1, 1, 1]} : vector<2x64x128xbf16> to vector<2x64x32xbf16>
    "tpu.trace_start"() <{level = 10 : i32, message = "bik,bjk->bij"}> : () -> ()
    %cst_21 = arith.constant dense<0.000000e+00> : vector<2x64x64xf32>
    %80 = tpu.matmul %77, %78, %cst_21 {dimension_numbers = #tpu.dot_dimension_numbers<[2], [2], [1], [1], [0, 0, 0, 1, 1, 1], [0], [0]>} : vector<2x64x32xbf16>, vector<2x64x32xbf16>, vector<2x64x64xf32> -> vector<2x64x64xf32>
    "tpu.trace_stop"() : () -> ()
    %cst_22 = arith.constant dense<0xFF800000> : vector<2x64xf32>
    %81 = vector.multi_reduction <maximumf>, %80, %cst_22 [2] : vector<2x64x64xf32> to vector<2x64xf32>
    %82 = vector.shape_cast %81 : vector<2x64xf32> to vector<2x64x1xf32>
    %83 = vector.broadcast %82 : vector<2x64x1xf32> to vector<2x64x64xf32>
    %84 = arith.subf %80, %83 : vector<2x64x64xf32>
    %85 = math.exp %84 : vector<2x64x64xf32>
    %cst_23 = arith.constant dense<0.000000e+00> : vector<2x64xf32>
    %86 = vector.multi_reduction <add>, %85, %cst_23 [2] : vector<2x64x64xf32> to vector<2x64xf32>
    %87 = vector.shape_cast %86 : vector<2x64xf32> to vector<2x64x1xf32>
    %88 = tpu.reciprocal %87 {approx = true} : vector<2x64x1xf32> -> vector<2x64x1xf32>
    %89 = vector.broadcast %88 : vector<2x64x1xf32> to vector<2x64x64xf32>
    %90 = arith.mulf %85, %89 : vector<2x64x64xf32>
    %91 = arith.truncf %90 : vector<2x64x64xf32> to vector<2x64x64xbf16>
    "tpu.trace_start"() <{level = 10 : i32, message = "bij,bjk->bik"}> : () -> ()
    %cst_24 = arith.constant dense<0.000000e+00> : vector<2x64x32xf32>
    %92 = tpu.matmul %91, %79, %cst_24 {dimension_numbers = #tpu.dot_dimension_numbers<[2], [1], [1], [2], [0, 0, 0, 1, 1, 2], [0], [0]>} : vector<2x64x64xbf16>, vector<2x64x32xbf16>, vector<2x64x32xf32> -> vector<2x64x32xf32>
    "tpu.trace_stop"() : () -> ()
    %93 = vector.shape_cast %92 : vector<2x64x32xf32> to vector<128x32xf32>
    %94 = arith.truncf %93 : vector<128x32xf32> to vector<128x32xbf16>
    %c0_25 = arith.constant 0 : index
    %c32 = arith.constant 32 : index
    %95 = vector.load %arg9[%c0_25, %c32] : memref<128x128xbf16, #tpu.memory_space<vmem>>, vector<128x32xbf16>
    tpu.vector_store %arg9[%c0_25, %c32], %94 {strides = array<i32>} : memref<128x128xbf16, #tpu.memory_space<vmem>>, vector<128x32xbf16>,
    %96 = vector.extract_strided_slice %51 {offsets = [0, 0, 64], sizes = [2, 64, 32], strides = [1, 1, 1]} : vector<2x64x128xbf16> to vector<2x64x32xbf16>
    %97 = vector.extract_strided_slice %54 {offsets = [0, 0, 64], sizes = [2, 64, 32], strides = [1, 1, 1]} : vector<2x64x128xbf16> to vector<2x64x32xbf16>
    %98 = vector.extract_strided_slice %57 {offsets = [0, 0, 64], sizes = [2, 64, 32], strides = [1, 1, 1]} : vector<2x64x128xbf16> to vector<2x64x32xbf16>
    "tpu.trace_start"() <{level = 10 : i32, message = "bik,bjk->bij"}> : () -> ()
    %cst_26 = arith.constant dense<0.000000e+00> : vector<2x64x64xf32>
    %99 = tpu.matmul %96, %97, %cst_26 {dimension_numbers = #tpu.dot_dimension_numbers<[2], [2], [1], [1], [0, 0, 0, 1, 1, 1], [0], [0]>} : vector<2x64x32xbf16>, vector<2x64x32xbf16>, vector<2x64x64xf32> -> vector<2x64x64xf32>
    "tpu.trace_stop"() : () -> ()
    %cst_27 = arith.constant dense<0xFF800000> : vector<2x64xf32>
    %100 = vector.multi_reduction <maximumf>, %99, %cst_27 [2] : vector<2x64x64xf32> to vector<2x64xf32>
    %101 = vector.shape_cast %100 : vector<2x64xf32> to vector<2x64x1xf32>
    %102 = vector.broadcast %101 : vector<2x64x1xf32> to vector<2x64x64xf32>
    %103 = arith.subf %99, %102 : vector<2x64x64xf32>
    %104 = math.exp %103 : vector<2x64x64xf32>
    %cst_28 = arith.constant dense<0.000000e+00> : vector<2x64xf32>
    %105 = vector.multi_reduction <add>, %104, %cst_28 [2] : vector<2x64x64xf32> to vector<2x64xf32>
    %106 = vector.shape_cast %105 : vector<2x64xf32> to vector<2x64x1xf32>
    %107 = tpu.reciprocal %106 {approx = true} : vector<2x64x1xf32> -> vector<2x64x1xf32>
    %108 = vector.broadcast %107 : vector<2x64x1xf32> to vector<2x64x64xf32>
    %109 = arith.mulf %104, %108 : vector<2x64x64xf32>
    %110 = arith.truncf %109 : vector<2x64x64xf32> to vector<2x64x64xbf16>
    "tpu.trace_start"() <{level = 10 : i32, message = "bij,bjk->bik"}> : () -> ()
    %cst_29 = arith.constant dense<0.000000e+00> : vector<2x64x32xf32>
    %111 = tpu.matmul %110, %98, %cst_29 {dimension_numbers = #tpu.dot_dimension_numbers<[2], [1], [1], [2], [0, 0, 0, 1, 1, 2], [0], [0]>} : vector<2x64x64xbf16>, vector<2x64x32xbf16>, vector<2x64x32xf32> -> vector<2x64x32xf32>
    "tpu.trace_stop"() : () -> ()
    %112 = vector.shape_cast %111 : vector<2x64x32xf32> to vector<128x32xf32>
    %113 = arith.truncf %112 : vector<128x32xf32> to vector<128x32xbf16>
    %c0_30 = arith.constant 0 : index
    %c64 = arith.constant 64 : index
    %114 = vector.load %arg9[%c0_30, %c64] : memref<128x128xbf16, #tpu.memory_space<vmem>>, vector<128x32xbf16>
    tpu.vector_store %arg9[%c0_30, %c64], %113 {strides = array<i32>} : memref<128x128xbf16, #tpu.memory_space<vmem>>, vector<128x32xbf16>,
    %115 = vector.extract_strided_slice %51 {offsets = [0, 0, 96], sizes = [2, 64, 32], strides = [1, 1, 1]} : vector<2x64x128xbf16> to vector<2x64x32xbf16>
    %116 = vector.extract_strided_slice %54 {offsets = [0, 0, 96], sizes = [2, 64, 32], strides = [1, 1, 1]} : vector<2x64x128xbf16> to vector<2x64x32xbf16>
    %117 = vector.extract_strided_slice %57 {offsets = [0, 0, 96], sizes = [2, 64, 32], strides = [1, 1, 1]} : vector<2x64x128xbf16> to vector<2x64x32xbf16>
    "tpu.trace_start"() <{level = 10 : i32, message = "bik,bjk->bij"}> : () -> ()
    %cst_31 = arith.constant dense<0.000000e+00> : vector<2x64x64xf32>
    %118 = tpu.matmul %115, %116, %cst_31 {dimension_numbers = #tpu.dot_dimension_numbers<[2], [2], [1], [1], [0, 0, 0, 1, 1, 1], [0], [0]>} : vector<2x64x32xbf16>, vector<2x64x32xbf16>, vector<2x64x64xf32> -> vector<2x64x64xf32>
    "tpu.trace_stop"() : () -> ()
    %cst_32 = arith.constant dense<0xFF800000> : vector<2x64xf32>
    %119 = vector.multi_reduction <maximumf>, %118, %cst_32 [2] : vector<2x64x64xf32> to vector<2x64xf32>
    %120 = vector.shape_cast %119 : vector<2x64xf32> to vector<2x64x1xf32>
    %121 = vector.broadcast %120 : vector<2x64x1xf32> to vector<2x64x64xf32>
    %122 = arith.subf %118, %121 : vector<2x64x64xf32>
    %123 = math.exp %122 : vector<2x64x64xf32>
    %cst_33 = arith.constant dense<0.000000e+00> : vector<2x64xf32>
    %124 = vector.multi_reduction <add>, %123, %cst_33 [2] : vector<2x64x64xf32> to vector<2x64xf32>
    %125 = vector.shape_cast %124 : vector<2x64xf32> to vector<2x64x1xf32>
    %126 = tpu.reciprocal %125 {approx = true} : vector<2x64x1xf32> -> vector<2x64x1xf32>
    %127 = vector.broadcast %126 : vector<2x64x1xf32> to vector<2x64x64xf32>
    %128 = arith.mulf %123, %127 : vector<2x64x64xf32>
    %129 = arith.truncf %128 : vector<2x64x64xf32> to vector<2x64x64xbf16>
    "tpu.trace_start"() <{level = 10 : i32, message = "bij,bjk->bik"}> : () -> ()
    %cst_34 = arith.constant dense<0.000000e+00> : vector<2x64x32xf32>
    %130 = tpu.matmul %129, %117, %cst_34 {dimension_numbers = #tpu.dot_dimension_numbers<[2], [1], [1], [2], [0, 0, 0, 1, 1, 2], [0], [0]>} : vector<2x64x64xbf16>, vector<2x64x32xbf16>, vector<2x64x32xf32> -> vector<2x64x32xf32>
    "tpu.trace_stop"() : () -> ()
    %131 = vector.shape_cast %130 : vector<2x64x32xf32> to vector<128x32xf32>
    %132 = arith.truncf %131 : vector<128x32xf32> to vector<128x32xbf16>
    %c0_35 = arith.constant 0 : index
    %c96 = arith.constant 96 : index
    %133 = vector.load %arg9[%c0_35, %c96] : memref<128x128xbf16, #tpu.memory_space<vmem>>, vector<128x32xbf16>
    tpu.vector_store %arg9[%c0_35, %c96], %132 {strides = array<i32>} : memref<128x128xbf16, #tpu.memory_space<vmem>>, vector<128x32xbf16>,
    %c0_36 = arith.constant 0 : index
    %c0_37 = arith.constant 0 : index
    %134 = vector.load %arg9[%c0_36, %c0_37] : memref<128x128xbf16, #tpu.memory_space<vmem>>, vector<128x128xbf16>
    %c0_38 = arith.constant 0 : index
    %c0_39 = arith.constant 0 : index
    %c0_40 = arith.constant 0 : index
    %135 = vector.load %arg5[%c0_38, %c0_39, %c0_40] : memref<1x128x128xbf16, #tpu.memory_space<vmem>>, vector<1x128x128xbf16>
    %136 = vector.shape_cast %135 : vector<1x128x128xbf16> to vector<128x128xbf16>
    %cst_41 = arith.constant dense<0.000000e+00> : vector<128x128xf32>
    %137 = tpu.matmul %134, %136, %cst_41 {dimension_numbers = #tpu.dot_dimension_numbers<[1], [0], [0], [1], [0, 0, 1, 1], [], []>} : vector<128x128xbf16>, vector<128x128xbf16>, vector<128x128xf32> -> vector<128x128xf32>
    %138 = vector.shape_cast %137 : vector<128x128xf32> to vector<2x64x128xf32>
    %139 = arith.addf %3, %138 : vector<2x64x128xf32>
    %cst_42 = arith.constant dense<0.000000e+00> : vector<2x64xf32>
    %140 = vector.multi_reduction <add>, %139, %cst_42 [2] : vector<2x64x128xf32> to vector<2x64xf32>
    %141 = vector.shape_cast %140 : vector<2x64xf32> to vector<2x64x1xf32>
    %cst_43 = arith.constant 1.280000e+02 : f32
    %142 = vector.broadcast %cst_43 : f32 to vector<2x64x1xf32>
    %143 = arith.divf %141, %142 : vector<2x64x1xf32>
    %144 = vector.broadcast %143 : vector<2x64x1xf32> to vector<2x64x128xf32>
    %145 = arith.subf %139, %144 : vector<2x64x128xf32>
    %146 = arith.mulf %145, %145 : vector<2x64x128xf32>
    %cst_44 = arith.constant dense<0.000000e+00> : vector<2x64xf32>
    %147 = vector.multi_reduction <add>, %146, %cst_44 [2] : vector<2x64x128xf32> to vector<2x64xf32>
    %148 = vector.shape_cast %147 : vector<2x64xf32> to vector<2x64x1xf32>
    %cst_45 = arith.constant 1.280000e+02 : f32
    %149 = vector.broadcast %cst_45 : f32 to vector<2x64x1xf32>
    %150 = arith.divf %148, %149 : vector<2x64x1xf32>
    %151 = vector.broadcast %143 : vector<2x64x1xf32> to vector<2x64x128xf32>
    %152 = arith.subf %139, %151 : vector<2x64x128xf32>
    %cst_46 = arith.constant 9.99999974E-6 : f32
    %153 = vector.broadcast %cst_46 : f32 to vector<2x64x1xf32>
    %154 = arith.addf %150, %153 : vector<2x64x1xf32>
    %155 = math.rsqrt %154 : vector<2x64x1xf32>
    %156 = vector.broadcast %155 : vector<2x64x1xf32> to vector<2x64x128xf32>
    %157 = arith.mulf %152, %156 : vector<2x64x128xf32>
    %158 = vector.shape_cast %11 : vector<128xf32> to vector<1x1x128xf32>
    %159 = vector.broadcast %158 : vector<1x1x128xf32> to vector<2x64x128xf32>
    %160 = arith.mulf %157, %159 : vector<2x64x128xf32>
    %161 = vector.shape_cast %13 : vector<128xf32> to vector<1x1x128xf32>
    %162 = vector.broadcast %161 : vector<1x1x128xf32> to vector<2x64x128xf32>
    %163 = arith.addf %160, %162 : vector<2x64x128xf32>
    %164 = vector.shape_cast %163 : vector<2x64x128xf32> to vector<128x128xf32>
    %165 = arith.truncf %164 : vector<128x128xf32> to vector<128x128xbf16>
    %c0_47 = arith.constant 0 : index
    %c0_48 = arith.constant 0 : index
    %c0_49 = arith.constant 0 : index
    %166 = vector.load %arg6[%c0_47, %c0_48, %c0_49] : memref<1x128x128xbf16, #tpu.memory_space<vmem>>, vector<1x128x128xbf16>
    %167 = vector.shape_cast %166 : vector<1x128x128xbf16> to vector<128x128xbf16>
    %cst_50 = arith.constant dense<0.000000e+00> : vector<128x128xf32>
    %168 = tpu.matmul %165, %167, %cst_50 {dimension_numbers = #tpu.dot_dimension_numbers<[1], [0], [0], [1], [0, 0, 1, 1], [], []>} : vector<128x128xbf16>, vector<128x128xbf16>, vector<128x128xf32> -> vector<128x128xf32>
    %169 = vector.shape_cast %15 : vector<128xf32> to vector<1x128xf32>
    %170 = vector.broadcast %169 : vector<1x128xf32> to vector<128x128xf32>
    %171 = arith.addf %168, %170 : vector<128x128xf32>
    %cst_51 = arith.constant 5.000000e-01 : f32
    %172 = vector.broadcast %cst_51 : f32 to vector<128x128xf32>
    %173 = arith.mulf %172, %171 : vector<128x128xf32>
    %cst_52 = arith.constant 2.000000e+00 : f32
    %174 = math.sqrt %cst_52 : f32
    %cst_53 = arith.constant 1.000000e+00 : f32
    %175 = arith.divf %cst_53, %174 : f32
    %176 = vector.broadcast %175 : f32 to vector<128x128xf32>
    %177 = arith.mulf %171, %176 : vector<128x128xf32>
    %178 = math.erf %177 : vector<128x128xf32>
    %cst_54 = arith.constant 1.000000e+00 : f32
    %179 = vector.broadcast %cst_54 : f32 to vector<128x128xf32>
    %180 = arith.addf %179, %178 : vector<128x128xf32>
    %181 = arith.mulf %173, %180 : vector<128x128xf32>
    %182 = arith.truncf %181 : vector<128x128xf32> to vector<128x128xbf16>
    %c0_55 = arith.constant 0 : index
    %c0_56 = arith.constant 0 : index
    %c0_57 = arith.constant 0 : index
    %183 = vector.load %arg7[%c0_55, %c0_56, %c0_57] : memref<1x128x128xbf16, #tpu.memory_space<vmem>>, vector<1x128x128xbf16>
    %184 = vector.shape_cast %183 : vector<1x128x128xbf16> to vector<128x128xbf16>
    %cst_58 = arith.constant dense<0.000000e+00> : vector<128x128xf32>
    %185 = tpu.matmul %182, %184, %cst_58 {dimension_numbers = #tpu.dot_dimension_numbers<[1], [0], [0], [1], [0, 0, 1, 1], [], []>} : vector<128x128xbf16>, vector<128x128xbf16>, vector<128x128xf32> -> vector<128x128xf32>
    %186 = vector.shape_cast %17 : vector<128xf32> to vector<1x128xf32>
    %187 = vector.broadcast %186 : vector<1x128xf32> to vector<128x128xf32>
    %188 = arith.addf %185, %187 : vector<128x128xf32>
    %189 = vector.shape_cast %188 : vector<128x128xf32> to vector<2x64x128xf32>
    %190 = arith.addf %139, %189 : vector<2x64x128xf32>
    %c0_59 = arith.constant 0 : index
    %c0_60 = arith.constant 0 : index
    %c0_61 = arith.constant 0 : index
    %191 = vector.load %arg8[%c0_59, %c0_60, %c0_61] : memref<2x64x128xf32, #tpu.memory_space<vmem>>, vector<2x64x128xf32>
    tpu.vector_store %arg8[%c0_59, %c0_60, %c0_61], %190 {strides = array<i32>} : memref<2x64x128xf32, #tpu.memory_space<vmem>>, vector<2x64x128xf32>,
    return
  }
  func.func @transform_0(%arg0: i32, %arg1: i32) -> (i32, i32, i32) {
    %c0_i32 = arith.constant 0 : i32
    %c0_i32_0 = arith.constant 0 : i32
    %c0_i32_1 = arith.constant 0 : i32
    return %arg0, %c0_i32, %c0_i32_0 : i32, i32, i32
  }
  func.func @transform_1(%arg0: i32, %arg1: i32) -> (i32, i32, i32) {
    %c0_i32 = arith.constant 0 : i32
    %c0_i32_0 = arith.constant 0 : i32
    %c0_i32_1 = arith.constant 0 : i32
    return %arg1, %c0_i32, %c0_i32_0 : i32, i32, i32
  }
  func.func @transform_2(%arg0: i32, %arg1: i32) -> (i32, i32, i32) {
    %c0_i32 = arith.constant 0 : i32
    %c0_i32_0 = arith.constant 0 : i32
    %c0_i32_1 = arith.constant 0 : i32
    return %arg1, %c0_i32, %c0_i32_0 : i32, i32, i32
  }
  func.func @transform_3(%arg0: i32, %arg1: i32) -> (i32, i32, i32) {
    %c0_i32 = arith.constant 0 : i32
    %c0_i32_0 = arith.constant 0 : i32
    %c0_i32_1 = arith.constant 0 : i32
    return %arg1, %c0_i32, %c0_i32_0 : i32, i32, i32
  }
  func.func @transform_4(%arg0: i32, %arg1: i32) -> (i32, i32, i32) {
    %c0_i32 = arith.constant 0 : i32
    %c0_i32_0 = arith.constant 0 : i32
    %c0_i32_1 = arith.constant 0 : i32
    return %arg1, %c0_i32, %c0_i32_0 : i32, i32, i32
  }
  func.func @transform_5(%arg0: i32, %arg1: i32) -> (i32, i32, i32) {
    %c0_i32 = arith.constant 0 : i32
    %c0_i32_0 = arith.constant 0 : i32
    %c0_i32_1 = arith.constant 0 : i32
    return %arg1, %c0_i32, %c0_i32_0 : i32, i32, i32
  }
  func.func @transform_6(%arg0: i32, %arg1: i32) -> (i32, i32, i32) {
    %c0_i32 = arith.constant 0 : i32
    %c0_i32_0 = arith.constant 0 : i32
    %c0_i32_1 = arith.constant 0 : i32
    return %arg0, %c0_i32, %c0_i32_0 : i32, i32, i32
  }
}

</mosaic_0001>

<llo_original>
// kernel: tpu_custom_call.1
$region0: #{tpu_custom_call.1}
  #allocation0 [shape = 'u32[]', space=smem, size = 0x4, offset = 0x4, fixed_abs, tag = 'smem constant byte address 0x4 - core index']
  #allocation1 [shape = 'u32[144,128]{1,0:T(1,128)}', space=vmem, size = 0x12000, scoped, tag = 'internal scratch']
  #allocation2 [shape = 'bf16[128,128]{1,0:T(16,128)(2,1)}', space=vmem, size = 0x8000, scoped, tag = 'scratch operand']
  %s0 = inlined_call_operand.hbm [shape: f32[4,64,128], index: 0, kind: input, shape index: {}]
  %s1 = inlined_call_operand.hbm [shape: f32[2,8,128], index: 1, kind: input, shape index: {}]
  %s2 = inlined_call_operand.hbm [shape: bf16[2,128,384], index: 2, kind: input, shape index: {}]
  %s3 = inlined_call_operand.hbm [shape: bf16[2,128,128], index: 3, kind: input, shape index: {}]
  %s4 = inlined_call_operand.hbm [shape: bf16[2,128,128], index: 4, kind: input, shape index: {}]
  %s5 = inlined_call_operand.hbm [shape: bf16[2,128,128], index: 5, kind: input, shape index: {}]
  %s6 = inlined_call_operand.hbm [shape: f32[4,64,128], index: 6, kind: output, shape index: {}]
  %s7 = sld [smem:[#allocation0]]
  $region85: #{tpu_custom_call.1} parent=0
    _
  %s9 = ssub.s32 1, %s7
  %s10 = scalar_select 0, %s9, %s7
  $region1: #{tpu_custom_call.1} parent=0
    #allocation3 [shape = 'u8[131072]{0}', space=vmem, size = 0x20000, scoped, tag = 'input window, operand 0']
    #allocation4 [shape = 's32[2]{0}', space=sflag, size = 0x8, scoped, tag = 'scoped memory for tpu_custom_call.1']
    #allocation5 [shape = 's32[2]{0}', space=sflag, size = 0x8, scoped, tag = 'scoped memory for tpu_custom_call.1']
    #allocation6 [shape = 'u8[8192]{0}', space=vmem, size = 0x2000, scoped, tag = 'input window, operand 1']
    #allocation7 [shape = 's32[2]{0}', space=sflag, size = 0x8, scoped, tag = 'scoped memory for tpu_custom_call.1']
    #allocation8 [shape = 'u8[196608]{0}', space=vmem, size = 0x30000, scoped, tag = 'input window, operand 2']
    #allocation9 [shape = 'u8[65536]{0}', space=vmem, size = 0x10000, scoped, tag = 'input window, operand 3']
    #allocation10 [shape = 's32[2]{0}', space=sflag, size = 0x8, scoped, tag = 'scoped memory for tpu_custom_call.1']
    #allocation11 [shape = 'u8[65536]{0}', space=vmem, size = 0x10000, scoped, tag = 'input window, operand 4']
    #allocation12 [shape = 'u8[65536]{0}', space=vmem, size = 0x10000, scoped, tag = 'input window, operand 5']
    #allocation13 [shape = 's32[2]{0}', space=sflag, size = 0x8, scoped, tag = 'scoped memory for tpu_custom_call.1']
    #allocation14 [shape = 'u8[131072]{0}', space=vmem, size = 0x20000, scoped, tag = 'output window, operand 0']
    %11 = vsyncpa [#allocation4], 0
    %s12 = scalar_lea.sflag [#allocation4], 1
    %13 = vsyncpa %s12, 0
    %14 = vsyncpa [#allocation7], 0
    %s15 = scalar_lea.sflag [#allocation7], 1
    %16 = vsyncpa %s15, 0
    %17 = vsyncpa [#allocation10], 0
    %s18 = scalar_lea.sflag [#allocation10], 1
    %19 = vsyncpa %s18, 0
    %20 = vsyncpa [#allocation13], 0
    %s21 = scalar_lea.sflag [#allocation13], 1
    %22 = vsyncpa %s21, 0
    %23 = vsyncpa [#allocation5], 0
    %s24 = scalar_lea.sflag [#allocation5], 1
    %25 = vsyncpa %s24, 0
    loop: start=0, step=1, limit=6
    $region2: #{tpu_custom_call.1} parent=1 // loop_pre_header
      _
    $region3: #{tpu_custom_call.1} parent=1 // loop_header
      %s27 = sphi 0, %s31
      %p28 = scmp.ge.s32.totalorder %s27, 6
      %s34 = sphi 0, %s46
      %s35 = sphi 0, %s42
      %s36 = sphi 0, %s34
      %s37 = sphi 0, %s35
      %s38 = sphi 0, %s36
      %s39 = sphi 0, %s37
      %s49 = sphi 0, %s51
      %s52 = sphi 0, %s49
      %s53 = sphi 0, %s52
      %s69 = sphi 0, %s53
      %s75 = sphi 0, %s77
      %s78 = sphi 0, %s75
      %s79 = sphi 0, %s78
      %s95 = sphi 0, %s79
      %s101 = sphi 0, %s103
      %s104 = sphi 0, %s101
      %s105 = sphi 0, %s104
      %s121 = sphi 0, %s105
      %s127 = sphi 0, %s129
      %s130 = sphi 0, %s127
      %s131 = sphi 0, %s130
      %s147 = sphi 0, %s131
      %s153 = sphi 0, %s155
      %s156 = sphi 0, %s153
      %s157 = sphi 0, %s156
      %s173 = sphi 0, %s157
      %s179 = sphi 0, %s181
      %s182 = sphi 0, %s179
      %s183 = sphi 0, %s182
      %s199 = sphi 0, %s183
      %s205 = sphi 0, %s207
      %s208 = sphi 0, %s205
      %s209 = sphi 0, %s208
      %s225 = sphi 0, %s209
    $region4: #{tpu_custom_call.1} parent=1 // loop_header_branch
      %30 = sbr.rel (%p28) target = $region8
    $region5: #{tpu_custom_call.1} parent=1 // loop_body
      %s32 = ssub.s32 %s27, 1
      %s33 = ssub.s32 %s27, 2
      %s40 = sadd.s32 1, %s35
      %p41 = scmp.ge.s32.totalorder %s40, 2
      %s42 = scalar_select %p41, 0, %s40
      %s43 = sadd.s32 1, %s34
      %s44 = scalar_select %p41, %s43, %s34
      %p45 = scmp.ge.s32.totalorder %s44, 2
      %s46 = scalar_select %p45, 0, %s44
      %s47 = ssub.s32 %s34, %s46
      %p48 = scmp.eq.s32.totalorder %s47, 0
      %s50 = sadd.s32 %s49, 1
      %s51 = scalar_select %p48, %s49, %s50
      %p54 = pneg %p48
      %p55 = scmp.eq.s32.totalorder %s27, 3
      %p56 = por %p54, %p55
      %p57 = scmp.ne.s32.totalorder %s49, %s52
      %p58 = scmp.eq.s32.totalorder %s27, 0
      %p59 = por %p57, %p58
      %p60 = scmp.ne.s32.totalorder %s49, %s52
      %p61 = scmp.eq.s32.totalorder %s32, 3
      %p62 = por %p60, %p61
      %p63 = scmp.ne.s32.totalorder %s52, %s53
      %p64 = scmp.eq.s32.totalorder %s32, 0
      %p65 = por %p63, %p64
      %p66 = scmp.ne.s32.totalorder %s52, %s53
      %p67 = scmp.eq.s32.totalorder %s33, 3
      %p68 = por %p66, %p67
      %p70 = scmp.ne.s32.totalorder %s53, %s69
      %p71 = scmp.eq.s32.totalorder %s33, 0
      %p72 = por %p70, %p71
      %s73 = ssub.s32 %s35, %s42
      %p74 = scmp.eq.s32.totalorder %s73, 0
      %s76 = sadd.s32 %s75, 1
      %s77 = scalar_select %p74, %s75, %s76
      %p80 = pneg %p74
      %p81 = scmp.eq.s32.totalorder %s27, 3
      %p82 = por %p80, %p81
      %p83 = scmp.ne.s32.totalorder %s75, %s78
      %p84 = scmp.eq.s32.totalorder %s27, 0
      %p85 = por %p83, %p84
      %p86 = scmp.ne.s32.totalorder %s75, %s78
      %p87 = scmp.eq.s32.totalorder %s32, 3
      %p88 = por %p86, %p87
      %p89 = scmp.ne.s32.totalorder %s78, %s79
      %p90 = scmp.eq.s32.totalorder %s32, 0
      %p91 = por %p89, %p90
      %p92 = scmp.ne.s32.totalorder %s78, %s79
      %p93 = scmp.eq.s32.totalorder %s33, 3
      %p94 = por %p92, %p93
      %p96 = scmp.ne.s32.totalorder %s79, %s95
      %p97 = scmp.eq.s32.totalorder %s33, 0
      %p98 = por %p96, %p97
      %s99 = ssub.s32 %s35, %s42
      %p100 = scmp.eq.s32.totalorder %s99, 0
      %s102 = sadd.s32 %s101, 1
      %s103 = scalar_select %p100, %s101, %s102
      %p106 = pneg %p100
      %p107 = scmp.eq.s32.totalorder %s27, 3
      %p108 = por %p106, %p107
      %p109 = scmp.ne.s32.totalorder %s101, %s104
      %p110 = scmp.eq.s32.totalorder %s27, 0
      %p111 = por %p109, %p110
      %p112 = scmp.ne.s32.totalorder %s101, %s104
      %p113 = scmp.eq.s32.totalorder %s32, 3
      %p114 = por %p112, %p113
      %p115 = scmp.ne.s32.totalorder %s104, %s105
      %p116 = scmp.eq.s32.totalorder %s32, 0
      %p117 = por %p115, %p116
      %p118 = scmp.ne.s32.totalorder %s104, %s105
      %p119 = scmp.eq.s32.totalorder %s33, 3
      %p120 = por %p118, %p119
      %p122 = scmp.ne.s32.totalorder %s105, %s121
      %p123 = scmp.eq.s32.totalorder %s33, 0
      %p124 = por %p122, %p123
      %s125 = ssub.s32 %s35, %s42
      %p126 = scmp.eq.s32.totalorder %s125, 0
      %s128 = sadd.s32 %s127, 1
      %s129 = scalar_select %p126, %s127, %s128
      %p132 = pneg %p126
      %p133 = scmp.eq.s32.totalorder %s27, 3
      %p134 = por %p132, %p133
      %p135 = scmp.ne.s32.totalorder %s127, %s130
      %p136 = scmp.eq.s32.totalorder %s27, 0
      %p137 = por %p135, %p136
      %p138 = scmp.ne.s32.totalorder %s127, %s130
      %p139 = scmp.eq.s32.totalorder %s32, 3
      %p140 = por %p138, %p139
      %p141 = scmp.ne.s32.totalorder %s130, %s131
      %p142 = scmp.eq.s32.totalorder %s32, 0
      %p143 = por %p141, %p142
      %p144 = scmp.ne.s32.totalorder %s130, %s131
      %p145 = scmp.eq.s32.totalorder %s33, 3
      %p146 = por %p144, %p145
      %p148 = scmp.ne.s32.totalorder %s131, %s147
      %p149 = scmp.eq.s32.totalorder %s33, 0
      %p150 = por %p148, %p149
      %s151 = ssub.s32 %s35, %s42
      %p152 = scmp.eq.s32.totalorder %s151, 0
      %s154 = sadd.s32 %s153, 1
      %s155 = scalar_select %p152, %s153, %s154
      %p158 = pneg %p152
      %p159 = scmp.eq.s32.totalorder %s27, 3
      %p160 = por %p158, %p159
      %p161 = scmp.ne.s32.totalorder %s153, %s156
      %p162 = scmp.eq.s32.totalorder %s27, 0
      %p163 = por %p161, %p162
      %p164 = scmp.ne.s32.totalorder %s153, %s156
      %p165 = scmp.eq.s32.totalorder %s32, 3
      %p166 = por %p164, %p165
      %p167 = scmp.ne.s32.totalorder %s156, %s157
      %p168 = scmp.eq.s32.totalorder %s32, 0
      %p169 = por %p167, %p168
      %p170 = scmp.ne.s32.totalorder %s156, %s157
      %p171 = scmp.eq.s32.totalorder %s33, 3
      %p172 = por %p170, %p171
      %p174 = scmp.ne.s32.totalorder %s157, %s173
      %p175 = scmp.eq.s32.totalorder %s33, 0
      %p176 = por %p174, %p175
      %s177 = ssub.s32 %s35, %s42
      %p178 = scmp.eq.s32.totalorder %s177, 0
      %s180 = sadd.s32 %s179, 1
      %s181 = scalar_select %p178, %s179, %s180
      %p184 = pneg %p178
      %p185 = scmp.eq.s32.totalorder %s27, 3
      %p186 = por %p184, %p185
      %p187 = scmp.ne.s32.totalorder %s179, %s182
      %p188 = scmp.eq.s32.totalorder %s27, 0
      %p189 = por %p187, %p188
      %p190 = scmp.ne.s32.totalorder %s179, %s182
      %p191 = scmp.eq.s32.totalorder %s32, 3
      %p192 = por %p190, %p191
      %p193 = scmp.ne.s32.totalorder %s182, %s183
      %p194 = scmp.eq.s32.totalorder %s32, 0
      %p195 = por %p193, %p194
      %p196 = scmp.ne.s32.totalorder %s182, %s183
      %p197 = scmp.eq.s32.totalorder %s33, 3
      %p198 = por %p196, %p197
      %p200 = scmp.ne.s32.totalorder %s183, %s199
      %p201 = scmp.eq.s32.totalorder %s33, 0
      %p202 = por %p200, %p201
      %s203 = ssub.s32 %s34, %s46
      %p204 = scmp.eq.s32.totalorder %s203, 0
      %s206 = sadd.s32 %s205, 1
      %s207 = scalar_select %p204, %s205, %s206
      %p210 = pneg %p204
      %p211 = scmp.eq.s32.totalorder %s27, 3
      %p212 = por %p210, %p211
      %p213 = scmp.ne.s32.totalorder %s205, %s208
      %p214 = scmp.eq.s32.totalorder %s27, 0
      %p215 = por %p213, %p214
      %p216 = scmp.ne.s32.totalorder %s205, %s208
      %p217 = scmp.eq.s32.totalorder %s32, 3
      %p218 = por %p216, %p217
      %p219 = scmp.ne.s32.totalorder %s208, %s209
      %p220 = scmp.eq.s32.totalorder %s32, 0
      %p221 = por %p219, %p220
      %p222 = scmp.ne.s32.totalorder %s208, %s209
      %p223 = scmp.eq.s32.totalorder %s33, 3
      %p224 = por %p222, %p223
      %p226 = scmp.ne.s32.totalorder %s209, %s225
      %p227 = scmp.eq.s32.totalorder %s33, 0
      %p228 = por %p226, %p227
      %p229 = scmp.le.s32.totalorder 1, %s27
      %p230 = scmp.lt.s32.totalorder %s27, 5
      %p231 = pnand %p229, %p230
      %p232 = pneg %p231
      // Predicated region
      $region9: #{tpu_custom_call.1} parent=5 // pred_check
        _
      $region10: #{tpu_custom_call.1} parent=5 // pred_check_branch
        %234 = sbr.rel (%p231) target = $region12
      $region11: #{tpu_custom_call.1} parent=5 // pred_region
        %s235 = ssub.s32 %s27, 1
      $region12: #{tpu_custom_call.1} parent=5 // pred_fallthru
        _
      %p236 = scmp.lt.s32.totalorder %s27, 4
      // Predicated region
      $region13: #{tpu_custom_call.1} parent=5 // pred_check
        %p237 = pneg %p236
      $region14: #{tpu_custom_call.1} parent=5 // pred_check_branch
        %239 = sbr.rel (%p237) target = $region16
      $region15: #{tpu_custom_call.1} parent=5 // pred_region
        // Predicated region
        $region17: #{tpu_custom_call.1} parent=15 // pred_check
          %p240 = pneg %p59
        $region18: #{tpu_custom_call.1} parent=15 // pred_check_branch
          %242 = sbr.rel (%p240) target = $region20
        $region19: #{tpu_custom_call.1} parent=15 // pred_region
          %s243 = sand.u32 %s49, 1
          %s244 = scalar_lea.sflag [#allocation4], %s243
          %s245 = sand.u32 %s49, 1
          %s246 = smul.addr %s245, 128
          %s247 = scalar_lea.vmem [#allocation3], %s246
          %s248 = smul.u32 2, %s34
          %s250 = ssub.s32 2048, 2048
          %251 = vsyncadd %s244, %s250
          %s252 = smul.addr %s248, 8
          %s253 = smul.addr %s252, 128
          %s254 = scalar_lea.hbm %s0, %s253
          %s255 = sshll.u32 %s247, 4
          %s256 = int_to_ptr.vmem [resolvable:$true] %s255
          %261 = dma.hbm_to_vmem [thread:$0]  %s254, 2048, %s256, %s244, 128, 128, 8
        $region20: #{tpu_custom_call.1} parent=15 // pred_fallthru
          _
        // Predicated region
        $region21: #{tpu_custom_call.1} parent=15 // pred_check
          %p262 = pneg %p85
        $region22: #{tpu_custom_call.1} parent=15 // pred_check_branch
          %264 = sbr.rel (%p262) target = $region24
        $region23: #{tpu_custom_call.1} parent=15 // pred_region
          %s265 = sand.u32 %s27, 1
          %s266 = scalar_lea.sflag [#allocation7], %s265
          %s267 = sand.u32 %s75, 1
          %s268 = smul.addr %s267, 8
          %s269 = scalar_lea.vmem [#allocation6], %s268
          %s271 = ssub.s32 128, 128
          %272 = vsyncadd %s266, %s271
          %s273 = smul.addr %s35, 128
          %s274 = scalar_lea.hbm %s1, %s273
          %s276 = sshll.u32 %s269, 4
          %s277 = int_to_ptr.vmem [resolvable:$true] %s276
          %279 = dma.hbm_to_vmem [thread:$0]  %s274, 128, %s277, %s266
        $region24: #{tpu_custom_call.1} parent=15 // pred_fallthru
          _
        // Predicated region
        $region25: #{tpu_custom_call.1} parent=15 // pred_check
          %p280 = pneg %p111
        $region26: #{tpu_custom_call.1} parent=15 // pred_check_branch
          %282 = sbr.rel (%p280) target = $region28
        $region27: #{tpu_custom_call.1} parent=15 // pred_region
          %s283 = sand.u32 %s27, 1
          %s284 = scalar_lea.sflag [#allocation7], %s283
          %s285 = sand.u32 %s101, 1
          %s286 = smul.addr %s285, 192
          %s287 = scalar_lea.vmem [#allocation8], %s286
          %s289 = ssub.s32 3072, 3072
          %290 = vsyncadd %s284, %s289
          %s291 = smul.addr %s35, 48
          %s292 = smul.addr %s291, 64
          %s293 = scalar_lea.hbm %s2, %s292
          %s294 = sshll.u32 %s287, 4
          %s295 = int_to_ptr.vmem [resolvable:$true] %s294
          %300 = dma.hbm_to_vmem [thread:$0]  %s293, 3072, %s295, %s284, 192, 192, 12
        $region28: #{tpu_custom_call.1} parent=15 // pred_fallthru
          _
        // Predicated region
        $region29: #{tpu_custom_call.1} parent=15 // pred_check
          %p301 = pneg %p137
        $region30: #{tpu_custom_call.1} parent=15 // pred_check_branch
          %303 = sbr.rel (%p301) target = $region32
        $region31: #{tpu_custom_call.1} parent=15 // pred_region
          %s304 = sand.u32 %s27, 1
          %s305 = scalar_lea.sflag [#allocation10], %s304
          %s306 = sand.u32 %s127, 1
          %s307 = smul.addr %s306, 64
          %s308 = scalar_lea.vmem [#allocation9], %s307
          %s310 = ssub.s32 1024, 1024
          %311 = vsyncadd %s305, %s310
          %s312 = smul.addr %s35, 16
          %s313 = smul.addr %s312, 64
          %s314 = scalar_lea.hbm %s3, %s313
          %s315 = sshll.u32 %s308, 4
          %s316 = int_to_ptr.vmem [resolvable:$true] %s315
          %321 = dma.hbm_to_vmem [thread:$0]  %s314, 1024, %s316, %s305, 64, 64, 4
        $region32: #{tpu_custom_call.1} parent=15 // pred_fallthru
          _
        // Predicated region
        $region33: #{tpu_custom_call.1} parent=15 // pred_check
          %p322 = pneg %p163
        $region34: #{tpu_custom_call.1} parent=15 // pred_check_branch
          %324 = sbr.rel (%p322) target = $region36
        $region35: #{tpu_custom_call.1} parent=15 // pred_region
          %s325 = sand.u32 %s27, 1
          %s326 = scalar_lea.sflag [#allocation10], %s325
          %s327 = sand.u32 %s153, 1
          %s328 = smul.addr %s327, 64
          %s329 = scalar_lea.vmem [#allocation11], %s328
          %s331 = ssub.s32 1024, 1024
          %332 = vsyncadd %s326, %s331
          %s333 = smul.addr %s35, 16
          %s334 = smul.addr %s333, 64
          %s335 = scalar_lea.hbm %s4, %s334
          %s336 = sshll.u32 %s329, 4
          %s337 = int_to_ptr.vmem [resolvable:$true] %s336
          %342 = dma.hbm_to_vmem [thread:$0]  %s335, 1024, %s337, %s326, 64, 64, 4
        $region36: #{tpu_custom_call.1} parent=15 // pred_fallthru
          _
        // Predicated region
        $region37: #{tpu_custom_call.1} parent=15 // pred_check
          %p343 = pneg %p189
        $region38: #{tpu_custom_call.1} parent=15 // pred_check_branch
          %345 = sbr.rel (%p343) target = $region40
        $region39: #{tpu_custom_call.1} parent=15 // pred_region
          %s346 = sand.u32 %s179, 1
          %s347 = scalar_lea.sflag [#allocation13], %s346
          %s348 = sand.u32 %s179, 1
          %s349 = smul.addr %s348, 64
          %s350 = scalar_lea.vmem [#allocation12], %s349
          %s352 = ssub.s32 1024, 1024
          %353 = vsyncadd %s347, %s352
          %s354 = smul.addr %s35, 16
          %s355 = smul.addr %s354, 64
          %s356 = scalar_lea.hbm %s5, %s355
          %s357 = sshll.u32 %s350, 4
          %s358 = int_to_ptr.vmem [resolvable:$true] %s357
          %363 = dma.hbm_to_vmem [thread:$0]  %s356, 1024, %s358, %s347, 64, 64, 4
        $region40: #{tpu_custom_call.1} parent=15 // pred_fallthru
          _
      $region16: #{tpu_custom_call.1} parent=5 // pred_fallthru
        _
      %p364 = scmp.le.s32.totalorder 1, %s27
      %p365 = scmp.lt.s32.totalorder %s27, 5
      %p366 = pnand %p364, %p365
      %p367 = pneg %p366
      // Predicated region
      $region41: #{tpu_custom_call.1} parent=5 // pred_check
        _
      $region42: #{tpu_custom_call.1} parent=5 // pred_check_branch
        %369 = sbr.rel (%p366) target = $region44
      $region43: #{tpu_custom_call.1} parent=5 // pred_region
        %s370 = ssub.s32 %s27, 1
        %s371 = sand.u32 %s52, 1
        %s372 = scalar_lea.sflag [#allocation4], %s371
        %s373 = sand.u32 %s52, 1
        %s374 = smul.addr %s373, 128
        %s375 = scalar_lea.vmem [#allocation3], %s374
        // Predicated region
        $region45: #{tpu_custom_call.1} parent=43 // pred_check
          %p376 = pneg %p65
        $region46: #{tpu_custom_call.1} parent=43 // pred_check_branch
          %378 = sbr.rel (%p376) target = $region48
        $region47: #{tpu_custom_call.1} parent=43 // pred_region
          %379 = dma.done %s372, 2048
        $region48: #{tpu_custom_call.1} parent=43 // pred_fallthru
          _
        %s380 = sand.u32 %s32, 1
        %s381 = scalar_lea.sflag [#allocation7], %s380
        %s382 = sand.u32 %s78, 1
        %s383 = smul.addr %s382, 8
        %s384 = scalar_lea.vmem [#allocation6], %s383
        // Predicated region
        $region49: #{tpu_custom_call.1} parent=43 // pred_check
          %p385 = pneg %p91
        $region50: #{tpu_custom_call.1} parent=43 // pred_check_branch
          %387 = sbr.rel (%p385) target = $region52
        $region51: #{tpu_custom_call.1} parent=43 // pred_region
          %388 = dma.done %s381, 128
        $region52: #{tpu_custom_call.1} parent=43 // pred_fallthru
          _
        %s389 = sand.u32 %s32, 1
        %s390 = scalar_lea.sflag [#allocation7], %s389
        %s391 = sand.u32 %s104, 1
        %s392 = smul.addr %s391, 192
        %s393 = scalar_lea.vmem [#allocation8], %s392
        // Predicated region
        $region53: #{tpu_custom_call.1} parent=43 // pred_check
          %p394 = pneg %p117
        $region54: #{tpu_custom_call.1} parent=43 // pred_check_branch
          %396 = sbr.rel (%p394) target = $region56
        $region55: #{tpu_custom_call.1} parent=43 // pred_region
          %397 = dma.done %s390, 3072
        $region56: #{tpu_custom_call.1} parent=43 // pred_fallthru
          _
        %s398 = sand.u32 %s32, 1
        %s399 = scalar_lea.sflag [#allocation10], %s398
        %s400 = sand.u32 %s130, 1
        %s401 = smul.addr %s400, 64
        %s402 = scalar_lea.vmem [#allocation9], %s401
        // Predicated region
        $region57: #{tpu_custom_call.1} parent=43 // pred_check
          %p403 = pneg %p143
        $region58: #{tpu_custom_call.1} parent=43 // pred_check_branch
          %405 = sbr.rel (%p403) target = $region60
        $region59: #{tpu_custom_call.1} parent=43 // pred_region
          %406 = dma.done %s399, 1024
        $region60: #{tpu_custom_call.1} parent=43 // pred_fallthru
          _
        %s407 = sand.u32 %s32, 1
        %s408 = scalar_lea.sflag [#allocation10], %s407
        %s409 = sand.u32 %s156, 1
        %s410 = smul.addr %s409, 64
        %s411 = scalar_lea.vmem [#allocation11], %s410
        // Predicated region
        $region61: #{tpu_custom_call.1} parent=43 // pred_check
          %p412 = pneg %p169
        $region62: #{tpu_custom_call.1} parent=43 // pred_check_branch
          %414 = sbr.rel (%p412) target = $region64
        $region63: #{tpu_custom_call.1} parent=43 // pred_region
          %415 = dma.done %s408, 1024
        $region64: #{tpu_custom_call.1} parent=43 // pred_fallthru
          _
        %s416 = sand.u32 %s182, 1
        %s417 = scalar_lea.sflag [#allocation13], %s416
        %s418 = sand.u32 %s182, 1
        %s419 = smul.addr %s418, 64
        %s420 = scalar_lea.vmem [#allocation12], %s419
        // Predicated region
        $region65: #{tpu_custom_call.1} parent=43 // pred_check
          %p421 = pneg %p195
        $region66: #{tpu_custom_call.1} parent=43 // pred_check_branch
          %423 = sbr.rel (%p421) target = $region68
        $region67: #{tpu_custom_call.1} parent=43 // pred_region
          %424 = dma.done %s417, 1024
        $region68: #{tpu_custom_call.1} parent=43 // pred_fallthru
          _
        %s425 = sand.u32 %s52, 1
        %s426 = scalar_lea.sflag [#allocation4], %s425
        %s427 = sand.u32 %s52, 1
        %s428 = smul.addr %s427, 128
        %s429 = scalar_lea.vmem [#allocation3], %s428
        %p430 = pneg %p65
        %p431 = pneg %p62
        %s432 = sand.u32 %s32, 1
        %s433 = scalar_lea.sflag [#allocation7], %s432
        %s434 = sand.u32 %s78, 1
        %s435 = smul.addr %s434, 8
        %s436 = scalar_lea.vmem [#allocation6], %s435
        %p437 = pneg %p91
        %p438 = pneg %p88
        %s439 = sand.u32 %s32, 1
        %s440 = scalar_lea.sflag [#allocation7], %s439
        %s441 = sand.u32 %s104, 1
        %s442 = smul.addr %s441, 192
        %s443 = scalar_lea.vmem [#allocation8], %s442
        %p444 = pneg %p117
        %p445 = pneg %p114
        %s446 = sand.u32 %s32, 1
        %s447 = scalar_lea.sflag [#allocation10], %s446
        %s448 = sand.u32 %s130, 1
        %s449 = smul.addr %s448, 64
        %s450 = scalar_lea.vmem [#allocation9], %s449
        %p451 = pneg %p143
        %p452 = pneg %p140
        %s453 = sand.u32 %s32, 1
        %s454 = scalar_lea.sflag [#allocation10], %s453
        %s455 = sand.u32 %s156, 1
        %s456 = smul.addr %s455, 64
        %s457 = scalar_lea.vmem [#allocation11], %s456
        %p458 = pneg %p169
        %p459 = pneg %p166
        %s460 = sand.u32 %s182, 1
        %s461 = scalar_lea.sflag [#allocation13], %s460
        %s462 = sand.u32 %s182, 1
        %s463 = smul.addr %s462, 64
        %s464 = scalar_lea.vmem [#allocation12], %s463
        %p465 = pneg %p195
        %p466 = pneg %p192
        %p467 = pneg %p221
        %p468 = pneg %p218
        %s469 = sand.u32 %s208, 1
        %s470 = scalar_lea.sflag [#allocation5], %s469
        %s471 = sand.u32 %s208, 1
        %s472 = smul.addr %s471, 128
        %s473 = scalar_lea.vmem [#allocation14], %s472
        %s474 = smul.u32 2, %s36
        %s475 = smul.u32 2, %s36
        %p477 = scmp.eq.s32.totalorder %s37, 0
        // Predicated region
        $region69: #{tpu_custom_call.1} parent=43 // pred_check
          %p478 = pneg %p477
        $region70: #{tpu_custom_call.1} parent=43 // pred_check_branch
          %480 = sbr.rel (%p478) target = $region72
        $region71: #{tpu_custom_call.1} parent=43 // pred_region
          %v481 = vld [vmem:[%s375] sm:$0xff]
          %v482 = vld [vmem:[%s375 + $0x8] sm:$0xff]
          %v483 = vld [vmem:[%s375 + $0x10] sm:$0xff]
          %v484 = vld [vmem:[%s375 + $0x18] sm:$0xff]
          %v485 = vld [vmem:[%s375 + $0x20] sm:$0xff]
          %v486 = vld [vmem:[%s375 + $0x28] sm:$0xff]
          %v487 = vld [vmem:[%s375 + $0x30] sm:$0xff]
          %v488 = vld [vmem:[%s375 + $0x38] sm:$0xff]
          %v489 = vld [vmem:[%s375 + $0x40] sm:$0xff]
          %v490 = vld [vmem:[%s375 + $0x48] sm:$0xff]
          %v491 = vld [vmem:[%s375 + $0x50] sm:$0xff]
          %v492 = vld [vmem:[%s375 + $0x58] sm:$0xff]
          %v493 = vld [vmem:[%s375 + $0x60] sm:$0xff]
          %v494 = vld [vmem:[%s375 + $0x68] sm:$0xff]
          %v495 = vld [vmem:[%s375 + $0x70] sm:$0xff]
          %v496 = vld [vmem:[%s375 + $0x78] sm:$0xff]
          %497 = vst [vmem:[%s473] sm:$0xff] %v481
          %498 = vst [vmem:[%s473 + $0x8] sm:$0xff] %v482
          %499 = vst [vmem:[%s473 + $0x10] sm:$0xff] %v483
          %500 = vst [vmem:[%s473 + $0x18] sm:$0xff] %v484
          %501 = vst [vmem:[%s473 + $0x20] sm:$0xff] %v485
          %502 = vst [vmem:[%s473 + $0x28] sm:$0xff] %v486
          %503 = vst [vmem:[%s473 + $0x30] sm:$0xff] %v487
          %504 = vst [vmem:[%s473 + $0x38] sm:$0xff] %v488
          %505 = vst [vmem:[%s473 + $0x40] sm:$0xff] %v489
          %506 = vst [vmem:[%s473 + $0x48] sm:$0xff] %v490
          %507 = vst [vmem:[%s473 + $0x50] sm:$0xff] %v491
          %508 = vst [vmem:[%s473 + $0x58] sm:$0xff] %v492
          %509 = vst [vmem:[%s473 + $0x60] sm:$0xff] %v493
          %510 = vst [vmem:[%s473 + $0x68] sm:$0xff] %v494
          %511 = vst [vmem:[%s473 + $0x70] sm:$0xff] %v495
          %512 = vst [vmem:[%s473 + $0x78] sm:$0xff] %v496
        $region72: #{tpu_custom_call.1} parent=43 // pred_fallthru
          _
        %v513 = vld [vmem:[%s473] sm:$0xff]
        %v514 = vld [vmem:[%s473 + $0x8] sm:$0xff]
        %v515 = vld [vmem:[%s473 + $0x10] sm:$0xff]
        %v516 = vld [vmem:[%s473 + $0x18] sm:$0xff]
        %v517 = vld [vmem:[%s473 + $0x20] sm:$0xff]
        %v518 = vld [vmem:[%s473 + $0x28] sm:$0xff]
        %v519 = vld [vmem:[%s473 + $0x30] sm:$0xff]
        %v520 = vld [vmem:[%s473 + $0x38] sm:$0xff]
        %v521 = vld [vmem:[%s473 + $0x40] sm:$0xff]
        %v522 = vld [vmem:[%s473 + $0x48] sm:$0xff]
        %v523 = vld [vmem:[%s473 + $0x50] sm:$0xff]
        %v524 = vld [vmem:[%s473 + $0x58] sm:$0xff]
        %v525 = vld [vmem:[%s473 + $0x60] sm:$0xff]
        %v526 = vld [vmem:[%s473 + $0x68] sm:$0xff]
        %v527 = vld [vmem:[%s473 + $0x70] sm:$0xff]
        %v528 = vld [vmem:[%s473 + $0x78] sm:$0xff]
        %v529 = vld [vmem:[%s384] sm:$0xff]
        %530 = vadd.xlane.f32.xlu0 %v513
        %v531 = vpop.xlane.xlu0 %530
        %532 = vadd.xlane.f32.xlu0 %v514
        %v533 = vpop.xlane.xlu0 %532
        %534 = vadd.xlane.f32.xlu0 %v515
        %v535 = vpop.xlane.xlu0 %534
        %536 = vadd.xlane.f32.xlu0 %v516
        %v537 = vpop.xlane.xlu0 %536
        %538 = vadd.xlane.f32.xlu0 %v517
        %v539 = vpop.xlane.xlu0 %538
        %540 = vadd.xlane.f32.xlu0 %v518
        %v541 = vpop.xlane.xlu0 %540
        %542 = vadd.xlane.f32.xlu0 %v519
        %v543 = vpop.xlane.xlu0 %542
        %544 = vadd.xlane.f32.xlu0 %v520
        %v545 = vpop.xlane.xlu0 %544
        %546 = vadd.xlane.f32.xlu0 %v521
        %v547 = vpop.xlane.xlu0 %546
        %548 = vadd.xlane.f32.xlu0 %v522
        %v549 = vpop.xlane.xlu0 %548
        %550 = vadd.xlane.f32.xlu0 %v523
        %v551 = vpop.xlane.xlu0 %550
        %552 = vadd.xlane.f32.xlu0 %v524
        %v553 = vpop.xlane.xlu0 %552
        %554 = vadd.xlane.f32.xlu0 %v525
        %v555 = vpop.xlane.xlu0 %554
        %556 = vadd.xlane.f32.xlu0 %v526
        %v557 = vpop.xlane.xlu0 %556
        %558 = vadd.xlane.f32.xlu0 %v527
        %v559 = vpop.xlane.xlu0 %558
        %560 = vadd.xlane.f32.xlu0 %v528
        %v561 = vpop.xlane.xlu0 %560
        %v562 = vrcp.pop 128.0
        %v563 = vmul.f32 %v531, %v562
        %v564 = vmul.f32 %v533, %v562
        %v565 = vmul.f32 %v535, %v562
        %v566 = vmul.f32 %v537, %v562
        %v567 = vmul.f32 %v539, %v562
        %v568 = vmul.f32 %v541, %v562
        %v569 = vmul.f32 %v543, %v562
        %v570 = vmul.f32 %v545, %v562
        %v571 = vmul.f32 %v547, %v562
        %v572 = vmul.f32 %v549, %v562
        %v573 = vmul.f32 %v551, %v562
        %v574 = vmul.f32 %v553, %v562
        %v575 = vmul.f32 %v555, %v562
        %v576 = vmul.f32 %v557, %v562
        %v577 = vmul.f32 %v559, %v562
        %v578 = vmul.f32 %v561, %v562
        %v579 = vsub.f32 %v513, %v563
        %v580 = vsub.f32 %v514, %v564
        %v581 = vsub.f32 %v515, %v565
        %v582 = vsub.f32 %v516, %v566
        %v583 = vsub.f32 %v517, %v567
        %v584 = vsub.f32 %v518, %v568
        %v585 = vsub.f32 %v519, %v569
        %v586 = vsub.f32 %v520, %v570
        %v587 = vsub.f32 %v521, %v571
        %v588 = vsub.f32 %v522, %v572
        %v589 = vsub.f32 %v523, %v573
        %v590 = vsub.f32 %v524, %v574
        %v591 = vsub.f32 %v525, %v575
        %v592 = vsub.f32 %v526, %v576
        %v593 = vsub.f32 %v527, %v577
        %v594 = vsub.f32 %v528, %v578
        %v595 = vmul.f32 %v579, %v579
        %v596 = vmul.f32 %v580, %v580
        %v597 = vmul.f32 %v581, %v581
        %v598 = vmul.f32 %v582, %v582
        %v599 = vmul.f32 %v583, %v583
        %v600 = vmul.f32 %v584, %v584
        %v601 = vmul.f32 %v585, %v585
        %v602 = vmul.f32 %v586, %v586
        %v603 = vmul.f32 %v587, %v587
        %v604 = vmul.f32 %v588, %v588
        %v605 = vmul.f32 %v589, %v589
        %v606 = vmul.f32 %v590, %v590
        %v607 = vmul.f32 %v591, %v591
        %v608 = vmul.f32 %v592, %v592
        %v609 = vmul.f32 %v593, %v593
        %v610 = vmul.f32 %v594, %v594
        %611 = vadd.xlane.f32.xlu0 %v595
        %v612 = vpop.xlane.xlu0 %611
        %613 = vadd.xlane.f32.xlu0 %v596
        %v614 = vpop.xlane.xlu0 %613
        %615 = vadd.xlane.f32.xlu0 %v597
        %v616 = vpop.xlane.xlu0 %615
        %617 = vadd.xlane.f32.xlu0 %v598
        %v618 = vpop.xlane.xlu0 %617
        %619 = vadd.xlane.f32.xlu0 %v599
        %v620 = vpop.xlane.xlu0 %619
        %621 = vadd.xlane.f32.xlu0 %v600
        %v622 = vpop.xlane.xlu0 %621
        %623 = vadd.xlane.f32.xlu0 %v601
        %v624 = vpop.xlane.xlu0 %623
        %625 = vadd.xlane.f32.xlu0 %v602
        %v626 = vpop.xlane.xlu0 %625
        %627 = vadd.xlane.f32.xlu0 %v603
        %v628 = vpop.xlane.xlu0 %627
        %629 = vadd.xlane.f32.xlu0 %v604
        %v630 = vpop.xlane.xlu0 %629
        %631 = vadd.xlane.f32.xlu0 %v605
        %v632 = vpop.xlane.xlu0 %631
        %633 = vadd.xlane.f32.xlu0 %v606
        %v634 = vpop.xlane.xlu0 %633
        %635 = vadd.xlane.f32.xlu0 %v607
        %v636 = vpop.xlane.xlu0 %635
        %637 = vadd.xlane.f32.xlu0 %v608
        %v638 = vpop.xlane.xlu0 %637
        %639 = vadd.xlane.f32.xlu0 %v609
        %v640 = vpop.xlane.xlu0 %639
        %641 = vadd.xlane.f32.xlu0 %v610
        %v642 = vpop.xlane.xlu0 %641
        %v643 = vmul.f32 %v612, %v562
        %v644 = vmul.f32 %v614, %v562
        %v645 = vmul.f32 %v616, %v562
        %v646 = vmul.f32 %v618, %v562
        %v647 = vmul.f32 %v620, %v562
        %v648 = vmul.f32 %v622, %v562
        %v649 = vmul.f32 %v624, %v562
        %v650 = vmul.f32 %v626, %v562
        %v651 = vmul.f32 %v628, %v562
        %v652 = vmul.f32 %v630, %v562
        %v653 = vmul.f32 %v632, %v562
        %v654 = vmul.f32 %v634, %v562
        %v655 = vmul.f32 %v636, %v562
        %v656 = vmul.f32 %v638, %v562
        %v657 = vmul.f32 %v640, %v562
        %v658 = vmul.f32 %v642, %v562
        %v659 = vadd.f32 %v643, 1e-05
        %v660 = vadd.f32 %v644, 1e-05
        %v661 = vadd.f32 %v645, 1e-05
        %v662 = vadd.f32 %v646, 1e-05
        %v663 = vadd.f32 %v647, 1e-05
        %v664 = vadd.f32 %v648, 1e-05
        %v665 = vadd.f32 %v649, 1e-05
        %v666 = vadd.f32 %v650, 1e-05
        %v667 = vadd.f32 %v651, 1e-05
        %v668 = vadd.f32 %v652, 1e-05
        %v669 = vadd.f32 %v653, 1e-05
        %v670 = vadd.f32 %v654, 1e-05
        %v671 = vadd.f32 %v655, 1e-05
        %v672 = vadd.f32 %v656, 1e-05
        %v673 = vadd.f32 %v657, 1e-05
        %v674 = vadd.f32 %v658, 1e-05
        %v675 = vrsqrt.pop %v659
        %v676 = vrsqrt.pop %v660
        %v677 = vrsqrt.pop %v661
        %v678 = vrsqrt.pop %v662
        %v679 = vrsqrt.pop %v663
        %v680 = vrsqrt.pop %v664
        %v681 = vrsqrt.pop %v665
        %v682 = vrsqrt.pop %v666
        %v683 = vrsqrt.pop %v667
        %v684 = vrsqrt.pop %v668
        %v685 = vrsqrt.pop %v669
        %v686 = vrsqrt.pop %v670
        %v687 = vrsqrt.pop %v671
        %v688 = vrsqrt.pop %v672
        %v689 = vrsqrt.pop %v673
        %v690 = vrsqrt.pop %v674
        %v691 = vmul.f32 %v579, %v675
        %v692 = vmul.f32 %v580, %v676
        %v693 = vmul.f32 %v581, %v677
        %v694 = vmul.f32 %v582, %v678
        %v695 = vmul.f32 %v583, %v679
        %v696 = vmul.f32 %v584, %v680
        %v697 = vmul.f32 %v585, %v681
        %v698 = vmul.f32 %v586, %v682
        %v699 = vmul.f32 %v587, %v683
        %v700 = vmul.f32 %v588, %v684
        %v701 = vmul.f32 %v589, %v685
        %v702 = vmul.f32 %v590, %v686
        %v703 = vmul.f32 %v591, %v687
        %v704 = vmul.f32 %v592, %v688
        %v705 = vmul.f32 %v593, %v689
        %v706 = vmul.f32 %v594, %v690
        %v707 = vlaneseq
        %v708 = vshrl.u32 %v707, 7
        %v709 = vsub.s32 0, %v708
        %v710 = vrot.slane %v529, %v709
        %v711 = vmul.f32 %v691, %v710
        %v712 = vmul.f32 %v692, %v710
        %v713 = vmul.f32 %v693, %v710
        %v714 = vmul.f32 %v694, %v710
        %v715 = vmul.f32 %v695, %v710
        %v716 = vmul.f32 %v696, %v710
        %v717 = vmul.f32 %v697, %v710
        %v718 = vmul.f32 %v698, %v710
        %v719 = vmul.f32 %v699, %v710
        %v720 = vmul.f32 %v700, %v710
        %v721 = vmul.f32 %v701, %v710
        %v722 = vmul.f32 %v702, %v710
        %v723 = vmul.f32 %v703, %v710
        %v724 = vmul.f32 %v704, %v710
        %v725 = vmul.f32 %v705, %v710
        %v726 = vmul.f32 %v706, %v710
        %v727 = vlaneseq
        %v728 = vshrl.u32 %v727, 7
        %v729 = vsub.s32 1, %v728
        %v730 = vrot.slane %v529, %v729
        %v731 = vadd.f32 %v711, %v730
        %v732 = vadd.f32 %v712, %v730
        %v733 = vadd.f32 %v713, %v730
        %v734 = vadd.f32 %v714, %v730
        %v735 = vadd.f32 %v715, %v730
        %v736 = vadd.f32 %v716, %v730
        %v737 = vadd.f32 %v717, %v730
        %v738 = vadd.f32 %v718, %v730
        %v739 = vadd.f32 %v719, %v730
        %v740 = vadd.f32 %v720, %v730
        %v741 = vadd.f32 %v721, %v730
        %v742 = vadd.f32 %v722, %v730
        %v743 = vadd.f32 %v723, %v730
        %v744 = vadd.f32 %v724, %v730
        %v745 = vadd.f32 %v725, %v730
        %v746 = vadd.f32 %v726, %v730
        %v747 = vpack.c.bf16 %v732, %v731
        %v748 = vpack.c.bf16 %v734, %v733
        %v749 = vpack.c.bf16 %v736, %v735
        %v750 = vpack.c.bf16 %v738, %v737
        %v751 = vpack.c.bf16 %v740, %v739
        %v752 = vpack.c.bf16 %v742, %v741
        %v753 = vpack.c.bf16 %v744, %v743
        %v754 = vpack.c.bf16 %v746, %v745
        %v755 = vld [vmem:[%s393] sm:$0xff]
        %v756 = vld [vmem:[%s393 + $0x8] sm:$0xf]
        %v757 = vld [vmem:[%s393 + $0xc] sm:$0xff]
        %v758 = vld [vmem:[%s393 + $0x14] sm:$0xf]
        %v759 = vld [vmem:[%s393 + $0x18] sm:$0xff]
        %v760 = vld [vmem:[%s393 + $0x20] sm:$0xf]
        %v761 = vld [vmem:[%s393 + $0x24] sm:$0xff]
        %v762 = vld [vmem:[%s393 + $0x2c] sm:$0xf]
        %v763 = vld [vmem:[%s393 + $0x30] sm:$0xff]
        %v764 = vld [vmem:[%s393 + $0x38] sm:$0xf]
        %v765 = vld [vmem:[%s393 + $0x3c] sm:$0xff]
        %v766 = vld [vmem:[%s393 + $0x44] sm:$0xf]
        %v767 = vld [vmem:[%s393 + $0x48] sm:$0xff]
        %v768 = vld [vmem:[%s393 + $0x50] sm:$0xf]
        %v769 = vld [vmem:[%s393 + $0x54] sm:$0xff]
        %v770 = vld [vmem:[%s393 + $0x5c] sm:$0xf]
        %v771 = vld [vmem:[%s393 + $0x60] sm:$0xff]
        %v772 = vld [vmem:[%s393 + $0x68] sm:$0xf]
        %v773 = vld [vmem:[%s393 + $0x6c] sm:$0xff]
        %v774 = vld [vmem:[%s393 + $0x74] sm:$0xf]
        %v775 = vld [vmem:[%s393 + $0x78] sm:$0xff]
        %v776 = vld [vmem:[%s393 + $0x80] sm:$0xf]
        %v777 = vld [vmem:[%s393 + $0x84] sm:$0xff]
        %v778 = vld [vmem:[%s393 + $0x8c] sm:$0xf]
        %v779 = vld [vmem:[%s393 + $0x90] sm:$0xff]
        %v780 = vld [vmem:[%s393 + $0x98] sm:$0xf]
        %v781 = vld [vmem:[%s393 + $0x9c] sm:$0xff]
        %v782 = vld [vmem:[%s393 + $0xa4] sm:$0xf]
        %v783 = vld [vmem:[%s393 + $0xa8] sm:$0xff]
        %v784 = vld [vmem:[%s393 + $0xb0] sm:$0xf]
        %v785 = vld [vmem:[%s393 + $0xb4] sm:$0xff]
        %v786 = vld [vmem:[%s393 + $0xbc] sm:$0xf]
        %v819 = vunpack.c.l.b16 %v755
        %v820 = vunpack.c.h.b16 %v755
        %v821 = vunpack.c.l.b16 %v756
        %v822 = vunpack.c.l.b16 %v757
        %v823 = vunpack.c.h.b16 %v757
        %v824 = vunpack.c.l.b16 %v758
        %v825 = vunpack.c.l.b16 %v759
        %v826 = vunpack.c.h.b16 %v759
        %v827 = vunpack.c.l.b16 %v760
        %v828 = vunpack.c.l.b16 %v761
        %v829 = vunpack.c.h.b16 %v761
        %v830 = vunpack.c.l.b16 %v762
        %v831 = vunpack.c.l.b16 %v763
        %v832 = vunpack.c.h.b16 %v763
        %v833 = vunpack.c.l.b16 %v764
        %v834 = vunpack.c.l.b16 %v765
        %v835 = vunpack.c.h.b16 %v765
        %v836 = vunpack.c.l.b16 %v766
        %v837 = vunpack.c.l.b16 %v767
        %v838 = vunpack.c.h.b16 %v767
        %v839 = vunpack.c.l.b16 %v768
        %v840 = vunpack.c.l.b16 %v769
        %v841 = vunpack.c.h.b16 %v769
        %v842 = vunpack.c.l.b16 %v770
        %v843 = vunpack.c.l.b16 %v771
        %v844 = vunpack.c.h.b16 %v771
        %v845 = vunpack.c.l.b16 %v772
        %v846 = vunpack.c.l.b16 %v773
        %v847 = vunpack.c.h.b16 %v773
        %v848 = vunpack.c.l.b16 %v774
        %v849 = vunpack.c.l.b16 %v775
        %v850 = vunpack.c.h.b16 %v775
        %v851 = vunpack.c.l.b16 %v776
        %v852 = vunpack.c.l.b16 %v777
        %v853 = vunpack.c.h.b16 %v777
        %v854 = vunpack.c.l.b16 %v778
        %v855 = vunpack.c.l.b16 %v779
        %v856 = vunpack.c.h.b16 %v779
        %v857 = vunpack.c.l.b16 %v780
        %v858 = vunpack.c.l.b16 %v781
        %v859 = vunpack.c.h.b16 %v781
        %v860 = vunpack.c.l.b16 %v782
        %v861 = vunpack.c.l.b16 %v783
        %v862 = vunpack.c.h.b16 %v783
        %v863 = vunpack.c.l.b16 %v784
        %v864 = vunpack.c.l.b16 %v785
        %v865 = vunpack.c.h.b16 %v785
        %v866 = vunpack.c.l.b16 %v786
        %v867 = vpack.c.b16 %v822, %v819
        %v868 = vpack.c.b16 %v823, %v820
        %v869 = vpack.c.b16 %v824, %v821
        %v870 = vpack.c.b16 %v828, %v825
        %v871 = vpack.c.b16 %v829, %v826
        %v872 = vpack.c.b16 %v830, %v827
        %v873 = vpack.c.b16 %v834, %v831
        %v874 = vpack.c.b16 %v835, %v832
        %v875 = vpack.c.b16 %v836, %v833
        %v876 = vpack.c.b16 %v840, %v837
        %v877 = vpack.c.b16 %v841, %v838
        %v878 = vpack.c.b16 %v842, %v839
        %v879 = vpack.c.b16 %v846, %v843
        %v880 = vpack.c.b16 %v847, %v844
        %v881 = vpack.c.b16 %v848, %v845
        %v882 = vpack.c.b16 %v852, %v849
        %v883 = vpack.c.b16 %v853, %v850
        %v884 = vpack.c.b16 %v854, %v851
        %v885 = vpack.c.b16 %v858, %v855
        %v886 = vpack.c.b16 %v859, %v856
        %v887 = vpack.c.b16 %v860, %v857
        %v888 = vpack.c.b16 %v864, %v861
        %v889 = vpack.c.b16 %v865, %v862
        %v890 = vpack.c.b16 %v866, %v863
        %915 = vmatprep.subr.bf16.mxu0 %v868
        %916 = vmatpush1.bf16.msra.mxu0 %v867
        %917 = vmatprep.subr.bf16.mxu0 %v871
        %918 = vmatpush1.bf16.msra.mxu0 %v870
        %919 = vmatprep.subr.bf16.mxu0 %v874
        %920 = vmatpush1.bf16.msra.mxu0 %v873
        %921 = vmatprep.subr.bf16.mxu0 %v877
        %922 = vmatpush1.bf16.msra.mxu0 %v876
        %923 = vmatprep.subr.bf16.mxu0 %v880
        %924 = vmatpush1.bf16.msra.mxu0 %v879
        %925 = vmatprep.subr.bf16.mxu0 %v883
        %926 = vmatpush1.bf16.msra.mxu0 %v882
        %927 = vmatprep.subr.bf16.mxu0 %v886
        %928 = vmatpush1.bf16.msra.mxu0 %v885
        %929 = vmatprep.subr.bf16.mxu0 %v889
        %930 = vmatpush1.bf16.msra.mxu0 %v888
        %931 = vmatprep.subr.bf16.mxu0 0
        %932 = vmatpush1.bf16.msra.mxu0 0
        %933 = vmatprep.subr.bf16.mxu0 0
        %934 = vmatpush1.bf16.msra.mxu0 0
        %935 = vmatprep.subr.bf16.mxu0 0
        %936 = vmatpush1.bf16.msra.mxu0 0
        %937 = vmatprep.subr.bf16.mxu0 0
        %938 = vmatpush1.bf16.msra.mxu0 0
        %939 = vmatprep.subr.bf16.mxu0 0
        %940 = vmatpush1.bf16.msra.mxu0 0
        %941 = vmatprep.subr.bf16.mxu0 0
        %942 = vmatpush1.bf16.msra.mxu0 0
        %943 = vmatprep.subr.bf16.mxu0 0
        %944 = vmatpush1.bf16.msra.mxu0 0
        %945 = vmatprep.subr.bf16.mxu0 0
        %946 = vmatpush1.bf16.msra.mxu0 0
        %947 = vmatprep.mubr.bf16.mxu0 0
        %948 = vmatmul.mubr.bf16.gmra.mrb[0].mxu0 %v747
        %v949 = vpop.f32.mrb[0].mxu0
        %v950 = vadd.f32 0.0, %v949
        %v951 = vpop.f32.mrb[0].mxu0
        %v952 = vadd.f32 0.0, %v951
        %v953 = vpop.f32.mrb[0].mxu0
        %v954 = vadd.f32 0.0, %v953
        %v955 = vpop.f32.mrb[0].mxu0
        %v956 = vadd.f32 0.0, %v955
        %957 = vmatprep.mubr.bf16.mxu0 0
        %958 = vmatmul.mubr.bf16.gmra.mrb[0].mxu0 %v748
        %v959 = vpop.f32.mrb[0].mxu0
        %v960 = vadd.f32 0.0, %v959
        %v961 = vpop.f32.mrb[0].mxu0
        %v962 = vadd.f32 0.0, %v961
        %v963 = vpop.f32.mrb[0].mxu0
        %v964 = vadd.f32 0.0, %v963
        %v965 = vpop.f32.mrb[0].mxu0
        %v966 = vadd.f32 0.0, %v965
        %967 = vmatprep.mubr.bf16.mxu0 0
        %968 = vmatmul.mubr.bf16.gmra.mrb[0].mxu0 %v749
        %v969 = vpop.f32.mrb[0].mxu0
        %v970 = vadd.f32 0.0, %v969
        %v971 = vpop.f32.mrb[0].mxu0
        %v972 = vadd.f32 0.0, %v971
        %v973 = vpop.f32.mrb[0].mxu0
        %v974 = vadd.f32 0.0, %v973
        %v975 = vpop.f32.mrb[0].mxu0
        %v976 = vadd.f32 0.0, %v975
        %977 = vmatprep.mubr.bf16.mxu0 0
        %978 = vmatmul.mubr.bf16.gmra.mrb[0].mxu0 %v750
        %v979 = vpop.f32.mrb[0].mxu0
        %v980 = vadd.f32 0.0, %v979
        %v981 = vpop.f32.mrb[0].mxu0
        %v982 = vadd.f32 0.0, %v981
        %v983 = vpop.f32.mrb[0].mxu0
        %v984 = vadd.f32 0.0, %v983
        %v985 = vpop.f32.mrb[0].mxu0
        %v986 = vadd.f32 0.0, %v985
        %987 = vmatprep.mubr.bf16.mxu0 0
        %988 = vmatmul.mubr.bf16.gmra.mrb[0].mxu0 %v751
        %v989 = vpop.f32.mrb[0].mxu0
        %v990 = vadd.f32 0.0, %v989
        %v991 = vpop.f32.mrb[0].mxu0
        %v992 = vadd.f32 0.0, %v991
        %v993 = vpop.f32.mrb[0].mxu0
        %v994 = vadd.f32 0.0, %v993
        %v995 = vpop.f32.mrb[0].mxu0
        %v996 = vadd.f32 0.0, %v995
        %997 = vmatprep.mubr.bf16.mxu0 0
        %998 = vmatmul.mubr.bf16.gmra.mrb[0].mxu0 %v752
        %v999 = vpop.f32.mrb[0].mxu0
        %v1000 = vadd.f32 0.0, %v999
        %v1001 = vpop.f32.mrb[0].mxu0
        %v1002 = vadd.f32 0.0, %v1001
        %v1003 = vpop.f32.mrb[0].mxu0
        %v1004 = vadd.f32 0.0, %v1003
        %v1005 = vpop.f32.mrb[0].mxu0
        %v1006 = vadd.f32 0.0, %v1005
        %1007 = vmatprep.mubr.bf16.mxu0 0
        %1008 = vmatmul.mubr.bf16.gmra.mrb[0].mxu0 %v753
        %v1009 = vpop.f32.mrb[0].mxu0
        %v1010 = vadd.f32 0.0, %v1009
        %v1011 = vpop.f32.mrb[0].mxu0
        %v1012 = vadd.f32 0.0, %v1011
        %v1013 = vpop.f32.mrb[0].mxu0
        %v1014 = vadd.f32 0.0, %v1013
        %v1015 = vpop.f32.mrb[0].mxu0
        %v1016 = vadd.f32 0.0, %v1015
        %1017 = vmatprep.mubr.bf16.mxu0 0
        %1018 = vmatmul.mubr.bf16.gmra.mrb[0].mxu0 %v754
        %v1019 = vpop.f32.mrb[0].mxu0
        %v1020 = vadd.f32 0.0, %v1019
        %v1021 = vpop.f32.mrb[0].mxu0
        %v1022 = vadd.f32 0.0, %v1021
        %v1023 = vpop.f32.mrb[0].mxu0
        %v1024 = vadd.f32 0.0, %v1023
        %v1025 = vpop.f32.mrb[0].mxu0
        %v1026 = vadd.f32 0.0, %v1025
        %1027 = vdwg.mxu0
        %1028 = vmatprep.subr.bf16.mxu0 0
        %1029 = vmatpush1.bf16.msra.mxu0 %v869
        %1030 = vmatprep.subr.bf16.mxu0 0
        %1031 = vmatpush1.bf16.msra.mxu0 %v872
        %1032 = vmatprep.subr.bf16.mxu0 0
        %1033 = vmatpush1.bf16.msra.mxu0 %v875
        %1034 = vmatprep.subr.bf16.mxu0 0
        %1035 = vmatpush1.bf16.msra.mxu0 %v878
        %1036 = vmatprep.subr.bf16.mxu0 0
        %1037 = vmatpush1.bf16.msra.mxu0 %v881
        %1038 = vmatprep.subr.bf16.mxu0 0
        %1039 = vmatpush1.bf16.msra.mxu0 %v884
        %1040 = vmatprep.subr.bf16.mxu0 0
        %1041 = vmatpush1.bf16.msra.mxu0 %v887
        %1042 = vmatprep.subr.bf16.mxu0 0
        %1043 = vmatpush1.bf16.msra.mxu0 %v890
        %1044 = vmatprep.subr.bf16.mxu0 0
        %1045 = vmatpush1.bf16.msra.mxu0 0
        %1046 = vmatprep.subr.bf16.mxu0 0
        %1047 = vmatpush1.bf16.msra.mxu0 0
        %1048 = vmatprep.subr.bf16.mxu0 0
        %1049 = vmatpush1.bf16.msra.mxu0 0
        %1050 = vmatprep.subr.bf16.mxu0 0
        %1051 = vmatpush1.bf16.msra.mxu0 0
        %1052 = vmatprep.subr.bf16.mxu0 0
        %1053 = vmatpush1.bf16.msra.mxu0 0
        %1054 = vmatprep.subr.bf16.mxu0 0
        %1055 = vmatpush1.bf16.msra.mxu0 0
        %1056 = vmatprep.subr.bf16.mxu0 0
        %1057 = vmatpush1.bf16.msra.mxu0 0
        %1058 = vmatprep.subr.bf16.mxu0 0
        %1059 = vmatpush1.bf16.msra.mxu0 0
        %1060 = vmatprep.mubr.bf16.mxu0 0
        %1061 = vmatmul.mubr.bf16.gmra.mrb[0].mxu0 %v747
        %v1062 = vpop.f32.mrb[0].mxu0
        %v1063 = vadd.f32 0.0, %v1062
        %v1064 = vpop.f32.mrb[0].mxu0
        %v1065 = vpop.f32.mrb[0].mxu0
        %v1066 = vadd.f32 0.0, %v1065
        %v1067 = vpop.f32.mrb[0].mxu0
        %1068 = vmatprep.mubr.bf16.mxu0 0
        %1069 = vmatmul.mubr.bf16.gmra.mrb[0].mxu0 %v748
        %v1070 = vpop.f32.mrb[0].mxu0
        %v1071 = vadd.f32 0.0, %v1070
        %v1072 = vpop.f32.mrb[0].mxu0
        %v1073 = vpop.f32.mrb[0].mxu0
        %v1074 = vadd.f32 0.0, %v1073
        %v1075 = vpop.f32.mrb[0].mxu0
        %1076 = vmatprep.mubr.bf16.mxu0 0
        %1077 = vmatmul.mubr.bf16.gmra.mrb[0].mxu0 %v749
        %v1078 = vpop.f32.mrb[0].mxu0
        %v1079 = vadd.f32 0.0, %v1078
        %v1080 = vpop.f32.mrb[0].mxu0
        %v1081 = vpop.f32.mrb[0].mxu0
        %v1082 = vadd.f32 0.0, %v1081
        %v1083 = vpop.f32.mrb[0].mxu0
        %1084 = vmatprep.mubr.bf16.mxu0 0
        %1085 = vmatmul.mubr.bf16.gmra.mrb[0].mxu0 %v750
        %v1086 = vpop.f32.mrb[0].mxu0
        %v1087 = vadd.f32 0.0, %v1086
        %v1088 = vpop.f32.mrb[0].mxu0
        %v1089 = vpop.f32.mrb[0].mxu0
        %v1090 = vadd.f32 0.0, %v1089
        %v1091 = vpop.f32.mrb[0].mxu0
        %1092 = vmatprep.mubr.bf16.mxu0 0
        %1093 = vmatmul.mubr.bf16.gmra.mrb[0].mxu0 %v751
        %v1094 = vpop.f32.mrb[0].mxu0
        %v1095 = vadd.f32 0.0, %v1094
        %v1096 = vpop.f32.mrb[0].mxu0
        %v1097 = vpop.f32.mrb[0].mxu0
        %v1098 = vadd.f32 0.0, %v1097
        %v1099 = vpop.f32.mrb[0].mxu0
        %1100 = vmatprep.mubr.bf16.mxu0 0
        %1101 = vmatmul.mubr.bf16.gmra.mrb[0].mxu0 %v752
        %v1102 = vpop.f32.mrb[0].mxu0
        %v1103 = vadd.f32 0.0, %v1102
        %v1104 = vpop.f32.mrb[0].mxu0
        %v1105 = vpop.f32.mrb[0].mxu0
        %v1106 = vadd.f32 0.0, %v1105
        %v1107 = vpop.f32.mrb[0].mxu0
        %1108 = vmatprep.mubr.bf16.mxu0 0
        %1109 = vmatmul.mubr.bf16.gmra.mrb[0].mxu0 %v753
        %v1110 = vpop.f32.mrb[0].mxu0
        %v1111 = vadd.f32 0.0, %v1110
        %v1112 = vpop.f32.mrb[0].mxu0
        %v1113 = vpop.f32.mrb[0].mxu0
        %v1114 = vadd.f32 0.0, %v1113
        %v1115 = vpop.f32.mrb[0].mxu0
        %1116 = vmatprep.mubr.bf16.mxu0 0
        %1117 = vmatmul.mubr.bf16.gmra.mrb[0].mxu0 %v754
        %v1118 = vpop.f32.mrb[0].mxu0
        %v1119 = vadd.f32 0.0, %v1118
        %v1120 = vpop.f32.mrb[0].mxu0
        %v1121 = vpop.f32.mrb[0].mxu0
        %v1122 = vadd.f32 0.0, %v1121
        %v1123 = vpop.f32.mrb[0].mxu0
        %1124 = vdwg.mxu0
        %v1125 = vmul.f32 %v950, 0.17677669
        %v1126 = vmul.f32 %v954, 0.17677669
        %v1127 = vmul.f32 %v960, 0.17677669
        %v1128 = vmul.f32 %v964, 0.17677669
        %v1129 = vmul.f32 %v970, 0.17677669
        %v1130 = vmul.f32 %v974, 0.17677669
        %v1131 = vmul.f32 %v980, 0.17677669
        %v1132 = vmul.f32 %v984, 0.17677669
        %v1133 = vmul.f32 %v990, 0.17677669
        %v1134 = vmul.f32 %v994, 0.17677669
        %v1135 = vmul.f32 %v1000, 0.17677669
        %v1136 = vmul.f32 %v1004, 0.17677669
        %v1137 = vmul.f32 %v1010, 0.17677669
        %v1138 = vmul.f32 %v1014, 0.17677669
        %v1139 = vmul.f32 %v1020, 0.17677669
        %v1140 = vmul.f32 %v1024, 0.17677669
        %v1141 = vpack.c.bf16 %v1126, %v1125
        %v1142 = vpack.c.bf16 %v1128, %v1127
        %v1143 = vpack.c.bf16 %v1130, %v1129
        %v1144 = vpack.c.bf16 %v1132, %v1131
        %v1145 = vpack.c.bf16 %v1134, %v1133
        %v1146 = vpack.c.bf16 %v1136, %v1135
        %v1147 = vpack.c.bf16 %v1138, %v1137
        %v1148 = vpack.c.bf16 %v1140, %v1139
        %v1149 = vpack.c.bf16 %v956, %v952
        %v1150 = vpack.c.bf16 %v966, %v962
        %v1151 = vpack.c.bf16 %v976, %v972
        %v1152 = vpack.c.bf16 %v986, %v982
        %v1153 = vpack.c.bf16 %v996, %v992
        %v1154 = vpack.c.bf16 %v1006, %v1002
        %v1155 = vpack.c.bf16 %v1016, %v1012
        %v1156 = vpack.c.bf16 %v1026, %v1022
        %v1157 = vpack.c.bf16 %v1066, %v1063
        %v1158 = vpack.c.bf16 %v1074, %v1071
        %v1159 = vpack.c.bf16 %v1082, %v1079
        %v1160 = vpack.c.bf16 %v1090, %v1087
        %v1161 = vpack.c.bf16 %v1098, %v1095
        %v1162 = vpack.c.bf16 %v1106, %v1103
        %v1163 = vpack.c.bf16 %v1114, %v1111
        %v1164 = vpack.c.bf16 %v1122, %v1119
        %vm1165 = vcmask 261120
        %v1167 = vsel %vm1165, %v1141, 0
        %v1170 = vsel %vm1165, %v1142, 0
        %v1173 = vsel %vm1165, %v1143, 0
        %v1176 = vsel %vm1165, %v1144, 0
        %v1179 = vsel %vm1165, %v1149, 0
        %v1182 = vsel %vm1165, %v1150, 0
        %v1185 = vsel %vm1165, %v1151, 0
        %v1188 = vsel %vm1165, %v1152, 0
        %1190 = vmatprep.subr.bf16.mxu0 0
        %1191 = vmatpush1.bf16.xpose.msra.mxu0 %v1179
        %1192 = vmatprep.subr.bf16.mxu0 0
        %1193 = vmatpush1.bf16.xpose.msra.mxu0 %v1182
        %1194 = vmatprep.subr.bf16.mxu0 0
        %1195 = vmatpush1.bf16.xpose.msra.mxu0 %v1185
        %1196 = vmatprep.subr.bf16.mxu0 0
        %1197 = vmatpush1.bf16.xpose.msra.mxu0 %v1188
        %1198 = vmatprep.subr.bf16.mxu0 0
        %1199 = vmatpush1.bf16.xpose.msra.mxu0 0
        %1200 = vmatprep.subr.bf16.mxu0 0
        %1201 = vmatpush1.bf16.xpose.msra.mxu0 0
        %1202 = vmatprep.subr.bf16.mxu0 0
        %1203 = vmatpush1.bf16.xpose.msra.mxu0 0
        %1204 = vmatprep.subr.bf16.mxu0 0
        %1205 = vmatpush1.bf16.xpose.msra.mxu0 0
        %1206 = vmatprep.subr.bf16.mxu0 0
        %1207 = vmatpush1.bf16.xpose.msra.mxu0 0
        %1208 = vmatprep.subr.bf16.mxu0 0
        %1209 = vmatpush1.bf16.xpose.msra.mxu0 0
        %1210 = vmatprep.subr.bf16.mxu0 0
        %1211 = vmatpush1.bf16.xpose.msra.mxu0 0
        %1212 = vmatprep.subr.bf16.mxu0 0
        %1213 = vmatpush1.bf16.xpose.msra.mxu0 0
        %1214 = vmatprep.subr.bf16.mxu0 0
        %1215 = vmatpush1.bf16.xpose.msra.mxu0 0
        %1216 = vmatprep.subr.bf16.mxu0 0
        %1217 = vmatpush1.bf16.xpose.msra.mxu0 0
        %1218 = vmatprep.subr.bf16.mxu0 0
        %1219 = vmatpush1.bf16.xpose.msra.mxu0 0
        %1220 = vmatprep.subr.bf16.mxu0 0
        %1221 = vmatpush1.bf16.xpose.msra.mxu0 0
        %1222 = vmatprep.mubr.bf16.mxu0 0
        %1223 = vmatmul.mubr.bf16.gmra.mrb[0].mxu0 %v1167
        %v1224 = vpop.f32.mrb[0].mxu0
        %v1225 = vadd.f32 0.0, %v1224
        %v1226 = vpop.f32.mrb[0].mxu0
        %v1227 = vpop.f32.mrb[0].mxu0
        %v1228 = vadd.f32 0.0, %v1227
        %v1229 = vpop.f32.mrb[0].mxu0
        %1230 = vmatprep.mubr.bf16.mxu0 0
        %1231 = vmatmul.mubr.bf16.gmra.mrb[0].mxu0 %v1170
        %v1232 = vpop.f32.mrb[0].mxu0
        %v1233 = vadd.f32 0.0, %v1232
        %v1234 = vpop.f32.mrb[0].mxu0
        %v1235 = vpop.f32.mrb[0].mxu0
        %v1236 = vadd.f32 0.0, %v1235
        %v1237 = vpop.f32.mrb[0].mxu0
        %1238 = vmatprep.mubr.bf16.mxu0 0
        %1239 = vmatmul.mubr.bf16.gmra.mrb[0].mxu0 %v1173
        %v1240 = vpop.f32.mrb[0].mxu0
        %v1241 = vadd.f32 0.0, %v1240
        %v1242 = vpop.f32.mrb[0].mxu0
        %v1243 = vpop.f32.mrb[0].mxu0
        %v1244 = vadd.f32 0.0, %v1243
        %v1245 = vpop.f32.mrb[0].mxu0
        %1246 = vmatprep.mubr.bf16.mxu0 0
        %1247 = vmatmul.mubr.bf16.gmra.mrb[0].mxu0 %v1176
        %v1248 = vpop.f32.mrb[0].mxu0
        %v1249 = vadd.f32 0.0, %v1248
        %v1250 = vpop.f32.mrb[0].mxu0
        %v1251 = vpop.f32.mrb[0].mxu0
        %v1252 = vadd.f32 0.0, %v1251
        %v1253 = vpop.f32.mrb[0].mxu0
        %1254 = vdwg.mxu0
        %v1256 = vsel %vm1165, %v1145, 0
        %v1259 = vsel %vm1165, %v1146, 0
        %v1262 = vsel %vm1165, %v1147, 0
        %v1265 = vsel %vm1165, %v1148, 0
        %v1268 = vsel %vm1165, %v1153, 0
        %v1271 = vsel %vm1165, %v1154, 0
        %v1274 = vsel %vm1165, %v1155, 0
        %v1277 = vsel %vm1165, %v1156, 0
        %1279 = vmatprep.subr.bf16.mxu0 0
        %1280 = vmatpush1.bf16.xpose.msra.mxu0 %v1268
        %1281 = vmatprep.subr.bf16.mxu0 0
        %1282 = vmatpush1.bf16.xpose.msra.mxu0 %v1271
        %1283 = vmatprep.subr.bf16.mxu0 0
        %1284 = vmatpush1.bf16.xpose.msra.mxu0 %v1274
        %1285 = vmatprep.subr.bf16.mxu0 0
        %1286 = vmatpush1.bf16.xpose.msra.mxu0 %v1277
        %1287 = vmatprep.subr.bf16.mxu0 0
        %1288 = vmatpush1.bf16.xpose.msra.mxu0 0
        %1289 = vmatprep.subr.bf16.mxu0 0
        %1290 = vmatpush1.bf16.xpose.msra.mxu0 0
        %1291 = vmatprep.subr.bf16.mxu0 0
        %1292 = vmatpush1.bf16.xpose.msra.mxu0 0
        %1293 = vmatprep.subr.bf16.mxu0 0
        %1294 = vmatpush1.bf16.xpose.msra.mxu0 0
        %1295 = vmatprep.subr.bf16.mxu0 0
        %1296 = vmatpush1.bf16.xpose.msra.mxu0 0
        %1297 = vmatprep.subr.bf16.mxu0 0
        %1298 = vmatpush1.bf16.xpose.msra.mxu0 0
        %1299 = vmatprep.subr.bf16.mxu0 0
        %1300 = vmatpush1.bf16.xpose.msra.mxu0 0
        %1301 = vmatprep.subr.bf16.mxu0 0
        %1302 = vmatpush1.bf16.xpose.msra.mxu0 0
        %1303 = vmatprep.subr.bf16.mxu0 0
        %1304 = vmatpush1.bf16.xpose.msra.mxu0 0
        %1305 = vmatprep.subr.bf16.mxu0 0
        %1306 = vmatpush1.bf16.xpose.msra.mxu0 0
        %1307 = vmatprep.subr.bf16.mxu0 0
        %1308 = vmatpush1.bf16.xpose.msra.mxu0 0
        %1309 = vmatprep.subr.bf16.mxu0 0
        %1310 = vmatpush1.bf16.xpose.msra.mxu0 0
        %1311 = vmatprep.mubr.bf16.mxu0 0
        %1312 = vmatmul.mubr.bf16.gmra.mrb[0].mxu0 %v1256
        %v1313 = vpop.f32.mrb[0].mxu0
        %v1314 = vadd.f32 0.0, %v1313
        %v1315 = vpop.f32.mrb[0].mxu0
        %v1316 = vpop.f32.mrb[0].mxu0
        %v1317 = vadd.f32 0.0, %v1316
        %v1318 = vpop.f32.mrb[0].mxu0
        %1319 = vmatprep.mubr.bf16.mxu0 0
        %1320 = vmatmul.mubr.bf16.gmra.mrb[0].mxu0 %v1259
        %v1321 = vpop.f32.mrb[0].mxu0
        %v1322 = vadd.f32 0.0, %v1321
        %v1323 = vpop.f32.mrb[0].mxu0
        %v1324 = vpop.f32.mrb[0].mxu0
        %v1325 = vadd.f32 0.0, %v1324
        %v1326 = vpop.f32.mrb[0].mxu0
        %1327 = vmatprep.mubr.bf16.mxu0 0
        %1328 = vmatmul.mubr.bf16.gmra.mrb[0].mxu0 %v1262
        %v1329 = vpop.f32.mrb[0].mxu0
        %v1330 = vadd.f32 0.0, %v1329
        %v1331 = vpop.f32.mrb[0].mxu0
        %v1332 = vpop.f32.mrb[0].mxu0
        %v1333 = vadd.f32 0.0, %v1332
        %v1334 = vpop.f32.mrb[0].mxu0
        %1335 = vmatprep.mubr.bf16.mxu0 0
        %1336 = vmatmul.mubr.bf16.gmra.mrb[0].mxu0 %v1265
        %v1337 = vpop.f32.mrb[0].mxu0
        %v1338 = vadd.f32 0.0, %v1337
        %v1339 = vpop.f32.mrb[0].mxu0
        %v1340 = vpop.f32.mrb[0].mxu0
        %v1341 = vadd.f32 0.0, %v1340
        %v1342 = vpop.f32.mrb[0].mxu0
        %1343 = vdwg.mxu0
        %vm1344 = vcmask 523264
        %v1345 = vsel %vm1344, %v1225, -inf
        %1346 = vmax.xlane.f32.xlu0 %v1345
        %v1347 = vpop.xlane.xlu0 %1346
        %v1348 = vsel %vm1344, %v1228, -inf
        %1349 = vmax.xlane.f32.xlu0 %v1348
        %v1350 = vpop.xlane.xlu0 %1349
        %v1351 = vsel %vm1344, %v1233, -inf
        %1352 = vmax.xlane.f32.xlu0 %v1351
        %v1353 = vpop.xlane.xlu0 %1352
        %v1354 = vsel %vm1344, %v1236, -inf
        %1355 = vmax.xlane.f32.xlu0 %v1354
        %v1356 = vpop.xlane.xlu0 %1355
        %v1357 = vsel %vm1344, %v1241, -inf
        %1358 = vmax.xlane.f32.xlu0 %v1357
        %v1359 = vpop.xlane.xlu0 %1358
        %v1360 = vsel %vm1344, %v1244, -inf
        %1361 = vmax.xlane.f32.xlu0 %v1360
        %v1362 = vpop.xlane.xlu0 %1361
        %v1363 = vsel %vm1344, %v1249, -inf
        %1364 = vmax.xlane.f32.xlu0 %v1363
        %v1365 = vpop.xlane.xlu0 %1364
        %v1366 = vsel %vm1344, %v1252, -inf
        %1367 = vmax.xlane.f32.xlu0 %v1366
        %v1368 = vpop.xlane.xlu0 %1367
        %v1369 = vsel %vm1344, %v1314, -inf
        %1370 = vmax.xlane.f32.xlu0 %v1369
        %v1371 = vpop.xlane.xlu0 %1370
        %v1372 = vsel %vm1344, %v1317, -inf
        %1373 = vmax.xlane.f32.xlu0 %v1372
        %v1374 = vpop.xlane.xlu0 %1373
        %v1375 = vsel %vm1344, %v1322, -inf
        %1376 = vmax.xlane.f32.xlu0 %v1375
        %v1377 = vpop.xlane.xlu0 %1376
        %v1378 = vsel %vm1344, %v1325, -inf
        %1379 = vmax.xlane.f32.xlu0 %v1378
        %v1380 = vpop.xlane.xlu0 %1379
        %v1381 = vsel %vm1344, %v1330, -inf
        %1382 = vmax.xlane.f32.xlu0 %v1381
        %v1383 = vpop.xlane.xlu0 %1382
        %v1384 = vsel %vm1344, %v1333, -inf
        %1385 = vmax.xlane.f32.xlu0 %v1384
        %v1386 = vpop.xlane.xlu0 %1385
        %v1387 = vsel %vm1344, %v1338, -inf
        %1388 = vmax.xlane.f32.xlu0 %v1387
        %v1389 = vpop.xlane.xlu0 %1388
        %v1390 = vsel %vm1344, %v1341, -inf
        %1391 = vmax.xlane.f32.xlu0 %v1390
        %v1392 = vpop.xlane.xlu0 %1391
        %v1393 = vsub.f32 %v1225, %v1347
        %v1394 = vsub.f32 %v1228, %v1350
        %v1395 = vsub.f32 %v1233, %v1353
        %v1396 = vsub.f32 %v1236, %v1356
        %v1397 = vsub.f32 %v1241, %v1359
        %v1398 = vsub.f32 %v1244, %v1362
        %v1399 = vsub.f32 %v1249, %v1365
        %v1400 = vsub.f32 %v1252, %v1368
        %v1401 = vsub.f32 %v1314, %v1371
        %v1402 = vsub.f32 %v1317, %v1374
        %v1403 = vsub.f32 %v1322, %v1377
        %v1404 = vsub.f32 %v1325, %v1380
        %v1405 = vsub.f32 %v1330, %v1383
        %v1406 = vsub.f32 %v1333, %v1386
        %v1407 = vsub.f32 %v1338, %v1389
        %v1408 = vsub.f32 %v1341, %v1392
        %v1409 = vmul.f32 %v1393, 1.442695
        %v1410 = vpow.pop %v1409
        %v1411 = vmul.f32 %v1394, 1.442695
        %v1412 = vpow.pop %v1411
        %v1413 = vmul.f32 %v1395, 1.442695
        %v1414 = vpow.pop %v1413
        %v1415 = vmul.f32 %v1396, 1.442695
        %v1416 = vpow.pop %v1415
        %v1417 = vmul.f32 %v1397, 1.442695
        %v1418 = vpow.pop %v1417
        %v1419 = vmul.f32 %v1398, 1.442695
        %v1420 = vpow.pop %v1419
        %v1421 = vmul.f32 %v1399, 1.442695
        %v1422 = vpow.pop %v1421
        %v1423 = vmul.f32 %v1400, 1.442695
        %v1424 = vpow.pop %v1423
        %v1425 = vmul.f32 %v1401, 1.442695
        %v1426 = vpow.pop %v1425
        %v1427 = vmul.f32 %v1402, 1.442695
        %v1428 = vpow.pop %v1427
        %v1429 = vmul.f32 %v1403, 1.442695
        %v1430 = vpow.pop %v1429
        %v1431 = vmul.f32 %v1404, 1.442695
        %v1432 = vpow.pop %v1431
        %v1433 = vmul.f32 %v1405, 1.442695
        %v1434 = vpow.pop %v1433
        %v1435 = vmul.f32 %v1406, 1.442695
        %v1436 = vpow.pop %v1435
        %v1437 = vmul.f32 %v1407, 1.442695
        %v1438 = vpow.pop %v1437
        %v1439 = vmul.f32 %v1408, 1.442695
        %v1440 = vpow.pop %v1439
        %v1441 = vsel %vm1344, %v1410, 0.0
        %1442 = vadd.xlane.f32.xlu0 %v1441
        %v1443 = vpop.xlane.xlu0 %1442
        %v1444 = vsel %vm1344, %v1412, 0.0
        %1445 = vadd.xlane.f32.xlu0 %v1444
        %v1446 = vpop.xlane.xlu0 %1445
        %v1447 = vsel %vm1344, %v1414, 0.0
        %1448 = vadd.xlane.f32.xlu0 %v1447
        %v1449 = vpop.xlane.xlu0 %1448
        %v1450 = vsel %vm1344, %v1416, 0.0
        %1451 = vadd.xlane.f32.xlu0 %v1450
        %v1452 = vpop.xlane.xlu0 %1451
        %v1453 = vsel %vm1344, %v1418, 0.0
        %1454 = vadd.xlane.f32.xlu0 %v1453
        %v1455 = vpop.xlane.xlu0 %1454
        %v1456 = vsel %vm1344, %v1420, 0.0
        %1457 = vadd.xlane.f32.xlu0 %v1456
        %v1458 = vpop.xlane.xlu0 %1457
        %v1459 = vsel %vm1344, %v1422, 0.0
        %1460 = vadd.xlane.f32.xlu0 %v1459
        %v1461 = vpop.xlane.xlu0 %1460
        %v1462 = vsel %vm1344, %v1424, 0.0
        %1463 = vadd.xlane.f32.xlu0 %v1462
        %v1464 = vpop.xlane.xlu0 %1463
        %v1465 = vsel %vm1344, %v1426, 0.0
        %1466 = vadd.xlane.f32.xlu0 %v1465
        %v1467 = vpop.xlane.xlu0 %1466
        %v1468 = vsel %vm1344, %v1428, 0.0
        %1469 = vadd.xlane.f32.xlu0 %v1468
        %v1470 = vpop.xlane.xlu0 %1469
        %v1471 = vsel %vm1344, %v1430, 0.0
        %1472 = vadd.xlane.f32.xlu0 %v1471
        %v1473 = vpop.xlane.xlu0 %1472
        %v1474 = vsel %vm1344, %v1432, 0.0
        %1475 = vadd.xlane.f32.xlu0 %v1474
        %v1476 = vpop.xlane.xlu0 %1475
        %v1477 = vsel %vm1344, %v1434, 0.0
        %1478 = vadd.xlane.f32.xlu0 %v1477
        %v1479 = vpop.xlane.xlu0 %1478
        %v1480 = vsel %vm1344, %v1436, 0.0
        %1481 = vadd.xlane.f32.xlu0 %v1480
        %v1482 = vpop.xlane.xlu0 %1481
        %v1483 = vsel %vm1344, %v1438, 0.0
        %1484 = vadd.xlane.f32.xlu0 %v1483
        %v1485 = vpop.xlane.xlu0 %1484
        %v1486 = vsel %vm1344, %v1440, 0.0
        %1487 = vadd.xlane.f32.xlu0 %v1486
        %v1488 = vpop.xlane.xlu0 %1487
        %v1489 = vrcp.pop %v1443
        %v1490 = vrcp.pop %v1446
        %v1491 = vrcp.pop %v1449
        %v1492 = vrcp.pop %v1452
        %v1493 = vrcp.pop %v1455
        %v1494 = vrcp.pop %v1458
        %v1495 = vrcp.pop %v1461
        %v1496 = vrcp.pop %v1464
        %v1497 = vrcp.pop %v1467
        %v1498 = vrcp.pop %v1470
        %v1499 = vrcp.pop %v1473
        %v1500 = vrcp.pop %v1476
        %v1501 = vrcp.pop %v1479
        %v1502 = vrcp.pop %v1482
        %v1503 = vrcp.pop %v1485
        %v1504 = vrcp.pop %v1488
        %v1505 = vmul.f32 %v1410, %v1489
        %v1506 = vmul.f32 %v1412, %v1490
        %v1507 = vmul.f32 %v1414, %v1491
        %v1508 = vmul.f32 %v1416, %v1492
        %v1509 = vmul.f32 %v1418, %v1493
        %v1510 = vmul.f32 %v1420, %v1494
        %v1511 = vmul.f32 %v1422, %v1495
        %v1512 = vmul.f32 %v1424, %v1496
        %v1513 = vmul.f32 %v1426, %v1497
        %v1514 = vmul.f32 %v1428, %v1498
        %v1515 = vmul.f32 %v1430, %v1499
        %v1516 = vmul.f32 %v1432, %v1500
        %v1517 = vmul.f32 %v1434, %v1501
        %v1518 = vmul.f32 %v1436, %v1502
        %v1519 = vmul.f32 %v1438, %v1503
        %v1520 = vmul.f32 %v1440, %v1504
        %v1521 = vpack.c.bf16 %v1506, %v1505
        %v1522 = vpack.c.bf16 %v1508, %v1507
        %v1523 = vpack.c.bf16 %v1510, %v1509
        %v1524 = vpack.c.bf16 %v1512, %v1511
        %v1525 = vpack.c.bf16 %v1514, %v1513
        %v1526 = vpack.c.bf16 %v1516, %v1515
        %v1527 = vpack.c.bf16 %v1518, %v1517
        %v1528 = vpack.c.bf16 %v1520, %v1519
        %v1530 = vsel %vm1344, %v1521, 0
        %v1533 = vsel %vm1344, %v1522, 0
        %v1536 = vsel %vm1344, %v1523, 0
        %v1539 = vsel %vm1344, %v1524, 0
        %1541 = vmatprep.subr.bf16.mxu0 0
        %1542 = vmatpush1.bf16.msra.mxu0 %v1157
        %1543 = vmatprep.subr.bf16.mxu0 0
        %1544 = vmatpush1.bf16.msra.mxu0 %v1158
        %1545 = vmatprep.subr.bf16.mxu0 0
        %1546 = vmatpush1.bf16.msra.mxu0 %v1159
        %1547 = vmatprep.subr.bf16.mxu0 0
        %1548 = vmatpush1.bf16.msra.mxu0 %v1160
        %1549 = vmatprep.subr.bf16.mxu0 0
        %1550 = vmatpush1.bf16.msra.mxu0 0
        %1551 = vmatprep.subr.bf16.mxu0 0
        %1552 = vmatpush1.bf16.msra.mxu0 0
        %1553 = vmatprep.subr.bf16.mxu0 0
        %1554 = vmatpush1.bf16.msra.mxu0 0
        %1555 = vmatprep.subr.bf16.mxu0 0
        %1556 = vmatpush1.bf16.msra.mxu0 0
        %1557 = vmatprep.subr.bf16.mxu0 0
        %1558 = vmatpush1.bf16.msra.mxu0 0
        %1559 = vmatprep.subr.bf16.mxu0 0
        %1560 = vmatpush1.bf16.msra.mxu0 0
        %1561 = vmatprep.subr.bf16.mxu0 0
        %1562 = vmatpush1.bf16.msra.mxu0 0
        %1563 = vmatprep.subr.bf16.mxu0 0
        %1564 = vmatpush1.bf16.msra.mxu0 0
        %1565 = vmatprep.subr.bf16.mxu0 0
        %1566 = vmatpush1.bf16.msra.mxu0 0
        %1567 = vmatprep.subr.bf16.mxu0 0
        %1568 = vmatpush1.bf16.msra.mxu0 0
        %1569 = vmatprep.subr.bf16.mxu0 0
        %1570 = vmatpush1.bf16.msra.mxu0 0
        %1571 = vmatprep.subr.bf16.mxu0 0
        %1572 = vmatpush1.bf16.msra.mxu0 0
        %1573 = vmatprep.mubr.bf16.mxu0 0
        %1574 = vmatmul.mubr.bf16.gmra.mrb[0].mxu0 %v1530
        %v1575 = vpop.f32.mrb[0].mxu0
        %v1576 = vadd.f32 0.0, %v1575
        %v1577 = vpop.f32.mrb[0].mxu0
        %v1578 = vpop.f32.mrb[0].mxu0
        %v1579 = vadd.f32 0.0, %v1578
        %v1580 = vpop.f32.mrb[0].mxu0
        %1581 = vmatprep.mubr.bf16.mxu0 0
        %1582 = vmatmul.mubr.bf16.gmra.mrb[0].mxu0 %v1533
        %v1583 = vpop.f32.mrb[0].mxu0
        %v1584 = vadd.f32 0.0, %v1583
        %v1585 = vpop.f32.mrb[0].mxu0
        %v1586 = vpop.f32.mrb[0].mxu0
        %v1587 = vadd.f32 0.0, %v1586
        %v1588 = vpop.f32.mrb[0].mxu0
        %1589 = vmatprep.mubr.bf16.mxu0 0
        %1590 = vmatmul.mubr.bf16.gmra.mrb[0].mxu0 %v1536
        %v1591 = vpop.f32.mrb[0].mxu0
        %v1592 = vadd.f32 0.0, %v1591
        %v1593 = vpop.f32.mrb[0].mxu0
        %v1594 = vpop.f32.mrb[0].mxu0
        %v1595 = vadd.f32 0.0, %v1594
        %v1596 = vpop.f32.mrb[0].mxu0
        %1597 = vmatprep.mubr.bf16.mxu0 0
        %1598 = vmatmul.mubr.bf16.gmra.mrb[0].mxu0 %v1539
        %v1599 = vpop.f32.mrb[0].mxu0
        %v1600 = vadd.f32 0.0, %v1599
        %v1601 = vpop.f32.mrb[0].mxu0
        %v1602 = vpop.f32.mrb[0].mxu0
        %v1603 = vadd.f32 0.0, %v1602
        %v1604 = vpop.f32.mrb[0].mxu0
        %1605 = vdwg.mxu0
        %v1607 = vsel %vm1344, %v1525, 0
        %v1610 = vsel %vm1344, %v1526, 0
        %v1613 = vsel %vm1344, %v1527, 0
        %v1616 = vsel %vm1344, %v1528, 0
        %1618 = vmatprep.subr.bf16.mxu0 0
        %1619 = vmatpush1.bf16.msra.mxu0 %v1161
        %1620 = vmatprep.subr.bf16.mxu0 0
        %1621 = vmatpush1.bf16.msra.mxu0 %v1162
        %1622 = vmatprep.subr.bf16.mxu0 0
        %1623 = vmatpush1.bf16.msra.mxu0 %v1163
        %1624 = vmatprep.subr.bf16.mxu0 0
        %1625 = vmatpush1.bf16.msra.mxu0 %v1164
        %1626 = vmatprep.subr.bf16.mxu0 0
        %1627 = vmatpush1.bf16.msra.mxu0 0
        %1628 = vmatprep.subr.bf16.mxu0 0
        %1629 = vmatpush1.bf16.msra.mxu0 0
        %1630 = vmatprep.subr.bf16.mxu0 0
        %1631 = vmatpush1.bf16.msra.mxu0 0
        %1632 = vmatprep.subr.bf16.mxu0 0
        %1633 = vmatpush1.bf16.msra.mxu0 0
        %1634 = vmatprep.subr.bf16.mxu0 0
        %1635 = vmatpush1.bf16.msra.mxu0 0
        %1636 = vmatprep.subr.bf16.mxu0 0
        %1637 = vmatpush1.bf16.msra.mxu0 0
        %1638 = vmatprep.subr.bf16.mxu0 0
        %1639 = vmatpush1.bf16.msra.mxu0 0
        %1640 = vmatprep.subr.bf16.mxu0 0
        %1641 = vmatpush1.bf16.msra.mxu0 0
        %1642 = vmatprep.subr.bf16.mxu0 0
        %1643 = vmatpush1.bf16.msra.mxu0 0
        %1644 = vmatprep.subr.bf16.mxu0 0
        %1645 = vmatpush1.bf16.msra.mxu0 0
        %1646 = vmatprep.subr.bf16.mxu0 0
        %1647 = vmatpush1.bf16.msra.mxu0 0
        %1648 = vmatprep.subr.bf16.mxu0 0
        %1649 = vmatpush1.bf16.msra.mxu0 0
        %1650 = vmatprep.mubr.bf16.mxu0 0
        %1651 = vmatmul.mubr.bf16.gmra.mrb[0].mxu0 %v1607
        %v1652 = vpop.f32.mrb[0].mxu0
        %v1653 = vadd.f32 0.0, %v1652
        %v1654 = vpop.f32.mrb[0].mxu0
        %v1655 = vpop.f32.mrb[0].mxu0
        %v1656 = vadd.f32 0.0, %v1655
        %v1657 = vpop.f32.mrb[0].mxu0
        %1658 = vmatprep.mubr.bf16.mxu0 0
        %1659 = vmatmul.mubr.bf16.gmra.mrb[0].mxu0 %v1610
        %v1660 = vpop.f32.mrb[0].mxu0
        %v1661 = vadd.f32 0.0, %v1660
        %v1662 = vpop.f32.mrb[0].mxu0
        %v1663 = vpop.f32.mrb[0].mxu0
        %v1664 = vadd.f32 0.0, %v1663
        %v1665 = vpop.f32.mrb[0].mxu0
        %1666 = vmatprep.mubr.bf16.mxu0 0
        %1667 = vmatmul.mubr.bf16.gmra.mrb[0].mxu0 %v1613
        %v1668 = vpop.f32.mrb[0].mxu0
        %v1669 = vadd.f32 0.0, %v1668
        %v1670 = vpop.f32.mrb[0].mxu0
        %v1671 = vpop.f32.mrb[0].mxu0
        %v1672 = vadd.f32 0.0, %v1671
        %v1673 = vpop.f32.mrb[0].mxu0
        %1674 = vmatprep.mubr.bf16.mxu0 0
        %1675 = vmatmul.mubr.bf16.gmra.mrb[0].mxu0 %v1616
        %v1676 = vpop.f32.mrb[0].mxu0
        %v1677 = vadd.f32 0.0, %v1676
        %v1678 = vpop.f32.mrb[0].mxu0
        %v1679 = vpop.f32.mrb[0].mxu0
        %v1680 = vadd.f32 0.0, %v1679
        %v1681 = vpop.f32.mrb[0].mxu0
        %1682 = vdwg.mxu0
        %v1683 = vpack.c.bf16 %v1579, %v1576
        %v1684 = vpack.c.bf16 %v1587, %v1584
        %v1685 = vpack.c.bf16 %v1595, %v1592
        %v1686 = vpack.c.bf16 %v1603, %v1600
        %v1687 = vpack.c.bf16 %v1656, %v1653
        %v1688 = vpack.c.bf16 %v1664, %v1661
        %v1689 = vpack.c.bf16 %v1672, %v1669
        %v1690 = vpack.c.bf16 %v1680, %v1677
        %1691 = vst.msk [vmem:[#allocation2] sm:$0xff] %vm1165, %v1683
        %1692 = vst.msk [vmem:[#allocation2 + $0x8] sm:$0xff] %vm1165, %v1684
        %1693 = vst.msk [vmem:[#allocation2 + $0x10] sm:$0xff] %vm1165, %v1685
        %1694 = vst.msk [vmem:[#allocation2 + $0x18] sm:$0xff] %vm1165, %v1686
        %1695 = vst.msk [vmem:[#allocation2 + $0x20] sm:$0xff] %vm1165, %v1687
        %1696 = vst.msk [vmem:[#allocation2 + $0x28] sm:$0xff] %vm1165, %v1688
        %1697 = vst.msk [vmem:[#allocation2 + $0x30] sm:$0xff] %vm1165, %v1689
        %1698 = vst.msk [vmem:[#allocation2 + $0x38] sm:$0xff] %vm1165, %v1690
        %1703 = vrot.lane.b32.xlu0 %v1141, 96
        %v1704 = vpop.permute.xlu0 %1703
        %1705 = vrot.lane.b32.xlu0 %v1142, 96
        %v1706 = vpop.permute.xlu0 %1705
        %1707 = vrot.lane.b32.xlu0 %v1143, 96
        %v1708 = vpop.permute.xlu0 %1707
        %1709 = vrot.lane.b32.xlu0 %v1144, 96
        %v1710 = vpop.permute.xlu0 %1709
        %1715 = vrot.lane.b32.xlu0 %v1149, 96
        %v1716 = vpop.permute.xlu0 %1715
        %1717 = vrot.lane.b32.xlu0 %v1150, 96
        %v1718 = vpop.permute.xlu0 %1717
        %1719 = vrot.lane.b32.xlu0 %v1151, 96
        %v1720 = vpop.permute.xlu0 %1719
        %1721 = vrot.lane.b32.xlu0 %v1152, 96
        %v1722 = vpop.permute.xlu0 %1721
        %v1724 = vsel %vm1165, %v1704, 0
        %v1727 = vsel %vm1165, %v1706, 0
        %v1730 = vsel %vm1165, %v1708, 0
        %v1733 = vsel %vm1165, %v1710, 0
        %v1736 = vsel %vm1165, %v1716, 0
        %v1739 = vsel %vm1165, %v1718, 0
        %v1742 = vsel %vm1165, %v1720, 0
        %v1745 = vsel %vm1165, %v1722, 0
        %1747 = vmatprep.subr.bf16.mxu0 0
        %1748 = vmatpush1.bf16.xpose.msra.mxu0 %v1736
        %1749 = vmatprep.subr.bf16.mxu0 0
        %1750 = vmatpush1.bf16.xpose.msra.mxu0 %v1739
        %1751 = vmatprep.subr.bf16.mxu0 0
        %1752 = vmatpush1.bf16.xpose.msra.mxu0 %v1742
        %1753 = vmatprep.subr.bf16.mxu0 0
        %1754 = vmatpush1.bf16.xpose.msra.mxu0 %v1745
        %1755 = vmatprep.subr.bf16.mxu0 0
        %1756 = vmatpush1.bf16.xpose.msra.mxu0 0
        %1757 = vmatprep.subr.bf16.mxu0 0
        %1758 = vmatpush1.bf16.xpose.msra.mxu0 0
        %1759 = vmatprep.subr.bf16.mxu0 0
        %1760 = vmatpush1.bf16.xpose.msra.mxu0 0
        %1761 = vmatprep.subr.bf16.mxu0 0
        %1762 = vmatpush1.bf16.xpose.msra.mxu0 0
        %1763 = vmatprep.subr.bf16.mxu0 0
        %1764 = vmatpush1.bf16.xpose.msra.mxu0 0
        %1765 = vmatprep.subr.bf16.mxu0 0
        %1766 = vmatpush1.bf16.xpose.msra.mxu0 0
        %1767 = vmatprep.subr.bf16.mxu0 0
        %1768 = vmatpush1.bf16.xpose.msra.mxu0 0
        %1769 = vmatprep.subr.bf16.mxu0 0
        %1770 = vmatpush1.bf16.xpose.msra.mxu0 0
        %1771 = vmatprep.subr.bf16.mxu0 0
        %1772 = vmatpush1.bf16.xpose.msra.mxu0 0
        %1773 = vmatprep.subr.bf16.mxu0 0
        %1774 = vmatpush1.bf16.xpose.msra.mxu0 0
        %1775 = vmatprep.subr.bf16.mxu0 0
        %1776 = vmatpush1.bf16.xpose.msra.mxu0 0
        %1777 = vmatprep.subr.bf16.mxu0 0
        %1778 = vmatpush1.bf16.xpose.msra.mxu0 0
        %1779 = vmatprep.mubr.bf16.mxu0 0
        %1780 = vmatmul.mubr.bf16.gmra.mrb[0].mxu0 %v1724
        %v1781 = vpop.f32.mrb[0].mxu0
        %v1782 = vadd.f32 0.0, %v1781
        %v1783 = vpop.f32.mrb[0].mxu0
        %v1784 = vpop.f32.mrb[0].mxu0
        %v1785 = vadd.f32 0.0, %v1784
        %v1786 = vpop.f32.mrb[0].mxu0
        %1787 = vmatprep.mubr.bf16.mxu0 0
        %1788 = vmatmul.mubr.bf16.gmra.mrb[0].mxu0 %v1727
        %v1789 = vpop.f32.mrb[0].mxu0
        %v1790 = vadd.f32 0.0, %v1789
        %v1791 = vpop.f32.mrb[0].mxu0
        %v1792 = vpop.f32.mrb[0].mxu0
        %v1793 = vadd.f32 0.0, %v1792
        %v1794 = vpop.f32.mrb[0].mxu0
        %1795 = vmatprep.mubr.bf16.mxu0 0
        %1796 = vmatmul.mubr.bf16.gmra.mrb[0].mxu0 %v1730
        %v1797 = vpop.f32.mrb[0].mxu0
        %v1798 = vadd.f32 0.0, %v1797
        %v1799 = vpop.f32.mrb[0].mxu0
        %v1800 = vpop.f32.mrb[0].mxu0
        %v1801 = vadd.f32 0.0, %v1800
        %v1802 = vpop.f32.mrb[0].mxu0
        %1803 = vmatprep.mubr.bf16.mxu0 0
        %1804 = vmatmul.mubr.bf16.gmra.mrb[0].mxu0 %v1733
        %v1805 = vpop.f32.mrb[0].mxu0
        %v1806 = vadd.f32 0.0, %v1805
        %v1807 = vpop.f32.mrb[0].mxu0
        %v1808 = vpop.f32.mrb[0].mxu0
        %v1809 = vadd.f32 0.0, %v1808
        %v1810 = vpop.f32.mrb[0].mxu0
        %1811 = vdwg.mxu0
        %1816 = vrot.lane.b32.xlu0 %v1145, 96
        %v1817 = vpop.permute.xlu0 %1816
        %1818 = vrot.lane.b32.xlu0 %v1146, 96
        %v1819 = vpop.permute.xlu0 %1818
        %1820 = vrot.lane.b32.xlu0 %v1147, 96
        %v1821 = vpop.permute.xlu0 %1820
        %1822 = vrot.lane.b32.xlu0 %v1148, 96
        %v1823 = vpop.permute.xlu0 %1822
        %1828 = vrot.lane.b32.xlu0 %v1153, 96
        %v1829 = vpop.permute.xlu0 %1828
        %1830 = vrot.lane.b32.xlu0 %v1154, 96
        %v1831 = vpop.permute.xlu0 %1830
        %1832 = vrot.lane.b32.xlu0 %v1155, 96
        %v1833 = vpop.permute.xlu0 %1832
        %1834 = vrot.lane.b32.xlu0 %v1156, 96
        %v1835 = vpop.permute.xlu0 %1834
        %v1837 = vsel %vm1165, %v1817, 0
        %v1840 = vsel %vm1165, %v1819, 0
        %v1843 = vsel %vm1165, %v1821, 0
        %v1846 = vsel %vm1165, %v1823, 0
        %v1849 = vsel %vm1165, %v1829, 0
        %v1852 = vsel %vm1165, %v1831, 0
        %v1855 = vsel %vm1165, %v1833, 0
        %v1858 = vsel %vm1165, %v1835, 0
        %1860 = vmatprep.subr.bf16.mxu0 0
        %1861 = vmatpush1.bf16.xpose.msra.mxu0 %v1849
        %1862 = vmatprep.subr.bf16.mxu0 0
        %1863 = vmatpush1.bf16.xpose.msra.mxu0 %v1852
        %1864 = vmatprep.subr.bf16.mxu0 0
        %1865 = vmatpush1.bf16.xpose.msra.mxu0 %v1855
        %1866 = vmatprep.subr.bf16.mxu0 0
        %1867 = vmatpush1.bf16.xpose.msra.mxu0 %v1858
        %1868 = vmatprep.subr.bf16.mxu0 0
        %1869 = vmatpush1.bf16.xpose.msra.mxu0 0
        %1870 = vmatprep.subr.bf16.mxu0 0
        %1871 = vmatpush1.bf16.xpose.msra.mxu0 0
        %1872 = vmatprep.subr.bf16.mxu0 0
        %1873 = vmatpush1.bf16.xpose.msra.mxu0 0
        %1874 = vmatprep.subr.bf16.mxu0 0
        %1875 = vmatpush1.bf16.xpose.msra.mxu0 0
        %1876 = vmatprep.subr.bf16.mxu0 0
        %1877 = vmatpush1.bf16.xpose.msra.mxu0 0
        %1878 = vmatprep.subr.bf16.mxu0 0
        %1879 = vmatpush1.bf16.xpose.msra.mxu0 0
        %1880 = vmatprep.subr.bf16.mxu0 0
        %1881 = vmatpush1.bf16.xpose.msra.mxu0 0
        %1882 = vmatprep.subr.bf16.mxu0 0
        %1883 = vmatpush1.bf16.xpose.msra.mxu0 0
        %1884 = vmatprep.subr.bf16.mxu0 0
        %1885 = vmatpush1.bf16.xpose.msra.mxu0 0
        %1886 = vmatprep.subr.bf16.mxu0 0
        %1887 = vmatpush1.bf16.xpose.msra.mxu0 0
        %1888 = vmatprep.subr.bf16.mxu0 0
        %1889 = vmatpush1.bf16.xpose.msra.mxu0 0
        %1890 = vmatprep.subr.bf16.mxu0 0
        %1891 = vmatpush1.bf16.xpose.msra.mxu0 0
        %1892 = vmatprep.mubr.bf16.mxu0 0
        %1893 = vmatmul.mubr.bf16.gmra.mrb[0].mxu0 %v1837
        %v1894 = vpop.f32.mrb[0].mxu0
        %v1895 = vadd.f32 0.0, %v1894
        %v1896 = vpop.f32.mrb[0].mxu0
        %v1897 = vpop.f32.mrb[0].mxu0
        %v1898 = vadd.f32 0.0, %v1897
        %v1899 = vpop.f32.mrb[0].mxu0
        %1900 = vmatprep.mubr.bf16.mxu0 0
        %1901 = vmatmul.mubr.bf16.gmra.mrb[0].mxu0 %v1840
        %v1902 = vpop.f32.mrb[0].mxu0
        %v1903 = vadd.f32 0.0, %v1902
        %v1904 = vpop.f32.mrb[0].mxu0
        %v1905 = vpop.f32.mrb[0].mxu0
        %v1906 = vadd.f32 0.0, %v1905
        %v1907 = vpop.f32.mrb[0].mxu0
        %1908 = vmatprep.mubr.bf16.mxu0 0
        %1909 = vmatmul.mubr.bf16.gmra.mrb[0].mxu0 %v1843
        %v1910 = vpop.f32.mrb[0].mxu0
        %v1911 = vadd.f32 0.0, %v1910
        %v1912 = vpop.f32.mrb[0].mxu0
        %v1913 = vpop.f32.mrb[0].mxu0
        %v1914 = vadd.f32 0.0, %v1913
        %v1915 = vpop.f32.mrb[0].mxu0
        %1916 = vmatprep.mubr.bf16.mxu0 0
        %1917 = vmatmul.mubr.bf16.gmra.mrb[0].mxu0 %v1846
        %v1918 = vpop.f32.mrb[0].mxu0
        %v1919 = vadd.f32 0.0, %v1918
        %v1920 = vpop.f32.mrb[0].mxu0
        %v1921 = vpop.f32.mrb[0].mxu0
        %v1922 = vadd.f32 0.0, %v1921
        %v1923 = vpop.f32.mrb[0].mxu0
        %1924 = vdwg.mxu0
        %v1925 = vsel %vm1344, %v1782, -inf
        %1926 = vmax.xlane.f32.xlu0 %v1925
        %v1927 = vpop.xlane.xlu0 %1926
        %v1928 = vsel %vm1344, %v1785, -inf
        %1929 = vmax.xlane.f32.xlu0 %v1928
        %v1930 = vpop.xlane.xlu0 %1929
        %v1931 = vsel %vm1344, %v1790, -inf
        %1932 = vmax.xlane.f32.xlu0 %v1931
        %v1933 = vpop.xlane.xlu0 %1932
        %v1934 = vsel %vm1344, %v1793, -inf
        %1935 = vmax.xlane.f32.xlu0 %v1934
        %v1936 = vpop.xlane.xlu0 %1935
        %v1937 = vsel %vm1344, %v1798, -inf
        %1938 = vmax.xlane.f32.xlu0 %v1937
        %v1939 = vpop.xlane.xlu0 %1938
        %v1940 = vsel %vm1344, %v1801, -inf
        %1941 = vmax.xlane.f32.xlu0 %v1940
        %v1942 = vpop.xlane.xlu0 %1941
        %v1943 = vsel %vm1344, %v1806, -inf
        %1944 = vmax.xlane.f32.xlu0 %v1943
        %v1945 = vpop.xlane.xlu0 %1944
        %v1946 = vsel %vm1344, %v1809, -inf
        %1947 = vmax.xlane.f32.xlu0 %v1946
        %v1948 = vpop.xlane.xlu0 %1947
        %v1949 = vsel %vm1344, %v1895, -inf
        %1950 = vmax.xlane.f32.xlu0 %v1949
        %v1951 = vpop.xlane.xlu0 %1950
        %v1952 = vsel %vm1344, %v1898, -inf
        %1953 = vmax.xlane.f32.xlu0 %v1952
        %v1954 = vpop.xlane.xlu0 %1953
        %v1955 = vsel %vm1344, %v1903, -inf
        %1956 = vmax.xlane.f32.xlu0 %v1955
        %v1957 = vpop.xlane.xlu0 %1956
        %v1958 = vsel %vm1344, %v1906, -inf
        %1959 = vmax.xlane.f32.xlu0 %v1958
        %v1960 = vpop.xlane.xlu0 %1959
        %v1961 = vsel %vm1344, %v1911, -inf
        %1962 = vmax.xlane.f32.xlu0 %v1961
        %v1963 = vpop.xlane.xlu0 %1962
        %v1964 = vsel %vm1344, %v1914, -inf
        %1965 = vmax.xlane.f32.xlu0 %v1964
        %v1966 = vpop.xlane.xlu0 %1965
        %v1967 = vsel %vm1344, %v1919, -inf
        %1968 = vmax.xlane.f32.xlu0 %v1967
        %v1969 = vpop.xlane.xlu0 %1968
        %v1970 = vsel %vm1344, %v1922, -inf
        %1971 = vmax.xlane.f32.xlu0 %v1970
        %v1972 = vpop.xlane.xlu0 %1971
        %v1973 = vsub.f32 %v1782, %v1927
        %v1974 = vsub.f32 %v1785, %v1930
        %v1975 = vsub.f32 %v1790, %v1933
        %v1976 = vsub.f32 %v1793, %v1936
        %v1977 = vsub.f32 %v1798, %v1939
        %v1978 = vsub.f32 %v1801, %v1942
        %v1979 = vsub.f32 %v1806, %v1945
        %v1980 = vsub.f32 %v1809, %v1948
        %v1981 = vsub.f32 %v1895, %v1951
        %v1982 = vsub.f32 %v1898, %v1954
        %v1983 = vsub.f32 %v1903, %v1957
        %v1984 = vsub.f32 %v1906, %v1960
        %v1985 = vsub.f32 %v1911, %v1963
        %v1986 = vsub.f32 %v1914, %v1966
        %v1987 = vsub.f32 %v1919, %v1969
        %v1988 = vsub.f32 %v1922, %v1972
        %v1989 = vmul.f32 %v1973, 1.442695
        %v1990 = vpow.pop %v1989
        %v1991 = vmul.f32 %v1974, 1.442695
        %v1992 = vpow.pop %v1991
        %v1993 = vmul.f32 %v1975, 1.442695
        %v1994 = vpow.pop %v1993
        %v1995 = vmul.f32 %v1976, 1.442695
        %v1996 = vpow.pop %v1995
        %v1997 = vmul.f32 %v1977, 1.442695
        %v1998 = vpow.pop %v1997
        %v1999 = vmul.f32 %v1978, 1.442695
        %v2000 = vpow.pop %v1999
        %v2001 = vmul.f32 %v1979, 1.442695
        %v2002 = vpow.pop %v2001
        %v2003 = vmul.f32 %v1980, 1.442695
        %v2004 = vpow.pop %v2003
        %v2005 = vmul.f32 %v1981, 1.442695
        %v2006 = vpow.pop %v2005
        %v2007 = vmul.f32 %v1982, 1.442695
        %v2008 = vpow.pop %v2007
        %v2009 = vmul.f32 %v1983, 1.442695
        %v2010 = vpow.pop %v2009
        %v2011 = vmul.f32 %v1984, 1.442695
        %v2012 = vpow.pop %v2011
        %v2013 = vmul.f32 %v1985, 1.442695
        %v2014 = vpow.pop %v2013
        %v2015 = vmul.f32 %v1986, 1.442695
        %v2016 = vpow.pop %v2015
        %v2017 = vmul.f32 %v1987, 1.442695
        %v2018 = vpow.pop %v2017
        %v2019 = vmul.f32 %v1988, 1.442695
        %v2020 = vpow.pop %v2019
        %v2021 = vsel %vm1344, %v1990, 0.0
        %2022 = vadd.xlane.f32.xlu0 %v2021
        %v2023 = vpop.xlane.xlu0 %2022
        %v2024 = vsel %vm1344, %v1992, 0.0
        %2025 = vadd.xlane.f32.xlu0 %v2024
        %v2026 = vpop.xlane.xlu0 %2025
        %v2027 = vsel %vm1344, %v1994, 0.0
        %2028 = vadd.xlane.f32.xlu0 %v2027
        %v2029 = vpop.xlane.xlu0 %2028
        %v2030 = vsel %vm1344, %v1996, 0.0
        %2031 = vadd.xlane.f32.xlu0 %v2030
        %v2032 = vpop.xlane.xlu0 %2031
        %v2033 = vsel %vm1344, %v1998, 0.0
        %2034 = vadd.xlane.f32.xlu0 %v2033
        %v2035 = vpop.xlane.xlu0 %2034
        %v2036 = vsel %vm1344, %v2000, 0.0
        %2037 = vadd.xlane.f32.xlu0 %v2036
        %v2038 = vpop.xlane.xlu0 %2037
        %v2039 = vsel %vm1344, %v2002, 0.0
        %2040 = vadd.xlane.f32.xlu0 %v2039
        %v2041 = vpop.xlane.xlu0 %2040
        %v2042 = vsel %vm1344, %v2004, 0.0
        %2043 = vadd.xlane.f32.xlu0 %v2042
        %v2044 = vpop.xlane.xlu0 %2043
        %v2045 = vsel %vm1344, %v2006, 0.0
        %2046 = vadd.xlane.f32.xlu0 %v2045
        %v2047 = vpop.xlane.xlu0 %2046
        %v2048 = vsel %vm1344, %v2008, 0.0
        %2049 = vadd.xlane.f32.xlu0 %v2048
        %v2050 = vpop.xlane.xlu0 %2049
        %v2051 = vsel %vm1344, %v2010, 0.0
        %2052 = vadd.xlane.f32.xlu0 %v2051
        %v2053 = vpop.xlane.xlu0 %2052
        %v2054 = vsel %vm1344, %v2012, 0.0
        %2055 = vadd.xlane.f32.xlu0 %v2054
        %v2056 = vpop.xlane.xlu0 %2055
        %v2057 = vsel %vm1344, %v2014, 0.0
        %2058 = vadd.xlane.f32.xlu0 %v2057
        %v2059 = vpop.xlane.xlu0 %2058
        %v2060 = vsel %vm1344, %v2016, 0.0
        %2061 = vadd.xlane.f32.xlu0 %v2060
        %v2062 = vpop.xlane.xlu0 %2061
        %v2063 = vsel %vm1344, %v2018, 0.0
        %2064 = vadd.xlane.f32.xlu0 %v2063
        %v2065 = vpop.xlane.xlu0 %2064
        %v2066 = vsel %vm1344, %v2020, 0.0
        %2067 = vadd.xlane.f32.xlu0 %v2066
        %v2068 = vpop.xlane.xlu0 %2067
        %v2069 = vrcp.pop %v2023
        %v2070 = vrcp.pop %v2026
        %v2071 = vrcp.pop %v2029
        %v2072 = vrcp.pop %v2032
        %v2073 = vrcp.pop %v2035
        %v2074 = vrcp.pop %v2038
        %v2075 = vrcp.pop %v2041
        %v2076 = vrcp.pop %v2044
        %v2077 = vrcp.pop %v2047
        %v2078 = vrcp.pop %v2050
        %v2079 = vrcp.pop %v2053
        %v2080 = vrcp.pop %v2056
        %v2081 = vrcp.pop %v2059
        %v2082 = vrcp.pop %v2062
        %v2083 = vrcp.pop %v2065
        %v2084 = vrcp.pop %v2068
        %v2085 = vmul.f32 %v1990, %v2069
        %v2086 = vmul.f32 %v1992, %v2070
        %v2087 = vmul.f32 %v1994, %v2071
        %v2088 = vmul.f32 %v1996, %v2072
        %v2089 = vmul.f32 %v1998, %v2073
        %v2090 = vmul.f32 %v2000, %v2074
        %v2091 = vmul.f32 %v2002, %v2075
        %v2092 = vmul.f32 %v2004, %v2076
        %v2093 = vmul.f32 %v2006, %v2077
        %v2094 = vmul.f32 %v2008, %v2078
        %v2095 = vmul.f32 %v2010, %v2079
        %v2096 = vmul.f32 %v2012, %v2080
        %v2097 = vmul.f32 %v2014, %v2081
        %v2098 = vmul.f32 %v2016, %v2082
        %v2099 = vmul.f32 %v2018, %v2083
        %v2100 = vmul.f32 %v2020, %v2084
        %v2101 = vpack.c.bf16 %v2086, %v2085
        %v2102 = vpack.c.bf16 %v2088, %v2087
        %v2103 = vpack.c.bf16 %v2090, %v2089
        %v2104 = vpack.c.bf16 %v2092, %v2091
        %v2105 = vpack.c.bf16 %v2094, %v2093
        %v2106 = vpack.c.bf16 %v2096, %v2095
        %v2107 = vpack.c.bf16 %v2098, %v2097
        %v2108 = vpack.c.bf16 %v2100, %v2099
        %2113 = vrot.lane.b32.xlu0 %v1157, 96
        %v2114 = vpop.permute.xlu0 %2113
        %2115 = vrot.lane.b32.xlu0 %v1158, 96
        %v2116 = vpop.permute.xlu0 %2115
        %2117 = vrot.lane.b32.xlu0 %v1159, 96
        %v2118 = vpop.permute.xlu0 %2117
        %2119 = vrot.lane.b32.xlu0 %v1160, 96
        %v2120 = vpop.permute.xlu0 %2119
        %v2126 = vsel %vm1344, %v2101, 0
        %v2129 = vsel %vm1344, %v2102, 0
        %v2132 = vsel %vm1344, %v2103, 0
        %v2135 = vsel %vm1344, %v2104, 0
        %2137 = vmatprep.subr.bf16.mxu0 0
        %2138 = vmatpush1.bf16.msra.mxu0 %v2114
        %2139 = vmatprep.subr.bf16.mxu0 0
        %2140 = vmatpush1.bf16.msra.mxu0 %v2116
        %2141 = vmatprep.subr.bf16.mxu0 0
        %2142 = vmatpush1.bf16.msra.mxu0 %v2118
        %2143 = vmatprep.subr.bf16.mxu0 0
        %2144 = vmatpush1.bf16.msra.mxu0 %v2120
        %2145 = vmatprep.subr.bf16.mxu0 0
        %2146 = vmatpush1.bf16.msra.mxu0 0
        %2147 = vmatprep.subr.bf16.mxu0 0
        %2148 = vmatpush1.bf16.msra.mxu0 0
        %2149 = vmatprep.subr.bf16.mxu0 0
        %2150 = vmatpush1.bf16.msra.mxu0 0
        %2151 = vmatprep.subr.bf16.mxu0 0
        %2152 = vmatpush1.bf16.msra.mxu0 0
        %2153 = vmatprep.subr.bf16.mxu0 0
        %2154 = vmatpush1.bf16.msra.mxu0 0
        %2155 = vmatprep.subr.bf16.mxu0 0
        %2156 = vmatpush1.bf16.msra.mxu0 0
        %2157 = vmatprep.subr.bf16.mxu0 0
        %2158 = vmatpush1.bf16.msra.mxu0 0
        %2159 = vmatprep.subr.bf16.mxu0 0
        %2160 = vmatpush1.bf16.msra.mxu0 0
        %2161 = vmatprep.subr.bf16.mxu0 0
        %2162 = vmatpush1.bf16.msra.mxu0 0
        %2163 = vmatprep.subr.bf16.mxu0 0
        %2164 = vmatpush1.bf16.msra.mxu0 0
        %2165 = vmatprep.subr.bf16.mxu0 0
        %2166 = vmatpush1.bf16.msra.mxu0 0
        %2167 = vmatprep.subr.bf16.mxu0 0
        %2168 = vmatpush1.bf16.msra.mxu0 0
        %2169 = vmatprep.mubr.bf16.mxu0 0
        %2170 = vmatmul.mubr.bf16.gmra.mrb[0].mxu0 %v2126
        %v2171 = vpop.f32.mrb[0].mxu0
        %v2172 = vadd.f32 0.0, %v2171
        %v2173 = vpop.f32.mrb[0].mxu0
        %v2174 = vpop.f32.mrb[0].mxu0
        %v2175 = vadd.f32 0.0, %v2174
        %v2176 = vpop.f32.mrb[0].mxu0
        %2177 = vmatprep.mubr.bf16.mxu0 0
        %2178 = vmatmul.mubr.bf16.gmra.mrb[0].mxu0 %v2129
        %v2179 = vpop.f32.mrb[0].mxu0
        %v2180 = vadd.f32 0.0, %v2179
        %v2181 = vpop.f32.mrb[0].mxu0
        %v2182 = vpop.f32.mrb[0].mxu0
        %v2183 = vadd.f32 0.0, %v2182
        %v2184 = vpop.f32.mrb[0].mxu0
        %2185 = vmatprep.mubr.bf16.mxu0 0
        %2186 = vmatmul.mubr.bf16.gmra.mrb[0].mxu0 %v2132
        %v2187 = vpop.f32.mrb[0].mxu0
        %v2188 = vadd.f32 0.0, %v2187
        %v2189 = vpop.f32.mrb[0].mxu0
        %v2190 = vpop.f32.mrb[0].mxu0
        %v2191 = vadd.f32 0.0, %v2190
        %v2192 = vpop.f32.mrb[0].mxu0
        %2193 = vmatprep.mubr.bf16.mxu0 0
        %2194 = vmatmul.mubr.bf16.gmra.mrb[0].mxu0 %v2135
        %v2195 = vpop.f32.mrb[0].mxu0
        %v2196 = vadd.f32 0.0, %v2195
        %v2197 = vpop.f32.mrb[0].mxu0
        %v2198 = vpop.f32.mrb[0].mxu0
        %v2199 = vadd.f32 0.0, %v2198
        %v2200 = vpop.f32.mrb[0].mxu0
        %2201 = vdwg.mxu0
        %2206 = vrot.lane.b32.xlu0 %v1161, 96
        %v2207 = vpop.permute.xlu0 %2206
        %2208 = vrot.lane.b32.xlu0 %v1162, 96
        %v2209 = vpop.permute.xlu0 %2208
        %2210 = vrot.lane.b32.xlu0 %v1163, 96
        %v2211 = vpop.permute.xlu0 %2210
        %2212 = vrot.lane.b32.xlu0 %v1164, 96
        %v2213 = vpop.permute.xlu0 %2212
        %v2219 = vsel %vm1344, %v2105, 0
        %v2222 = vsel %vm1344, %v2106, 0
        %v2225 = vsel %vm1344, %v2107, 0
        %v2228 = vsel %vm1344, %v2108, 0
        %2230 = vmatprep.subr.bf16.mxu0 0
        %2231 = vmatpush1.bf16.msra.mxu0 %v2207
        %2232 = vmatprep.subr.bf16.mxu0 0
        %2233 = vmatpush1.bf16.msra.mxu0 %v2209
        %2234 = vmatprep.subr.bf16.mxu0 0
        %2235 = vmatpush1.bf16.msra.mxu0 %v2211
        %2236 = vmatprep.subr.bf16.mxu0 0
        %2237 = vmatpush1.bf16.msra.mxu0 %v2213
        %2238 = vmatprep.subr.bf16.mxu0 0
        %2239 = vmatpush1.bf16.msra.mxu0 0
        %2240 = vmatprep.subr.bf16.mxu0 0
        %2241 = vmatpush1.bf16.msra.mxu0 0
        %2242 = vmatprep.subr.bf16.mxu0 0
        %2243 = vmatpush1.bf16.msra.mxu0 0
        %2244 = vmatprep.subr.bf16.mxu0 0
        %2245 = vmatpush1.bf16.msra.mxu0 0
        %2246 = vmatprep.subr.bf16.mxu0 0
        %2247 = vmatpush1.bf16.msra.mxu0 0
        %2248 = vmatprep.subr.bf16.mxu0 0
        %2249 = vmatpush1.bf16.msra.mxu0 0
        %2250 = vmatprep.subr.bf16.mxu0 0
        %2251 = vmatpush1.bf16.msra.mxu0 0
        %2252 = vmatprep.subr.bf16.mxu0 0
        %2253 = vmatpush1.bf16.msra.mxu0 0
        %2254 = vmatprep.subr.bf16.mxu0 0
        %2255 = vmatpush1.bf16.msra.mxu0 0
        %2256 = vmatprep.subr.bf16.mxu0 0
        %2257 = vmatpush1.bf16.msra.mxu0 0
        %2258 = vmatprep.subr.bf16.mxu0 0
        %2259 = vmatpush1.bf16.msra.mxu0 0
        %2260 = vmatprep.subr.bf16.mxu0 0
        %2261 = vmatpush1.bf16.msra.mxu0 0
        %2262 = vmatprep.mubr.bf16.mxu0 0
        %2263 = vmatmul.mubr.bf16.gmra.mrb[0].mxu0 %v2219
        %v2264 = vpop.f32.mrb[0].mxu0
        %v2265 = vadd.f32 0.0, %v2264
        %v2266 = vpop.f32.mrb[0].mxu0
        %v2267 = vpop.f32.mrb[0].mxu0
        %v2268 = vadd.f32 0.0, %v2267
        %v2269 = vpop.f32.mrb[0].mxu0
        %2270 = vmatprep.mubr.bf16.mxu0 0
        %2271 = vmatmul.mubr.bf16.gmra.mrb[0].mxu0 %v2222
        %v2272 = vpop.f32.mrb[0].mxu0
        %v2273 = vadd.f32 0.0, %v2272
        %v2274 = vpop.f32.mrb[0].mxu0
        %v2275 = vpop.f32.mrb[0].mxu0
        %v2276 = vadd.f32 0.0, %v2275
        %v2277 = vpop.f32.mrb[0].mxu0
        %2278 = vmatprep.mubr.bf16.mxu0 0
        %2279 = vmatmul.mubr.bf16.gmra.mrb[0].mxu0 %v2225
        %v2280 = vpop.f32.mrb[0].mxu0
        %v2281 = vadd.f32 0.0, %v2280
        %v2282 = vpop.f32.mrb[0].mxu0
        %v2283 = vpop.f32.mrb[0].mxu0
        %v2284 = vadd.f32 0.0, %v2283
        %v2285 = vpop.f32.mrb[0].mxu0
        %2286 = vmatprep.mubr.bf16.mxu0 0
        %2287 = vmatmul.mubr.bf16.gmra.mrb[0].mxu0 %v2228
        %v2288 = vpop.f32.mrb[0].mxu0
        %v2289 = vadd.f32 0.0, %v2288
        %v2290 = vpop.f32.mrb[0].mxu0
        %v2291 = vpop.f32.mrb[0].mxu0
        %v2292 = vadd.f32 0.0, %v2291
        %v2293 = vpop.f32.mrb[0].mxu0
        %2294 = vdwg.mxu0
        %v2295 = vpack.c.bf16 %v2175, %v2172
        %v2296 = vpack.c.bf16 %v2183, %v2180
        %v2297 = vpack.c.bf16 %v2191, %v2188
        %v2298 = vpack.c.bf16 %v2199, %v2196
        %v2299 = vpack.c.bf16 %v2268, %v2265
        %v2300 = vpack.c.bf16 %v2276, %v2273
        %v2301 = vpack.c.bf16 %v2284, %v2281
        %v2302 = vpack.c.bf16 %v2292, %v2289
        %2311 = vrot.lane.b32.xlu0 %v2295, 32
        %v2312 = vpop.permute.xlu0 %2311
        %2313 = vrot.lane.b32.xlu0 %v2296, 32
        %v2314 = vpop.permute.xlu0 %2313
        %2315 = vrot.lane.b32.xlu0 %v2297, 32
        %v2316 = vpop.permute.xlu0 %2315
        %2317 = vrot.lane.b32.xlu0 %v2298, 32
        %v2318 = vpop.permute.xlu0 %2317
        %2319 = vrot.lane.b32.xlu0 %v2299, 32
        %v2320 = vpop.permute.xlu0 %2319
        %2321 = vrot.lane.b32.xlu0 %v2300, 32
        %v2322 = vpop.permute.xlu0 %2321
        %2323 = vrot.lane.b32.xlu0 %v2301, 32
        %v2324 = vpop.permute.xlu0 %2323
        %2325 = vrot.lane.b32.xlu0 %v2302, 32
        %v2326 = vpop.permute.xlu0 %2325
        %vm2335 = vcmask 523520
        %2336 = vst.msk [vmem:[#allocation2] sm:$0xff] %vm2335, %v2312
        %2337 = vst.msk [vmem:[#allocation2 + $0x8] sm:$0xff] %vm2335, %v2314
        %2338 = vst.msk [vmem:[#allocation2 + $0x10] sm:$0xff] %vm2335, %v2316
        %2339 = vst.msk [vmem:[#allocation2 + $0x18] sm:$0xff] %vm2335, %v2318
        %2340 = vst.msk [vmem:[#allocation2 + $0x20] sm:$0xff] %vm2335, %v2320
        %2341 = vst.msk [vmem:[#allocation2 + $0x28] sm:$0xff] %vm2335, %v2322
        %2342 = vst.msk [vmem:[#allocation2 + $0x30] sm:$0xff] %vm2335, %v2324
        %2343 = vst.msk [vmem:[#allocation2 + $0x38] sm:$0xff] %vm2335, %v2326
        %2344 = vrot.lane.b32.xlu0 %v1141, 64
        %v2345 = vpop.permute.xlu0 %2344
        %2346 = vrot.lane.b32.xlu0 %v1142, 64
        %v2347 = vpop.permute.xlu0 %2346
        %2348 = vrot.lane.b32.xlu0 %v1143, 64
        %v2349 = vpop.permute.xlu0 %2348
        %2350 = vrot.lane.b32.xlu0 %v1144, 64
        %v2351 = vpop.permute.xlu0 %2350
        %2352 = vrot.lane.b32.xlu0 %v1149, 64
        %v2353 = vpop.permute.xlu0 %2352
        %2354 = vrot.lane.b32.xlu0 %v1150, 64
        %v2355 = vpop.permute.xlu0 %2354
        %2356 = vrot.lane.b32.xlu0 %v1151, 64
        %v2357 = vpop.permute.xlu0 %2356
        %2358 = vrot.lane.b32.xlu0 %v1152, 64
        %v2359 = vpop.permute.xlu0 %2358
        %v2361 = vsel %vm1165, %v2345, 0
        %v2364 = vsel %vm1165, %v2347, 0
        %v2367 = vsel %vm1165, %v2349, 0
        %v2370 = vsel %vm1165, %v2351, 0
        %v2373 = vsel %vm1165, %v2353, 0
        %v2376 = vsel %vm1165, %v2355, 0
        %v2379 = vsel %vm1165, %v2357, 0
        %v2382 = vsel %vm1165, %v2359, 0
        %2384 = vmatprep.subr.bf16.mxu0 0
        %2385 = vmatpush1.bf16.xpose.msra.mxu0 %v2373
        %2386 = vmatprep.subr.bf16.mxu0 0
        %2387 = vmatpush1.bf16.xpose.msra.mxu0 %v2376
        %2388 = vmatprep.subr.bf16.mxu0 0
        %2389 = vmatpush1.bf16.xpose.msra.mxu0 %v2379
        %2390 = vmatprep.subr.bf16.mxu0 0
        %2391 = vmatpush1.bf16.xpose.msra.mxu0 %v2382
        %2392 = vmatprep.subr.bf16.mxu0 0
        %2393 = vmatpush1.bf16.xpose.msra.mxu0 0
        %2394 = vmatprep.subr.bf16.mxu0 0
        %2395 = vmatpush1.bf16.xpose.msra.mxu0 0
        %2396 = vmatprep.subr.bf16.mxu0 0
        %2397 = vmatpush1.bf16.xpose.msra.mxu0 0
        %2398 = vmatprep.subr.bf16.mxu0 0
        %2399 = vmatpush1.bf16.xpose.msra.mxu0 0
        %2400 = vmatprep.subr.bf16.mxu0 0
        %2401 = vmatpush1.bf16.xpose.msra.mxu0 0
        %2402 = vmatprep.subr.bf16.mxu0 0
        %2403 = vmatpush1.bf16.xpose.msra.mxu0 0
        %2404 = vmatprep.subr.bf16.mxu0 0
        %2405 = vmatpush1.bf16.xpose.msra.mxu0 0
        %2406 = vmatprep.subr.bf16.mxu0 0
        %2407 = vmatpush1.bf16.xpose.msra.mxu0 0
        %2408 = vmatprep.subr.bf16.mxu0 0
        %2409 = vmatpush1.bf16.xpose.msra.mxu0 0
        %2410 = vmatprep.subr.bf16.mxu0 0
        %2411 = vmatpush1.bf16.xpose.msra.mxu0 0
        %2412 = vmatprep.subr.bf16.mxu0 0
        %2413 = vmatpush1.bf16.xpose.msra.mxu0 0
        %2414 = vmatprep.subr.bf16.mxu0 0
        %2415 = vmatpush1.bf16.xpose.msra.mxu0 0
        %2416 = vmatprep.mubr.bf16.mxu0 0
        %2417 = vmatmul.mubr.bf16.gmra.mrb[0].mxu0 %v2361
        %v2418 = vpop.f32.mrb[0].mxu0
        %v2419 = vadd.f32 0.0, %v2418
        %v2420 = vpop.f32.mrb[0].mxu0
        %v2421 = vpop.f32.mrb[0].mxu0
        %v2422 = vadd.f32 0.0, %v2421
        %v2423 = vpop.f32.mrb[0].mxu0
        %2424 = vmatprep.mubr.bf16.mxu0 0
        %2425 = vmatmul.mubr.bf16.gmra.mrb[0].mxu0 %v2364
        %v2426 = vpop.f32.mrb[0].mxu0
        %v2427 = vadd.f32 0.0, %v2426
        %v2428 = vpop.f32.mrb[0].mxu0
        %v2429 = vpop.f32.mrb[0].mxu0
        %v2430 = vadd.f32 0.0, %v2429
        %v2431 = vpop.f32.mrb[0].mxu0
        %2432 = vmatprep.mubr.bf16.mxu0 0
        %2433 = vmatmul.mubr.bf16.gmra.mrb[0].mxu0 %v2367
        %v2434 = vpop.f32.mrb[0].mxu0
        %v2435 = vadd.f32 0.0, %v2434
        %v2436 = vpop.f32.mrb[0].mxu0
        %v2437 = vpop.f32.mrb[0].mxu0
        %v2438 = vadd.f32 0.0, %v2437
        %v2439 = vpop.f32.mrb[0].mxu0
        %2440 = vmatprep.mubr.bf16.mxu0 0
        %2441 = vmatmul.mubr.bf16.gmra.mrb[0].mxu0 %v2370
        %v2442 = vpop.f32.mrb[0].mxu0
        %v2443 = vadd.f32 0.0, %v2442
        %v2444 = vpop.f32.mrb[0].mxu0
        %v2445 = vpop.f32.mrb[0].mxu0
        %v2446 = vadd.f32 0.0, %v2445
        %v2447 = vpop.f32.mrb[0].mxu0
        %2448 = vdwg.mxu0
        %2449 = vrot.lane.b32.xlu0 %v1145, 64
        %v2450 = vpop.permute.xlu0 %2449
        %2451 = vrot.lane.b32.xlu0 %v1146, 64
        %v2452 = vpop.permute.xlu0 %2451
        %2453 = vrot.lane.b32.xlu0 %v1147, 64
        %v2454 = vpop.permute.xlu0 %2453
        %2455 = vrot.lane.b32.xlu0 %v1148, 64
        %v2456 = vpop.permute.xlu0 %2455
        %2457 = vrot.lane.b32.xlu0 %v1153, 64
        %v2458 = vpop.permute.xlu0 %2457
        %2459 = vrot.lane.b32.xlu0 %v1154, 64
        %v2460 = vpop.permute.xlu0 %2459
        %2461 = vrot.lane.b32.xlu0 %v1155, 64
        %v2462 = vpop.permute.xlu0 %2461
        %2463 = vrot.lane.b32.xlu0 %v1156, 64
        %v2464 = vpop.permute.xlu0 %2463
        %v2466 = vsel %vm1165, %v2450, 0
        %v2469 = vsel %vm1165, %v2452, 0
        %v2472 = vsel %vm1165, %v2454, 0
        %v2475 = vsel %vm1165, %v2456, 0
        %v2478 = vsel %vm1165, %v2458, 0
        %v2481 = vsel %vm1165, %v2460, 0
        %v2484 = vsel %vm1165, %v2462, 0
        %v2487 = vsel %vm1165, %v2464, 0
        %2489 = vmatprep.subr.bf16.mxu0 0
        %2490 = vmatpush1.bf16.xpose.msra.mxu0 %v2478
        %2491 = vmatprep.subr.bf16.mxu0 0
        %2492 = vmatpush1.bf16.xpose.msra.mxu0 %v2481
        %2493 = vmatprep.subr.bf16.mxu0 0
        %2494 = vmatpush1.bf16.xpose.msra.mxu0 %v2484
        %2495 = vmatprep.subr.bf16.mxu0 0
        %2496 = vmatpush1.bf16.xpose.msra.mxu0 %v2487
        %2497 = vmatprep.subr.bf16.mxu0 0
        %2498 = vmatpush1.bf16.xpose.msra.mxu0 0
        %2499 = vmatprep.subr.bf16.mxu0 0
        %2500 = vmatpush1.bf16.xpose.msra.mxu0 0
        %2501 = vmatprep.subr.bf16.mxu0 0
        %2502 = vmatpush1.bf16.xpose.msra.mxu0 0
        %2503 = vmatprep.subr.bf16.mxu0 0
        %2504 = vmatpush1.bf16.xpose.msra.mxu0 0
        %2505 = vmatprep.subr.bf16.mxu0 0
        %2506 = vmatpush1.bf16.xpose.msra.mxu0 0
        %2507 = vmatprep.subr.bf16.mxu0 0
        %2508 = vmatpush1.bf16.xpose.msra.mxu0 0
        %2509 = vmatprep.subr.bf16.mxu0 0
        %2510 = vmatpush1.bf16.xpose.msra.mxu0 0
        %2511 = vmatprep.subr.bf16.mxu0 0
        %2512 = vmatpush1.bf16.xpose.msra.mxu0 0
        %2513 = vmatprep.subr.bf16.mxu0 0
        %2514 = vmatpush1.bf16.xpose.msra.mxu0 0
        %2515 = vmatprep.subr.bf16.mxu0 0
        %2516 = vmatpush1.bf16.xpose.msra.mxu0 0
        %2517 = vmatprep.subr.bf16.mxu0 0
        %2518 = vmatpush1.bf16.xpose.msra.mxu0 0
        %2519 = vmatprep.subr.bf16.mxu0 0
        %2520 = vmatpush1.bf16.xpose.msra.mxu0 0
        %2521 = vmatprep.mubr.bf16.mxu0 0
        %2522 = vmatmul.mubr.bf16.gmra.mrb[0].mxu0 %v2466
        %v2523 = vpop.f32.mrb[0].mxu0
        %v2524 = vadd.f32 0.0, %v2523
        %v2525 = vpop.f32.mrb[0].mxu0
        %v2526 = vpop.f32.mrb[0].mxu0
        %v2527 = vadd.f32 0.0, %v2526
        %v2528 = vpop.f32.mrb[0].mxu0
        %2529 = vmatprep.mubr.bf16.mxu0 0
        %2530 = vmatmul.mubr.bf16.gmra.mrb[0].mxu0 %v2469
        %v2531 = vpop.f32.mrb[0].mxu0
        %v2532 = vadd.f32 0.0, %v2531
        %v2533 = vpop.f32.mrb[0].mxu0
        %v2534 = vpop.f32.mrb[0].mxu0
        %v2535 = vadd.f32 0.0, %v2534
        %v2536 = vpop.f32.mrb[0].mxu0
        %2537 = vmatprep.mubr.bf16.mxu0 0
        %2538 = vmatmul.mubr.bf16.gmra.mrb[0].mxu0 %v2472
        %v2539 = vpop.f32.mrb[0].mxu0
        %v2540 = vadd.f32 0.0, %v2539
        %v2541 = vpop.f32.mrb[0].mxu0
        %v2542 = vpop.f32.mrb[0].mxu0
        %v2543 = vadd.f32 0.0, %v2542
        %v2544 = vpop.f32.mrb[0].mxu0
        %2545 = vmatprep.mubr.bf16.mxu0 0
        %2546 = vmatmul.mubr.bf16.gmra.mrb[0].mxu0 %v2475
        %v2547 = vpop.f32.mrb[0].mxu0
        %v2548 = vadd.f32 0.0, %v2547
        %v2549 = vpop.f32.mrb[0].mxu0
        %v2550 = vpop.f32.mrb[0].mxu0
        %v2551 = vadd.f32 0.0, %v2550
        %v2552 = vpop.f32.mrb[0].mxu0
        %2553 = vdwg.mxu0
        %v2554 = vsel %vm1344, %v2419, -inf
        %2555 = vmax.xlane.f32.xlu0 %v2554
        %v2556 = vpop.xlane.xlu0 %2555
        %v2557 = vsel %vm1344, %v2422, -inf
        %2558 = vmax.xlane.f32.xlu0 %v2557
        %v2559 = vpop.xlane.xlu0 %2558
        %v2560 = vsel %vm1344, %v2427, -inf
        %2561 = vmax.xlane.f32.xlu0 %v2560
        %v2562 = vpop.xlane.xlu0 %2561
        %v2563 = vsel %vm1344, %v2430, -inf
        %2564 = vmax.xlane.f32.xlu0 %v2563
        %v2565 = vpop.xlane.xlu0 %2564
        %v2566 = vsel %vm1344, %v2435, -inf
        %2567 = vmax.xlane.f32.xlu0 %v2566
        %v2568 = vpop.xlane.xlu0 %2567
        %v2569 = vsel %vm1344, %v2438, -inf
        %2570 = vmax.xlane.f32.xlu0 %v2569
        %v2571 = vpop.xlane.xlu0 %2570
        %v2572 = vsel %vm1344, %v2443, -inf
        %2573 = vmax.xlane.f32.xlu0 %v2572
        %v2574 = vpop.xlane.xlu0 %2573
        %v2575 = vsel %vm1344, %v2446, -inf
        %2576 = vmax.xlane.f32.xlu0 %v2575
        %v2577 = vpop.xlane.xlu0 %2576
        %v2578 = vsel %vm1344, %v2524, -inf
        %2579 = vmax.xlane.f32.xlu0 %v2578
        %v2580 = vpop.xlane.xlu0 %2579
        %v2581 = vsel %vm1344, %v2527, -inf
        %2582 = vmax.xlane.f32.xlu0 %v2581
        %v2583 = vpop.xlane.xlu0 %2582
        %v2584 = vsel %vm1344, %v2532, -inf
        %2585 = vmax.xlane.f32.xlu0 %v2584
        %v2586 = vpop.xlane.xlu0 %2585
        %v2587 = vsel %vm1344, %v2535, -inf
        %2588 = vmax.xlane.f32.xlu0 %v2587
        %v2589 = vpop.xlane.xlu0 %2588
        %v2590 = vsel %vm1344, %v2540, -inf
        %2591 = vmax.xlane.f32.xlu0 %v2590
        %v2592 = vpop.xlane.xlu0 %2591
        %v2593 = vsel %vm1344, %v2543, -inf
        %2594 = vmax.xlane.f32.xlu0 %v2593
        %v2595 = vpop.xlane.xlu0 %2594
        %v2596 = vsel %vm1344, %v2548, -inf
        %2597 = vmax.xlane.f32.xlu0 %v2596
        %v2598 = vpop.xlane.xlu0 %2597
        %v2599 = vsel %vm1344, %v2551, -inf
        %2600 = vmax.xlane.f32.xlu0 %v2599
        %v2601 = vpop.xlane.xlu0 %2600
        %v2602 = vsub.f32 %v2419, %v2556
        %v2603 = vsub.f32 %v2422, %v2559
        %v2604 = vsub.f32 %v2427, %v2562
        %v2605 = vsub.f32 %v2430, %v2565
        %v2606 = vsub.f32 %v2435, %v2568
        %v2607 = vsub.f32 %v2438, %v2571
        %v2608 = vsub.f32 %v2443, %v2574
        %v2609 = vsub.f32 %v2446, %v2577
        %v2610 = vsub.f32 %v2524, %v2580
        %v2611 = vsub.f32 %v2527, %v2583
        %v2612 = vsub.f32 %v2532, %v2586
        %v2613 = vsub.f32 %v2535, %v2589
        %v2614 = vsub.f32 %v2540, %v2592
        %v2615 = vsub.f32 %v2543, %v2595
        %v2616 = vsub.f32 %v2548, %v2598
        %v2617 = vsub.f32 %v2551, %v2601
        %v2618 = vmul.f32 %v2602, 1.442695
        %v2619 = vpow.pop %v2618
        %v2620 = vmul.f32 %v2603, 1.442695
        %v2621 = vpow.pop %v2620
        %v2622 = vmul.f32 %v2604, 1.442695
        %v2623 = vpow.pop %v2622
        %v2624 = vmul.f32 %v2605, 1.442695
        %v2625 = vpow.pop %v2624
        %v2626 = vmul.f32 %v2606, 1.442695
        %v2627 = vpow.pop %v2626
        %v2628 = vmul.f32 %v2607, 1.442695
        %v2629 = vpow.pop %v2628
        %v2630 = vmul.f32 %v2608, 1.442695
        %v2631 = vpow.pop %v2630
        %v2632 = vmul.f32 %v2609, 1.442695
        %v2633 = vpow.pop %v2632
        %v2634 = vmul.f32 %v2610, 1.442695
        %v2635 = vpow.pop %v2634
        %v2636 = vmul.f32 %v2611, 1.442695
        %v2637 = vpow.pop %v2636
        %v2638 = vmul.f32 %v2612, 1.442695
        %v2639 = vpow.pop %v2638
        %v2640 = vmul.f32 %v2613, 1.442695
        %v2641 = vpow.pop %v2640
        %v2642 = vmul.f32 %v2614, 1.442695
        %v2643 = vpow.pop %v2642
        %v2644 = vmul.f32 %v2615, 1.442695
        %v2645 = vpow.pop %v2644
        %v2646 = vmul.f32 %v2616, 1.442695
        %v2647 = vpow.pop %v2646
        %v2648 = vmul.f32 %v2617, 1.442695
        %v2649 = vpow.pop %v2648
        %v2650 = vsel %vm1344, %v2619, 0.0
        %2651 = vadd.xlane.f32.xlu0 %v2650
        %v2652 = vpop.xlane.xlu0 %2651
        %v2653 = vsel %vm1344, %v2621, 0.0
        %2654 = vadd.xlane.f32.xlu0 %v2653
        %v2655 = vpop.xlane.xlu0 %2654
        %v2656 = vsel %vm1344, %v2623, 0.0
        %2657 = vadd.xlane.f32.xlu0 %v2656
        %v2658 = vpop.xlane.xlu0 %2657
        %v2659 = vsel %vm1344, %v2625, 0.0
        %2660 = vadd.xlane.f32.xlu0 %v2659
        %v2661 = vpop.xlane.xlu0 %2660
        %v2662 = vsel %vm1344, %v2627, 0.0
        %2663 = vadd.xlane.f32.xlu0 %v2662
        %v2664 = vpop.xlane.xlu0 %2663
        %v2665 = vsel %vm1344, %v2629, 0.0
        %2666 = vadd.xlane.f32.xlu0 %v2665
        %v2667 = vpop.xlane.xlu0 %2666
        %v2668 = vsel %vm1344, %v2631, 0.0
        %2669 = vadd.xlane.f32.xlu0 %v2668
        %v2670 = vpop.xlane.xlu0 %2669
        %v2671 = vsel %vm1344, %v2633, 0.0
        %2672 = vadd.xlane.f32.xlu0 %v2671
        %v2673 = vpop.xlane.xlu0 %2672
        %v2674 = vsel %vm1344, %v2635, 0.0
        %2675 = vadd.xlane.f32.xlu0 %v2674
        %v2676 = vpop.xlane.xlu0 %2675
        %v2677 = vsel %vm1344, %v2637, 0.0
        %2678 = vadd.xlane.f32.xlu0 %v2677
        %v2679 = vpop.xlane.xlu0 %2678
        %v2680 = vsel %vm1344, %v2639, 0.0
        %2681 = vadd.xlane.f32.xlu0 %v2680
        %v2682 = vpop.xlane.xlu0 %2681
        %v2683 = vsel %vm1344, %v2641, 0.0
        %2684 = vadd.xlane.f32.xlu0 %v2683
        %v2685 = vpop.xlane.xlu0 %2684
        %v2686 = vsel %vm1344, %v2643, 0.0
        %2687 = vadd.xlane.f32.xlu0 %v2686
        %v2688 = vpop.xlane.xlu0 %2687
        %v2689 = vsel %vm1344, %v2645, 0.0
        %2690 = vadd.xlane.f32.xlu0 %v2689
        %v2691 = vpop.xlane.xlu0 %2690
        %v2692 = vsel %vm1344, %v2647, 0.0
        %2693 = vadd.xlane.f32.xlu0 %v2692
        %v2694 = vpop.xlane.xlu0 %2693
        %v2695 = vsel %vm1344, %v2649, 0.0
        %2696 = vadd.xlane.f32.xlu0 %v2695
        %v2697 = vpop.xlane.xlu0 %2696
        %v2698 = vrcp.pop %v2652
        %v2699 = vrcp.pop %v2655
        %v2700 = vrcp.pop %v2658
        %v2701 = vrcp.pop %v2661
        %v2702 = vrcp.pop %v2664
        %v2703 = vrcp.pop %v2667
        %v2704 = vrcp.pop %v2670
        %v2705 = vrcp.pop %v2673
        %v2706 = vrcp.pop %v2676
        %v2707 = vrcp.pop %v2679
        %v2708 = vrcp.pop %v2682
        %v2709 = vrcp.pop %v2685
        %v2710 = vrcp.pop %v2688
        %v2711 = vrcp.pop %v2691
        %v2712 = vrcp.pop %v2694
        %v2713 = vrcp.pop %v2697
        %v2714 = vmul.f32 %v2619, %v2698
        %v2715 = vmul.f32 %v2621, %v2699
        %v2716 = vmul.f32 %v2623, %v2700
        %v2717 = vmul.f32 %v2625, %v2701
        %v2718 = vmul.f32 %v2627, %v2702
        %v2719 = vmul.f32 %v2629, %v2703
        %v2720 = vmul.f32 %v2631, %v2704
        %v2721 = vmul.f32 %v2633, %v2705
        %v2722 = vmul.f32 %v2635, %v2706
        %v2723 = vmul.f32 %v2637, %v2707
        %v2724 = vmul.f32 %v2639, %v2708
        %v2725 = vmul.f32 %v2641, %v2709
        %v2726 = vmul.f32 %v2643, %v2710
        %v2727 = vmul.f32 %v2645, %v2711
        %v2728 = vmul.f32 %v2647, %v2712
        %v2729 = vmul.f32 %v2649, %v2713
        %v2730 = vpack.c.bf16 %v2715, %v2714
        %v2731 = vpack.c.bf16 %v2717, %v2716
        %v2732 = vpack.c.bf16 %v2719, %v2718
        %v2733 = vpack.c.bf16 %v2721, %v2720
        %v2734 = vpack.c.bf16 %v2723, %v2722
        %v2735 = vpack.c.bf16 %v2725, %v2724
        %v2736 = vpack.c.bf16 %v2727, %v2726
        %v2737 = vpack.c.bf16 %v2729, %v2728
        %2738 = vrot.lane.b32.xlu0 %v1157, 64
        %v2739 = vpop.permute.xlu0 %2738
        %2740 = vrot.lane.b32.xlu0 %v1158, 64
        %v2741 = vpop.permute.xlu0 %2740
        %2742 = vrot.lane.b32.xlu0 %v1159, 64
        %v2743 = vpop.permute.xlu0 %2742
        %2744 = vrot.lane.b32.xlu0 %v1160, 64
        %v2745 = vpop.permute.xlu0 %2744
        %v2751 = vsel %vm1344, %v2730, 0
        %v2754 = vsel %vm1344, %v2731, 0
        %v2757 = vsel %vm1344, %v2732, 0
        %v2760 = vsel %vm1344, %v2733, 0
        %2762 = vmatprep.subr.bf16.mxu0 0
        %2763 = vmatpush1.bf16.msra.mxu0 %v2739
        %2764 = vmatprep.subr.bf16.mxu0 0
        %2765 = vmatpush1.bf16.msra.mxu0 %v2741
        %2766 = vmatprep.subr.bf16.mxu0 0
        %2767 = vmatpush1.bf16.msra.mxu0 %v2743
        %2768 = vmatprep.subr.bf16.mxu0 0
        %2769 = vmatpush1.bf16.msra.mxu0 %v2745
        %2770 = vmatprep.subr.bf16.mxu0 0
        %2771 = vmatpush1.bf16.msra.mxu0 0
        %2772 = vmatprep.subr.bf16.mxu0 0
        %2773 = vmatpush1.bf16.msra.mxu0 0
        %2774 = vmatprep.subr.bf16.mxu0 0
        %2775 = vmatpush1.bf16.msra.mxu0 0
        %2776 = vmatprep.subr.bf16.mxu0 0
        %2777 = vmatpush1.bf16.msra.mxu0 0
        %2778 = vmatprep.subr.bf16.mxu0 0
        %2779 = vmatpush1.bf16.msra.mxu0 0
        %2780 = vmatprep.subr.bf16.mxu0 0
        %2781 = vmatpush1.bf16.msra.mxu0 0
        %2782 = vmatprep.subr.bf16.mxu0 0
        %2783 = vmatpush1.bf16.msra.mxu0 0
        %2784 = vmatprep.subr.bf16.mxu0 0
        %2785 = vmatpush1.bf16.msra.mxu0 0
        %2786 = vmatprep.subr.bf16.mxu0 0
        %2787 = vmatpush1.bf16.msra.mxu0 0
        %2788 = vmatprep.subr.bf16.mxu0 0
        %2789 = vmatpush1.bf16.msra.mxu0 0
        %2790 = vmatprep.subr.bf16.mxu0 0
        %2791 = vmatpush1.bf16.msra.mxu0 0
        %2792 = vmatprep.subr.bf16.mxu0 0
        %2793 = vmatpush1.bf16.msra.mxu0 0
        %2794 = vmatprep.mubr.bf16.mxu0 0
        %2795 = vmatmul.mubr.bf16.gmra.mrb[0].mxu0 %v2751
        %v2796 = vpop.f32.mrb[0].mxu0
        %v2797 = vadd.f32 0.0, %v2796
        %v2798 = vpop.f32.mrb[0].mxu0
        %v2799 = vpop.f32.mrb[0].mxu0
        %v2800 = vadd.f32 0.0, %v2799
        %v2801 = vpop.f32.mrb[0].mxu0
        %2802 = vmatprep.mubr.bf16.mxu0 0
        %2803 = vmatmul.mubr.bf16.gmra.mrb[0].mxu0 %v2754
        %v2804 = vpop.f32.mrb[0].mxu0
        %v2805 = vadd.f32 0.0, %v2804
        %v2806 = vpop.f32.mrb[0].mxu0
        %v2807 = vpop.f32.mrb[0].mxu0
        %v2808 = vadd.f32 0.0, %v2807
        %v2809 = vpop.f32.mrb[0].mxu0
        %2810 = vmatprep.mubr.bf16.mxu0 0
        %2811 = vmatmul.mubr.bf16.gmra.mrb[0].mxu0 %v2757
        %v2812 = vpop.f32.mrb[0].mxu0
        %v2813 = vadd.f32 0.0, %v2812
        %v2814 = vpop.f32.mrb[0].mxu0
        %v2815 = vpop.f32.mrb[0].mxu0
        %v2816 = vadd.f32 0.0, %v2815
        %v2817 = vpop.f32.mrb[0].mxu0
        %2818 = vmatprep.mubr.bf16.mxu0 0
        %2819 = vmatmul.mubr.bf16.gmra.mrb[0].mxu0 %v2760
        %v2820 = vpop.f32.mrb[0].mxu0
        %v2821 = vadd.f32 0.0, %v2820
        %v2822 = vpop.f32.mrb[0].mxu0
        %v2823 = vpop.f32.mrb[0].mxu0
        %v2824 = vadd.f32 0.0, %v2823
        %v2825 = vpop.f32.mrb[0].mxu0
        %2826 = vdwg.mxu0
        %2827 = vrot.lane.b32.xlu0 %v1161, 64
        %v2828 = vpop.permute.xlu0 %2827
        %2829 = vrot.lane.b32.xlu0 %v1162, 64
        %v2830 = vpop.permute.xlu0 %2829
        %2831 = vrot.lane.b32.xlu0 %v1163, 64
        %v2832 = vpop.permute.xlu0 %2831
        %2833 = vrot.lane.b32.xlu0 %v1164, 64
        %v2834 = vpop.permute.xlu0 %2833
        %v2840 = vsel %vm1344, %v2734, 0
        %v2843 = vsel %vm1344, %v2735, 0
        %v2846 = vsel %vm1344, %v2736, 0
        %v2849 = vsel %vm1344, %v2737, 0
        %2851 = vmatprep.subr.bf16.mxu0 0
        %2852 = vmatpush1.bf16.msra.mxu0 %v2828
        %2853 = vmatprep.subr.bf16.mxu0 0
        %2854 = vmatpush1.bf16.msra.mxu0 %v2830
        %2855 = vmatprep.subr.bf16.mxu0 0
        %2856 = vmatpush1.bf16.msra.mxu0 %v2832
        %2857 = vmatprep.subr.bf16.mxu0 0
        %2858 = vmatpush1.bf16.msra.mxu0 %v2834
        %2859 = vmatprep.subr.bf16.mxu0 0
        %2860 = vmatpush1.bf16.msra.mxu0 0
        %2861 = vmatprep.subr.bf16.mxu0 0
        %2862 = vmatpush1.bf16.msra.mxu0 0
        %2863 = vmatprep.subr.bf16.mxu0 0
        %2864 = vmatpush1.bf16.msra.mxu0 0
        %2865 = vmatprep.subr.bf16.mxu0 0
        %2866 = vmatpush1.bf16.msra.mxu0 0
        %2867 = vmatprep.subr.bf16.mxu0 0
        %2868 = vmatpush1.bf16.msra.mxu0 0
        %2869 = vmatprep.subr.bf16.mxu0 0
        %2870 = vmatpush1.bf16.msra.mxu0 0
        %2871 = vmatprep.subr.bf16.mxu0 0
        %2872 = vmatpush1.bf16.msra.mxu0 0
        %2873 = vmatprep.subr.bf16.mxu0 0
        %2874 = vmatpush1.bf16.msra.mxu0 0
        %2875 = vmatprep.subr.bf16.mxu0 0
        %2876 = vmatpush1.bf16.msra.mxu0 0
        %2877 = vmatprep.subr.bf16.mxu0 0
        %2878 = vmatpush1.bf16.msra.mxu0 0
        %2879 = vmatprep.subr.bf16.mxu0 0
        %2880 = vmatpush1.bf16.msra.mxu0 0
        %2881 = vmatprep.subr.bf16.mxu0 0
        %2882 = vmatpush1.bf16.msra.mxu0 0
        %2883 = vmatprep.mubr.bf16.mxu0 0
        %2884 = vmatmul.mubr.bf16.gmra.mrb[0].mxu0 %v2840
        %v2885 = vpop.f32.mrb[0].mxu0
        %v2886 = vadd.f32 0.0, %v2885
        %v2887 = vpop.f32.mrb[0].mxu0
        %v2888 = vpop.f32.mrb[0].mxu0
        %v2889 = vadd.f32 0.0, %v2888
        %v2890 = vpop.f32.mrb[0].mxu0
        %2891 = vmatprep.mubr.bf16.mxu0 0
        %2892 = vmatmul.mubr.bf16.gmra.mrb[0].mxu0 %v2843
        %v2893 = vpop.f32.mrb[0].mxu0
        %v2894 = vadd.f32 0.0, %v2893
        %v2895 = vpop.f32.mrb[0].mxu0
        %v2896 = vpop.f32.mrb[0].mxu0
        %v2897 = vadd.f32 0.0, %v2896
        %v2898 = vpop.f32.mrb[0].mxu0
        %2899 = vmatprep.mubr.bf16.mxu0 0
        %2900 = vmatmul.mubr.bf16.gmra.mrb[0].mxu0 %v2846
        %v2901 = vpop.f32.mrb[0].mxu0
        %v2902 = vadd.f32 0.0, %v2901
        %v2903 = vpop.f32.mrb[0].mxu0
        %v2904 = vpop.f32.mrb[0].mxu0
        %v2905 = vadd.f32 0.0, %v2904
        %v2906 = vpop.f32.mrb[0].mxu0
        %2907 = vmatprep.mubr.bf16.mxu0 0
        %2908 = vmatmul.mubr.bf16.gmra.mrb[0].mxu0 %v2849
        %v2909 = vpop.f32.mrb[0].mxu0
        %v2910 = vadd.f32 0.0, %v2909
        %v2911 = vpop.f32.mrb[0].mxu0
        %v2912 = vpop.f32.mrb[0].mxu0
        %v2913 = vadd.f32 0.0, %v2912
        %v2914 = vpop.f32.mrb[0].mxu0
        %2915 = vdwg.mxu0
        %v2916 = vpack.c.bf16 %v2800, %v2797
        %v2917 = vpack.c.bf16 %v2808, %v2805
        %v2918 = vpack.c.bf16 %v2816, %v2813
        %v2919 = vpack.c.bf16 %v2824, %v2821
        %v2920 = vpack.c.bf16 %v2889, %v2886
        %v2921 = vpack.c.bf16 %v2897, %v2894
        %v2922 = vpack.c.bf16 %v2905, %v2902
        %v2923 = vpack.c.bf16 %v2913, %v2910
        %2932 = vrot.lane.b32.xlu0 %v2916, 64
        %v2933 = vpop.permute.xlu0 %2932
        %2934 = vrot.lane.b32.xlu0 %v2917, 64
        %v2935 = vpop.permute.xlu0 %2934
        %2936 = vrot.lane.b32.xlu0 %v2918, 64
        %v2937 = vpop.permute.xlu0 %2936
        %2938 = vrot.lane.b32.xlu0 %v2919, 64
        %v2939 = vpop.permute.xlu0 %2938
        %2940 = vrot.lane.b32.xlu0 %v2920, 64
        %v2941 = vpop.permute.xlu0 %2940
        %2942 = vrot.lane.b32.xlu0 %v2921, 64
        %v2943 = vpop.permute.xlu0 %2942
        %2944 = vrot.lane.b32.xlu0 %v2922, 64
        %v2945 = vpop.permute.xlu0 %2944
        %2946 = vrot.lane.b32.xlu0 %v2923, 64
        %v2947 = vpop.permute.xlu0 %2946
        %vm2956 = vcmask 785920
        %2957 = vst.msk [vmem:[#allocation2] sm:$0xff] %vm2956, %v2933
        %2958 = vst.msk [vmem:[#allocation2 + $0x8] sm:$0xff] %vm2956, %v2935
        %2959 = vst.msk [vmem:[#allocation2 + $0x10] sm:$0xff] %vm2956, %v2937
        %2960 = vst.msk [vmem:[#allocation2 + $0x18] sm:$0xff] %vm2956, %v2939
        %2961 = vst.msk [vmem:[#allocation2 + $0x20] sm:$0xff] %vm2956, %v2941
        %2962 = vst.msk [vmem:[#allocation2 + $0x28] sm:$0xff] %vm2956, %v2943
        %2963 = vst.msk [vmem:[#allocation2 + $0x30] sm:$0xff] %vm2956, %v2945
        %2964 = vst.msk [vmem:[#allocation2 + $0x38] sm:$0xff] %vm2956, %v2947
        %2965 = vrot.lane.b32.xlu0 %v1141, 32
        %v2966 = vpop.permute.xlu0 %2965
        %2967 = vrot.lane.b32.xlu0 %v1142, 32
        %v2968 = vpop.permute.xlu0 %2967
        %2969 = vrot.lane.b32.xlu0 %v1143, 32
        %v2970 = vpop.permute.xlu0 %2969
        %2971 = vrot.lane.b32.xlu0 %v1144, 32
        %v2972 = vpop.permute.xlu0 %2971
        %2973 = vrot.lane.b32.xlu0 %v1149, 32
        %v2974 = vpop.permute.xlu0 %2973
        %2975 = vrot.lane.b32.xlu0 %v1150, 32
        %v2976 = vpop.permute.xlu0 %2975
        %2977 = vrot.lane.b32.xlu0 %v1151, 32
        %v2978 = vpop.permute.xlu0 %2977
        %2979 = vrot.lane.b32.xlu0 %v1152, 32
        %v2980 = vpop.permute.xlu0 %2979
        %v2982 = vsel %vm1165, %v2966, 0
        %v2985 = vsel %vm1165, %v2968, 0
        %v2988 = vsel %vm1165, %v2970, 0
        %v2991 = vsel %vm1165, %v2972, 0
        %v2994 = vsel %vm1165, %v2974, 0
        %v2997 = vsel %vm1165, %v2976, 0
        %v3000 = vsel %vm1165, %v2978, 0
        %v3003 = vsel %vm1165, %v2980, 0
        %3005 = vmatprep.subr.bf16.mxu0 0
        %3006 = vmatpush1.bf16.xpose.msra.mxu0 %v2994
        %3007 = vmatprep.subr.bf16.mxu0 0
        %3008 = vmatpush1.bf16.xpose.msra.mxu0 %v2997
        %3009 = vmatprep.subr.bf16.mxu0 0
        %3010 = vmatpush1.bf16.xpose.msra.mxu0 %v3000
        %3011 = vmatprep.subr.bf16.mxu0 0
        %3012 = vmatpush1.bf16.xpose.msra.mxu0 %v3003
        %3013 = vmatprep.subr.bf16.mxu0 0
        %3014 = vmatpush1.bf16.xpose.msra.mxu0 0
        %3015 = vmatprep.subr.bf16.mxu0 0
        %3016 = vmatpush1.bf16.xpose.msra.mxu0 0
        %3017 = vmatprep.subr.bf16.mxu0 0
        %3018 = vmatpush1.bf16.xpose.msra.mxu0 0
        %3019 = vmatprep.subr.bf16.mxu0 0
        %3020 = vmatpush1.bf16.xpose.msra.mxu0 0
        %3021 = vmatprep.subr.bf16.mxu0 0
        %3022 = vmatpush1.bf16.xpose.msra.mxu0 0
        %3023 = vmatprep.subr.bf16.mxu0 0
        %3024 = vmatpush1.bf16.xpose.msra.mxu0 0
        %3025 = vmatprep.subr.bf16.mxu0 0
        %3026 = vmatpush1.bf16.xpose.msra.mxu0 0
        %3027 = vmatprep.subr.bf16.mxu0 0
        %3028 = vmatpush1.bf16.xpose.msra.mxu0 0
        %3029 = vmatprep.subr.bf16.mxu0 0
        %3030 = vmatpush1.bf16.xpose.msra.mxu0 0
        %3031 = vmatprep.subr.bf16.mxu0 0
        %3032 = vmatpush1.bf16.xpose.msra.mxu0 0
        %3033 = vmatprep.subr.bf16.mxu0 0
        %3034 = vmatpush1.bf16.xpose.msra.mxu0 0
        %3035 = vmatprep.subr.bf16.mxu0 0
        %3036 = vmatpush1.bf16.xpose.msra.mxu0 0
        %3037 = vmatprep.mubr.bf16.mxu0 0
        %3038 = vmatmul.mubr.bf16.gmra.mrb[0].mxu0 %v2982
        %v3039 = vpop.f32.mrb[0].mxu0
        %v3040 = vadd.f32 0.0, %v3039
        %v3041 = vpop.f32.mrb[0].mxu0
        %v3042 = vpop.f32.mrb[0].mxu0
        %v3043 = vadd.f32 0.0, %v3042
        %v3044 = vpop.f32.mrb[0].mxu0
        %3045 = vmatprep.mubr.bf16.mxu0 0
        %3046 = vmatmul.mubr.bf16.gmra.mrb[0].mxu0 %v2985
        %v3047 = vpop.f32.mrb[0].mxu0
        %v3048 = vadd.f32 0.0, %v3047
        %v3049 = vpop.f32.mrb[0].mxu0
        %v3050 = vpop.f32.mrb[0].mxu0
        %v3051 = vadd.f32 0.0, %v3050
        %v3052 = vpop.f32.mrb[0].mxu0
        %3053 = vmatprep.mubr.bf16.mxu0 0
        %3054 = vmatmul.mubr.bf16.gmra.mrb[0].mxu0 %v2988
        %v3055 = vpop.f32.mrb[0].mxu0
        %v3056 = vadd.f32 0.0, %v3055
        %v3057 = vpop.f32.mrb[0].mxu0
        %v3058 = vpop.f32.mrb[0].mxu0
        %v3059 = vadd.f32 0.0, %v3058
        %v3060 = vpop.f32.mrb[0].mxu0
        %3061 = vmatprep.mubr.bf16.mxu0 0
        %3062 = vmatmul.mubr.bf16.gmra.mrb[0].mxu0 %v2991
        %v3063 = vpop.f32.mrb[0].mxu0
        %v3064 = vadd.f32 0.0, %v3063
        %v3065 = vpop.f32.mrb[0].mxu0
        %v3066 = vpop.f32.mrb[0].mxu0
        %v3067 = vadd.f32 0.0, %v3066
        %v3068 = vpop.f32.mrb[0].mxu0
        %3069 = vdwg.mxu0
        %3070 = vrot.lane.b32.xlu0 %v1145, 32
        %v3071 = vpop.permute.xlu0 %3070
        %3072 = vrot.lane.b32.xlu0 %v1146, 32
        %v3073 = vpop.permute.xlu0 %3072
        %3074 = vrot.lane.b32.xlu0 %v1147, 32
        %v3075 = vpop.permute.xlu0 %3074
        %3076 = vrot.lane.b32.xlu0 %v1148, 32
        %v3077 = vpop.permute.xlu0 %3076
        %3078 = vrot.lane.b32.xlu0 %v1153, 32
        %v3079 = vpop.permute.xlu0 %3078
        %3080 = vrot.lane.b32.xlu0 %v1154, 32
        %v3081 = vpop.permute.xlu0 %3080
        %3082 = vrot.lane.b32.xlu0 %v1155, 32
        %v3083 = vpop.permute.xlu0 %3082
        %3084 = vrot.lane.b32.xlu0 %v1156, 32
        %v3085 = vpop.permute.xlu0 %3084
        %v3087 = vsel %vm1165, %v3071, 0
        %v3090 = vsel %vm1165, %v3073, 0
        %v3093 = vsel %vm1165, %v3075, 0
        %v3096 = vsel %vm1165, %v3077, 0
        %v3099 = vsel %vm1165, %v3079, 0
        %v3102 = vsel %vm1165, %v3081, 0
        %v3105 = vsel %vm1165, %v3083, 0
        %v3108 = vsel %vm1165, %v3085, 0
        %3110 = vmatprep.subr.bf16.mxu0 0
        %3111 = vmatpush1.bf16.xpose.msra.mxu0 %v3099
        %3112 = vmatprep.subr.bf16.mxu0 0
        %3113 = vmatpush1.bf16.xpose.msra.mxu0 %v3102
        %3114 = vmatprep.subr.bf16.mxu0 0
        %3115 = vmatpush1.bf16.xpose.msra.mxu0 %v3105
        %3116 = vmatprep.subr.bf16.mxu0 0
        %3117 = vmatpush1.bf16.xpose.msra.mxu0 %v3108
        %3118 = vmatprep.subr.bf16.mxu0 0
        %3119 = vmatpush1.bf16.xpose.msra.mxu0 0
        %3120 = vmatprep.subr.bf16.mxu0 0
        %3121 = vmatpush1.bf16.xpose.msra.mxu0 0
        %3122 = vmatprep.subr.bf16.mxu0 0
        %3123 = vmatpush1.bf16.xpose.msra.mxu0 0
        %3124 = vmatprep.subr.bf16.mxu0 0
        %3125 = vmatpush1.bf16.xpose.msra.mxu0 0
        %3126 = vmatprep.subr.bf16.mxu0 0
        %3127 = vmatpush1.bf16.xpose.msra.mxu0 0
        %3128 = vmatprep.subr.bf16.mxu0 0
        %3129 = vmatpush1.bf16.xpose.msra.mxu0 0
        %3130 = vmatprep.subr.bf16.mxu0 0
        %3131 = vmatpush1.bf16.xpose.msra.mxu0 0
        %3132 = vmatprep.subr.bf16.mxu0 0
        %3133 = vmatpush1.bf16.xpose.msra.mxu0 0
        %3134 = vmatprep.subr.bf16.mxu0 0
        %3135 = vmatpush1.bf16.xpose.msra.mxu0 0
        %3136 = vmatprep.subr.bf16.mxu0 0
        %3137 = vmatpush1.bf16.xpose.msra.mxu0 0
        %3138 = vmatprep.subr.bf16.mxu0 0
        %3139 = vmatpush1.bf16.xpose.msra.mxu0 0
        %3140 = vmatprep.subr.bf16.mxu0 0
        %3141 = vmatpush1.bf16.xpose.msra.mxu0 0
        %3142 = vmatprep.mubr.bf16.mxu0 0
        %3143 = vmatmul.mubr.bf16.gmra.mrb[0].mxu0 %v3087
        %v3144 = vpop.f32.mrb[0].mxu0
        %v3145 = vadd.f32 0.0, %v3144
        %v3146 = vpop.f32.mrb[0].mxu0
        %v3147 = vpop.f32.mrb[0].mxu0
        %v3148 = vadd.f32 0.0, %v3147
        %v3149 = vpop.f32.mrb[0].mxu0
        %3150 = vmatprep.mubr.bf16.mxu0 0
        %3151 = vmatmul.mubr.bf16.gmra.mrb[0].mxu0 %v3090
        %v3152 = vpop.f32.mrb[0].mxu0
        %v3153 = vadd.f32 0.0, %v3152
        %v3154 = vpop.f32.mrb[0].mxu0
        %v3155 = vpop.f32.mrb[0].mxu0
        %v3156 = vadd.f32 0.0, %v3155
        %v3157 = vpop.f32.mrb[0].mxu0
        %3158 = vmatprep.mubr.bf16.mxu0 0
        %3159 = vmatmul.mubr.bf16.gmra.mrb[0].mxu0 %v3093
        %v3160 = vpop.f32.mrb[0].mxu0
        %v3161 = vadd.f32 0.0, %v3160
        %v3162 = vpop.f32.mrb[0].mxu0
        %v3163 = vpop.f32.mrb[0].mxu0
        %v3164 = vadd.f32 0.0, %v3163
        %v3165 = vpop.f32.mrb[0].mxu0
        %3166 = vmatprep.mubr.bf16.mxu0 0
        %3167 = vmatmul.mubr.bf16.gmra.mrb[0].mxu0 %v3096
        %v3168 = vpop.f32.mrb[0].mxu0
        %v3169 = vadd.f32 0.0, %v3168
        %v3170 = vpop.f32.mrb[0].mxu0
        %v3171 = vpop.f32.mrb[0].mxu0
        %v3172 = vadd.f32 0.0, %v3171
        %v3173 = vpop.f32.mrb[0].mxu0
        %3174 = vdwg.mxu0
        %v3175 = vsel %vm1344, %v3040, -inf
        %3176 = vmax.xlane.f32.xlu0 %v3175
        %v3177 = vpop.xlane.xlu0 %3176
        %v3178 = vsel %vm1344, %v3043, -inf
        %3179 = vmax.xlane.f32.xlu0 %v3178
        %v3180 = vpop.xlane.xlu0 %3179
        %v3181 = vsel %vm1344, %v3048, -inf
        %3182 = vmax.xlane.f32.xlu0 %v3181
        %v3183 = vpop.xlane.xlu0 %3182
        %v3184 = vsel %vm1344, %v3051, -inf
        %3185 = vmax.xlane.f32.xlu0 %v3184
        %v3186 = vpop.xlane.xlu0 %3185
        %v3187 = vsel %vm1344, %v3056, -inf
        %3188 = vmax.xlane.f32.xlu0 %v3187
        %v3189 = vpop.xlane.xlu0 %3188
        %v3190 = vsel %vm1344, %v3059, -inf
        %3191 = vmax.xlane.f32.xlu0 %v3190
        %v3192 = vpop.xlane.xlu0 %3191
        %v3193 = vsel %vm1344, %v3064, -inf
        %3194 = vmax.xlane.f32.xlu0 %v3193
        %v3195 = vpop.xlane.xlu0 %3194
        %v3196 = vsel %vm1344, %v3067, -inf
        %3197 = vmax.xlane.f32.xlu0 %v3196
        %v3198 = vpop.xlane.xlu0 %3197
        %v3199 = vsel %vm1344, %v3145, -inf
        %3200 = vmax.xlane.f32.xlu0 %v3199
        %v3201 = vpop.xlane.xlu0 %3200
        %v3202 = vsel %vm1344, %v3148, -inf
        %3203 = vmax.xlane.f32.xlu0 %v3202
        %v3204 = vpop.xlane.xlu0 %3203
        %v3205 = vsel %vm1344, %v3153, -inf
        %3206 = vmax.xlane.f32.xlu0 %v3205
        %v3207 = vpop.xlane.xlu0 %3206
        %v3208 = vsel %vm1344, %v3156, -inf
        %3209 = vmax.xlane.f32.xlu0 %v3208
        %v3210 = vpop.xlane.xlu0 %3209
        %v3211 = vsel %vm1344, %v3161, -inf
        %3212 = vmax.xlane.f32.xlu0 %v3211
        %v3213 = vpop.xlane.xlu0 %3212
        %v3214 = vsel %vm1344, %v3164, -inf
        %3215 = vmax.xlane.f32.xlu0 %v3214
        %v3216 = vpop.xlane.xlu0 %3215
        %v3217 = vsel %vm1344, %v3169, -inf
        %3218 = vmax.xlane.f32.xlu0 %v3217
        %v3219 = vpop.xlane.xlu0 %3218
        %v3220 = vsel %vm1344, %v3172, -inf
        %3221 = vmax.xlane.f32.xlu0 %v3220
        %v3222 = vpop.xlane.xlu0 %3221
        %v3223 = vsub.f32 %v3040, %v3177
        %v3224 = vsub.f32 %v3043, %v3180
        %v3225 = vsub.f32 %v3048, %v3183
        %v3226 = vsub.f32 %v3051, %v3186
        %v3227 = vsub.f32 %v3056, %v3189
        %v3228 = vsub.f32 %v3059, %v3192
        %v3229 = vsub.f32 %v3064, %v3195
        %v3230 = vsub.f32 %v3067, %v3198
        %v3231 = vsub.f32 %v3145, %v3201
        %v3232 = vsub.f32 %v3148, %v3204
        %v3233 = vsub.f32 %v3153, %v3207
        %v3234 = vsub.f32 %v3156, %v3210
        %v3235 = vsub.f32 %v3161, %v3213
        %v3236 = vsub.f32 %v3164, %v3216
        %v3237 = vsub.f32 %v3169, %v3219
        %v3238 = vsub.f32 %v3172, %v3222
        %v3239 = vmul.f32 %v3223, 1.442695
        %v3240 = vpow.pop %v3239
        %v3241 = vmul.f32 %v3224, 1.442695
        %v3242 = vpow.pop %v3241
        %v3243 = vmul.f32 %v3225, 1.442695
        %v3244 = vpow.pop %v3243
        %v3245 = vmul.f32 %v3226, 1.442695
        %v3246 = vpow.pop %v3245
        %v3247 = vmul.f32 %v3227, 1.442695
        %v3248 = vpow.pop %v3247
        %v3249 = vmul.f32 %v3228, 1.442695
        %v3250 = vpow.pop %v3249
        %v3251 = vmul.f32 %v3229, 1.442695
        %v3252 = vpow.pop %v3251
        %v3253 = vmul.f32 %v3230, 1.442695
        %v3254 = vpow.pop %v3253
        %v3255 = vmul.f32 %v3231, 1.442695
        %v3256 = vpow.pop %v3255
        %v3257 = vmul.f32 %v3232, 1.442695
        %v3258 = vpow.pop %v3257
        %v3259 = vmul.f32 %v3233, 1.442695
        %v3260 = vpow.pop %v3259
        %v3261 = vmul.f32 %v3234, 1.442695
        %v3262 = vpow.pop %v3261
        %v3263 = vmul.f32 %v3235, 1.442695
        %v3264 = vpow.pop %v3263
        %v3265 = vmul.f32 %v3236, 1.442695
        %v3266 = vpow.pop %v3265
        %v3267 = vmul.f32 %v3237, 1.442695
        %v3268 = vpow.pop %v3267
        %v3269 = vmul.f32 %v3238, 1.442695
        %v3270 = vpow.pop %v3269
        %v3271 = vsel %vm1344, %v3240, 0.0
        %3272 = vadd.xlane.f32.xlu0 %v3271
        %v3273 = vpop.xlane.xlu0 %3272
        %v3274 = vsel %vm1344, %v3242, 0.0
        %3275 = vadd.xlane.f32.xlu0 %v3274
        %v3276 = vpop.xlane.xlu0 %3275
        %v3277 = vsel %vm1344, %v3244, 0.0
        %3278 = vadd.xlane.f32.xlu0 %v3277
        %v3279 = vpop.xlane.xlu0 %3278
        %v3280 = vsel %vm1344, %v3246, 0.0
        %3281 = vadd.xlane.f32.xlu0 %v3280
        %v3282 = vpop.xlane.xlu0 %3281
        %v3283 = vsel %vm1344, %v3248, 0.0
        %3284 = vadd.xlane.f32.xlu0 %v3283
        %v3285 = vpop.xlane.xlu0 %3284
        %v3286 = vsel %vm1344, %v3250, 0.0
        %3287 = vadd.xlane.f32.xlu0 %v3286
        %v3288 = vpop.xlane.xlu0 %3287
        %v3289 = vsel %vm1344, %v3252, 0.0
        %3290 = vadd.xlane.f32.xlu0 %v3289
        %v3291 = vpop.xlane.xlu0 %3290
        %v3292 = vsel %vm1344, %v3254, 0.0
        %3293 = vadd.xlane.f32.xlu0 %v3292
        %v3294 = vpop.xlane.xlu0 %3293
        %v3295 = vsel %vm1344, %v3256, 0.0
        %3296 = vadd.xlane.f32.xlu0 %v3295
        %v3297 = vpop.xlane.xlu0 %3296
        %v3298 = vsel %vm1344, %v3258, 0.0
        %3299 = vadd.xlane.f32.xlu0 %v3298
        %v3300 = vpop.xlane.xlu0 %3299
        %v3301 = vsel %vm1344, %v3260, 0.0
        %3302 = vadd.xlane.f32.xlu0 %v3301
        %v3303 = vpop.xlane.xlu0 %3302
        %v3304 = vsel %vm1344, %v3262, 0.0
        %3305 = vadd.xlane.f32.xlu0 %v3304
        %v3306 = vpop.xlane.xlu0 %3305
        %v3307 = vsel %vm1344, %v3264, 0.0
        %3308 = vadd.xlane.f32.xlu0 %v3307
        %v3309 = vpop.xlane.xlu0 %3308
        %v3310 = vsel %vm1344, %v3266, 0.0
        %3311 = vadd.xlane.f32.xlu0 %v3310
        %v3312 = vpop.xlane.xlu0 %3311
        %v3313 = vsel %vm1344, %v3268, 0.0
        %3314 = vadd.xlane.f32.xlu0 %v3313
        %v3315 = vpop.xlane.xlu0 %3314
        %v3316 = vsel %vm1344, %v3270, 0.0
        %3317 = vadd.xlane.f32.xlu0 %v3316
        %v3318 = vpop.xlane.xlu0 %3317
        %v3319 = vrcp.pop %v3273
        %v3320 = vrcp.pop %v3276
        %v3321 = vrcp.pop %v3279
        %v3322 = vrcp.pop %v3282
        %v3323 = vrcp.pop %v3285
        %v3324 = vrcp.pop %v3288
        %v3325 = vrcp.pop %v3291
        %v3326 = vrcp.pop %v3294
        %v3327 = vrcp.pop %v3297
        %v3328 = vrcp.pop %v3300
        %v3329 = vrcp.pop %v3303
        %v3330 = vrcp.pop %v3306
        %v3331 = vrcp.pop %v3309
        %v3332 = vrcp.pop %v3312
        %v3333 = vrcp.pop %v3315
        %v3334 = vrcp.pop %v3318
        %v3335 = vmul.f32 %v3240, %v3319
        %v3336 = vmul.f32 %v3242, %v3320
        %v3337 = vmul.f32 %v3244, %v3321
        %v3338 = vmul.f32 %v3246, %v3322
        %v3339 = vmul.f32 %v3248, %v3323
        %v3340 = vmul.f32 %v3250, %v3324
        %v3341 = vmul.f32 %v3252, %v3325
        %v3342 = vmul.f32 %v3254, %v3326
        %v3343 = vmul.f32 %v3256, %v3327
        %v3344 = vmul.f32 %v3258, %v3328
        %v3345 = vmul.f32 %v3260, %v3329
        %v3346 = vmul.f32 %v3262, %v3330
        %v3347 = vmul.f32 %v3264, %v3331
        %v3348 = vmul.f32 %v3266, %v3332
        %v3349 = vmul.f32 %v3268, %v3333
        %v3350 = vmul.f32 %v3270, %v3334
        %v3351 = vpack.c.bf16 %v3336, %v3335
        %v3352 = vpack.c.bf16 %v3338, %v3337
        %v3353 = vpack.c.bf16 %v3340, %v3339
        %v3354 = vpack.c.bf16 %v3342, %v3341
        %v3355 = vpack.c.bf16 %v3344, %v3343
        %v3356 = vpack.c.bf16 %v3346, %v3345
        %v3357 = vpack.c.bf16 %v3348, %v3347
        %v3358 = vpack.c.bf16 %v3350, %v3349
        %3359 = vrot.lane.b32.xlu0 %v1157, 32
        %v3360 = vpop.permute.xlu0 %3359
        %3361 = vrot.lane.b32.xlu0 %v1158, 32
        %v3362 = vpop.permute.xlu0 %3361
        %3363 = vrot.lane.b32.xlu0 %v1159, 32
        %v3364 = vpop.permute.xlu0 %3363
        %3365 = vrot.lane.b32.xlu0 %v1160, 32
        %v3366 = vpop.permute.xlu0 %3365
        %v3372 = vsel %vm1344, %v3351, 0
        %v3375 = vsel %vm1344, %v3352, 0
        %v3378 = vsel %vm1344, %v3353, 0
        %v3381 = vsel %vm1344, %v3354, 0
        %3383 = vmatprep.subr.bf16.mxu0 0
        %3384 = vmatpush1.bf16.msra.mxu0 %v3360
        %3385 = vmatprep.subr.bf16.mxu0 0
        %3386 = vmatpush1.bf16.msra.mxu0 %v3362
        %3387 = vmatprep.subr.bf16.mxu0 0
        %3388 = vmatpush1.bf16.msra.mxu0 %v3364
        %3389 = vmatprep.subr.bf16.mxu0 0
        %3390 = vmatpush1.bf16.msra.mxu0 %v3366
        %3391 = vmatprep.subr.bf16.mxu0 0
        %3392 = vmatpush1.bf16.msra.mxu0 0
        %3393 = vmatprep.subr.bf16.mxu0 0
        %3394 = vmatpush1.bf16.msra.mxu0 0
        %3395 = vmatprep.subr.bf16.mxu0 0
        %3396 = vmatpush1.bf16.msra.mxu0 0
        %3397 = vmatprep.subr.bf16.mxu0 0
        %3398 = vmatpush1.bf16.msra.mxu0 0
        %3399 = vmatprep.subr.bf16.mxu0 0
        %3400 = vmatpush1.bf16.msra.mxu0 0
        %3401 = vmatprep.subr.bf16.mxu0 0
        %3402 = vmatpush1.bf16.msra.mxu0 0
        %3403 = vmatprep.subr.bf16.mxu0 0
        %3404 = vmatpush1.bf16.msra.mxu0 0
        %3405 = vmatprep.subr.bf16.mxu0 0
        %3406 = vmatpush1.bf16.msra.mxu0 0
        %3407 = vmatprep.subr.bf16.mxu0 0
        %3408 = vmatpush1.bf16.msra.mxu0 0
        %3409 = vmatprep.subr.bf16.mxu0 0
        %3410 = vmatpush1.bf16.msra.mxu0 0
        %3411 = vmatprep.subr.bf16.mxu0 0
        %3412 = vmatpush1.bf16.msra.mxu0 0
        %3413 = vmatprep.subr.bf16.mxu0 0
        %3414 = vmatpush1.bf16.msra.mxu0 0
        %3415 = vmatprep.mubr.bf16.mxu0 0
        %3416 = vmatmul.mubr.bf16.gmra.mrb[0].mxu0 %v3372
        %v3417 = vpop.f32.mrb[0].mxu0
        %v3418 = vadd.f32 0.0, %v3417
        %v3419 = vpop.f32.mrb[0].mxu0
        %v3420 = vpop.f32.mrb[0].mxu0
        %v3421 = vadd.f32 0.0, %v3420
        %v3422 = vpop.f32.mrb[0].mxu0
        %3423 = vmatprep.mubr.bf16.mxu0 0
        %3424 = vmatmul.mubr.bf16.gmra.mrb[0].mxu0 %v3375
        %v3425 = vpop.f32.mrb[0].mxu0
        %v3426 = vadd.f32 0.0, %v3425
        %v3427 = vpop.f32.mrb[0].mxu0
        %v3428 = vpop.f32.mrb[0].mxu0
        %v3429 = vadd.f32 0.0, %v3428
        %v3430 = vpop.f32.mrb[0].mxu0
        %3431 = vmatprep.mubr.bf16.mxu0 0
        %3432 = vmatmul.mubr.bf16.gmra.mrb[0].mxu0 %v3378
        %v3433 = vpop.f32.mrb[0].mxu0
        %v3434 = vadd.f32 0.0, %v3433
        %v3435 = vpop.f32.mrb[0].mxu0
        %v3436 = vpop.f32.mrb[0].mxu0
        %v3437 = vadd.f32 0.0, %v3436
        %v3438 = vpop.f32.mrb[0].mxu0
        %3439 = vmatprep.mubr.bf16.mxu0 0
        %3440 = vmatmul.mubr.bf16.gmra.mrb[0].mxu0 %v3381
        %v3441 = vpop.f32.mrb[0].mxu0
        %v3442 = vadd.f32 0.0, %v3441
        %v3443 = vpop.f32.mrb[0].mxu0
        %v3444 = vpop.f32.mrb[0].mxu0
        %v3445 = vadd.f32 0.0, %v3444
        %v3446 = vpop.f32.mrb[0].mxu0
        %3447 = vdwg.mxu0
        %3448 = vrot.lane.b32.xlu0 %v1161, 32
        %v3449 = vpop.permute.xlu0 %3448
        %3450 = vrot.lane.b32.xlu0 %v1162, 32
        %v3451 = vpop.permute.xlu0 %3450
        %3452 = vrot.lane.b32.xlu0 %v1163, 32
        %v3453 = vpop.permute.xlu0 %3452
        %3454 = vrot.lane.b32.xlu0 %v1164, 32
        %v3455 = vpop.permute.xlu0 %3454
        %v3461 = vsel %vm1344, %v3355, 0
        %v3464 = vsel %vm1344, %v3356, 0
        %v3467 = vsel %vm1344, %v3357, 0
        %v3470 = vsel %vm1344, %v3358, 0
        %3472 = vmatprep.subr.bf16.mxu0 0
        %3473 = vmatpush1.bf16.msra.mxu0 %v3449
        %3474 = vmatprep.subr.bf16.mxu0 0
        %3475 = vmatpush1.bf16.msra.mxu0 %v3451
        %3476 = vmatprep.subr.bf16.mxu0 0
        %3477 = vmatpush1.bf16.msra.mxu0 %v3453
        %3478 = vmatprep.subr.bf16.mxu0 0
        %3479 = vmatpush1.bf16.msra.mxu0 %v3455
        %3480 = vmatprep.subr.bf16.mxu0 0
        %3481 = vmatpush1.bf16.msra.mxu0 0
        %3482 = vmatprep.subr.bf16.mxu0 0
        %3483 = vmatpush1.bf16.msra.mxu0 0
        %3484 = vmatprep.subr.bf16.mxu0 0
        %3485 = vmatpush1.bf16.msra.mxu0 0
        %3486 = vmatprep.subr.bf16.mxu0 0
        %3487 = vmatpush1.bf16.msra.mxu0 0
        %3488 = vmatprep.subr.bf16.mxu0 0
        %3489 = vmatpush1.bf16.msra.mxu0 0
        %3490 = vmatprep.subr.bf16.mxu0 0
        %3491 = vmatpush1.bf16.msra.mxu0 0
        %3492 = vmatprep.subr.bf16.mxu0 0
        %3493 = vmatpush1.bf16.msra.mxu0 0
        %3494 = vmatprep.subr.bf16.mxu0 0
        %3495 = vmatpush1.bf16.msra.mxu0 0
        %3496 = vmatprep.subr.bf16.mxu0 0
        %3497 = vmatpush1.bf16.msra.mxu0 0
        %3498 = vmatprep.subr.bf16.mxu0 0
        %3499 = vmatpush1.bf16.msra.mxu0 0
        %3500 = vmatprep.subr.bf16.mxu0 0
        %3501 = vmatpush1.bf16.msra.mxu0 0
        %3502 = vmatprep.subr.bf16.mxu0 0
        %3503 = vmatpush1.bf16.msra.mxu0 0
        %3504 = vmatprep.mubr.bf16.mxu0 0
        %3505 = vmatmul.mubr.bf16.gmra.mrb[0].mxu0 %v3461
        %v3506 = vpop.f32.mrb[0].mxu0
        %v3507 = vadd.f32 0.0, %v3506
        %v3508 = vpop.f32.mrb[0].mxu0
        %v3509 = vpop.f32.mrb[0].mxu0
        %v3510 = vadd.f32 0.0, %v3509
        %v3511 = vpop.f32.mrb[0].mxu0
        %3512 = vmatprep.mubr.bf16.mxu0 0
        %3513 = vmatmul.mubr.bf16.gmra.mrb[0].mxu0 %v3464
        %v3514 = vpop.f32.mrb[0].mxu0
        %v3515 = vadd.f32 0.0, %v3514
        %v3516 = vpop.f32.mrb[0].mxu0
        %v3517 = vpop.f32.mrb[0].mxu0
        %v3518 = vadd.f32 0.0, %v3517
        %v3519 = vpop.f32.mrb[0].mxu0
        %3520 = vmatprep.mubr.bf16.mxu0 0
        %3521 = vmatmul.mubr.bf16.gmra.mrb[0].mxu0 %v3467
        %v3522 = vpop.f32.mrb[0].mxu0
        %v3523 = vadd.f32 0.0, %v3522
        %v3524 = vpop.f32.mrb[0].mxu0
        %v3525 = vpop.f32.mrb[0].mxu0
        %v3526 = vadd.f32 0.0, %v3525
        %v3527 = vpop.f32.mrb[0].mxu0
        %3528 = vmatprep.mubr.bf16.mxu0 0
        %3529 = vmatmul.mubr.bf16.gmra.mrb[0].mxu0 %v3470
        %v3530 = vpop.f32.mrb[0].mxu0
        %v3531 = vadd.f32 0.0, %v3530
        %v3532 = vpop.f32.mrb[0].mxu0
        %v3533 = vpop.f32.mrb[0].mxu0
        %v3534 = vadd.f32 0.0, %v3533
        %v3535 = vpop.f32.mrb[0].mxu0
        %3536 = vdwg.mxu0
        %v3537 = vpack.c.bf16 %v3421, %v3418
        %v3538 = vpack.c.bf16 %v3429, %v3426
        %v3539 = vpack.c.bf16 %v3437, %v3434
        %v3540 = vpack.c.bf16 %v3445, %v3442
        %v3541 = vpack.c.bf16 %v3510, %v3507
        %v3542 = vpack.c.bf16 %v3518, %v3515
        %v3543 = vpack.c.bf16 %v3526, %v3523
        %v3544 = vpack.c.bf16 %v3534, %v3531
        %3553 = vrot.lane.b32.xlu0 %v3537, 96
        %v3554 = vpop.permute.xlu0 %3553
        %3555 = vrot.lane.b32.xlu0 %v3538, 96
        %v3556 = vpop.permute.xlu0 %3555
        %3557 = vrot.lane.b32.xlu0 %v3539, 96
        %v3558 = vpop.permute.xlu0 %3557
        %3559 = vrot.lane.b32.xlu0 %v3540, 96
        %v3560 = vpop.permute.xlu0 %3559
        %3561 = vrot.lane.b32.xlu0 %v3541, 96
        %v3562 = vpop.permute.xlu0 %3561
        %3563 = vrot.lane.b32.xlu0 %v3542, 96
        %v3564 = vpop.permute.xlu0 %3563
        %3565 = vrot.lane.b32.xlu0 %v3543, 96
        %v3566 = vpop.permute.xlu0 %3565
        %3567 = vrot.lane.b32.xlu0 %v3544, 96
        %v3568 = vpop.permute.xlu0 %3567
        %vm3577 = vcmask 1048320
        %3578 = vst.msk [vmem:[#allocation2] sm:$0xff] %vm3577, %v3554
        %3579 = vst.msk [vmem:[#allocation2 + $0x8] sm:$0xff] %vm3577, %v3556
        %3580 = vst.msk [vmem:[#allocation2 + $0x10] sm:$0xff] %vm3577, %v3558
        %3581 = vst.msk [vmem:[#allocation2 + $0x18] sm:$0xff] %vm3577, %v3560
        %3582 = vst.msk [vmem:[#allocation2 + $0x20] sm:$0xff] %vm3577, %v3562
        %3583 = vst.msk [vmem:[#allocation2 + $0x28] sm:$0xff] %vm3577, %v3564
        %3584 = vst.msk [vmem:[#allocation2 + $0x30] sm:$0xff] %vm3577, %v3566
        %3585 = vst.msk [vmem:[#allocation2 + $0x38] sm:$0xff] %vm3577, %v3568
        %v3586 = vld [vmem:[#allocation2] sm:$0xff]
        %v3587 = vld [vmem:[#allocation2 + $0x8] sm:$0xff]
        %v3588 = vld [vmem:[#allocation2 + $0x10] sm:$0xff]
        %v3589 = vld [vmem:[#allocation2 + $0x18] sm:$0xff]
        %v3590 = vld [vmem:[#allocation2 + $0x20] sm:$0xff]
        %v3591 = vld [vmem:[#allocation2 + $0x28] sm:$0xff]
        %v3592 = vld [vmem:[#allocation2 + $0x30] sm:$0xff]
        %v3593 = vld [vmem:[#allocation2 + $0x38] sm:$0xff]
        %v3594 = vld [vmem:[%s402] sm:$0xf]
        %v3595 = vld [vmem:[%s402 + $0x4] sm:$0xf]
        %v3596 = vld [vmem:[%s402 + $0x8] sm:$0xf]
        %v3597 = vld [vmem:[%s402 + $0xc] sm:$0xf]
        %v3598 = vld [vmem:[%s402 + $0x10] sm:$0xf]
        %v3599 = vld [vmem:[%s402 + $0x14] sm:$0xf]
        %v3600 = vld [vmem:[%s402 + $0x18] sm:$0xf]
        %v3601 = vld [vmem:[%s402 + $0x1c] sm:$0xf]
        %v3602 = vld [vmem:[%s402 + $0x20] sm:$0xf]
        %v3603 = vld [vmem:[%s402 + $0x24] sm:$0xf]
        %v3604 = vld [vmem:[%s402 + $0x28] sm:$0xf]
        %v3605 = vld [vmem:[%s402 + $0x2c] sm:$0xf]
        %v3606 = vld [vmem:[%s402 + $0x30] sm:$0xf]
        %v3607 = vld [vmem:[%s402 + $0x34] sm:$0xf]
        %v3608 = vld [vmem:[%s402 + $0x38] sm:$0xf]
        %v3609 = vld [vmem:[%s402 + $0x3c] sm:$0xf]
        %v3626 = vunpack.c.l.b16 %v3594
        %v3627 = vunpack.c.l.b16 %v3595
        %v3628 = vunpack.c.l.b16 %v3596
        %v3629 = vunpack.c.l.b16 %v3597
        %v3630 = vunpack.c.l.b16 %v3598
        %v3631 = vunpack.c.l.b16 %v3599
        %v3632 = vunpack.c.l.b16 %v3600
        %v3633 = vunpack.c.l.b16 %v3601
        %v3634 = vunpack.c.l.b16 %v3602
        %v3635 = vunpack.c.l.b16 %v3603
        %v3636 = vunpack.c.l.b16 %v3604
        %v3637 = vunpack.c.l.b16 %v3605
        %v3638 = vunpack.c.l.b16 %v3606
        %v3639 = vunpack.c.l.b16 %v3607
        %v3640 = vunpack.c.l.b16 %v3608
        %v3641 = vunpack.c.l.b16 %v3609
        %v3642 = vpack.c.b16 %v3627, %v3626
        %v3643 = vpack.c.b16 %v3629, %v3628
        %v3644 = vpack.c.b16 %v3631, %v3630
        %v3645 = vpack.c.b16 %v3633, %v3632
        %v3646 = vpack.c.b16 %v3635, %v3634
        %v3647 = vpack.c.b16 %v3637, %v3636
        %v3648 = vpack.c.b16 %v3639, %v3638
        %v3649 = vpack.c.b16 %v3641, %v3640
        %3658 = vmatprep.subr.bf16.mxu0 0
        %3659 = vmatpush1.bf16.msra.mxu0 %v3642
        %3660 = vmatprep.subr.bf16.mxu0 0
        %3661 = vmatpush1.bf16.msra.mxu0 %v3643
        %3662 = vmatprep.subr.bf16.mxu0 0
        %3663 = vmatpush1.bf16.msra.mxu0 %v3644
        %3664 = vmatprep.subr.bf16.mxu0 0
        %3665 = vmatpush1.bf16.msra.mxu0 %v3645
        %3666 = vmatprep.subr.bf16.mxu0 0
        %3667 = vmatpush1.bf16.msra.mxu0 %v3646
        %3668 = vmatprep.subr.bf16.mxu0 0
        %3669 = vmatpush1.bf16.msra.mxu0 %v3647
        %3670 = vmatprep.subr.bf16.mxu0 0
        %3671 = vmatpush1.bf16.msra.mxu0 %v3648
        %3672 = vmatprep.subr.bf16.mxu0 0
        %3673 = vmatpush1.bf16.msra.mxu0 %v3649
        %3674 = vmatprep.subr.bf16.mxu0 0
        %3675 = vmatpush1.bf16.msra.mxu0 0
        %3676 = vmatprep.subr.bf16.mxu0 0
        %3677 = vmatpush1.bf16.msra.mxu0 0
        %3678 = vmatprep.subr.bf16.mxu0 0
        %3679 = vmatpush1.bf16.msra.mxu0 0
        %3680 = vmatprep.subr.bf16.mxu0 0
        %3681 = vmatpush1.bf16.msra.mxu0 0
        %3682 = vmatprep.subr.bf16.mxu0 0
        %3683 = vmatpush1.bf16.msra.mxu0 0
        %3684 = vmatprep.subr.bf16.mxu0 0
        %3685 = vmatpush1.bf16.msra.mxu0 0
        %3686 = vmatprep.subr.bf16.mxu0 0
        %3687 = vmatpush1.bf16.msra.mxu0 0
        %3688 = vmatprep.subr.bf16.mxu0 0
        %3689 = vmatpush1.bf16.msra.mxu0 0
        %3690 = vmatprep.mubr.bf16.mxu0 0
        %3691 = vmatmul.mubr.bf16.gmra.mrb[0].mxu0 %v3586
        %v3692 = vpop.f32.mrb[0].mxu0
        %v3693 = vadd.f32 0.0, %v3692
        %v3694 = vpop.f32.mrb[0].mxu0
        %v3695 = vpop.f32.mrb[0].mxu0
        %v3696 = vadd.f32 0.0, %v3695
        %v3697 = vpop.f32.mrb[0].mxu0
        %3698 = vmatprep.mubr.bf16.mxu0 0
        %3699 = vmatmul.mubr.bf16.gmra.mrb[0].mxu0 %v3587
        %v3700 = vpop.f32.mrb[0].mxu0
        %v3701 = vadd.f32 0.0, %v3700
        %v3702 = vpop.f32.mrb[0].mxu0
        %v3703 = vpop.f32.mrb[0].mxu0
        %v3704 = vadd.f32 0.0, %v3703
        %v3705 = vpop.f32.mrb[0].mxu0
        %3706 = vmatprep.mubr.bf16.mxu0 0
        %3707 = vmatmul.mubr.bf16.gmra.mrb[0].mxu0 %v3588
        %v3708 = vpop.f32.mrb[0].mxu0
        %v3709 = vadd.f32 0.0, %v3708
        %v3710 = vpop.f32.mrb[0].mxu0
        %v3711 = vpop.f32.mrb[0].mxu0
        %v3712 = vadd.f32 0.0, %v3711
        %v3713 = vpop.f32.mrb[0].mxu0
        %3714 = vmatprep.mubr.bf16.mxu0 0
        %3715 = vmatmul.mubr.bf16.gmra.mrb[0].mxu0 %v3589
        %v3716 = vpop.f32.mrb[0].mxu0
        %v3717 = vadd.f32 0.0, %v3716
        %v3718 = vpop.f32.mrb[0].mxu0
        %v3719 = vpop.f32.mrb[0].mxu0
        %v3720 = vadd.f32 0.0, %v3719
        %v3721 = vpop.f32.mrb[0].mxu0
        %3722 = vmatprep.mubr.bf16.mxu0 0
        %3723 = vmatmul.mubr.bf16.gmra.mrb[0].mxu0 %v3590
        %v3724 = vpop.f32.mrb[0].mxu0
        %v3725 = vadd.f32 0.0, %v3724
        %v3726 = vpop.f32.mrb[0].mxu0
        %v3727 = vpop.f32.mrb[0].mxu0
        %v3728 = vadd.f32 0.0, %v3727
        %v3729 = vpop.f32.mrb[0].mxu0
        %3730 = vmatprep.mubr.bf16.mxu0 0
        %3731 = vmatmul.mubr.bf16.gmra.mrb[0].mxu0 %v3591
        %v3732 = vpop.f32.mrb[0].mxu0
        %v3733 = vadd.f32 0.0, %v3732
        %v3734 = vpop.f32.mrb[0].mxu0
        %v3735 = vpop.f32.mrb[0].mxu0
        %v3736 = vadd.f32 0.0, %v3735
        %v3737 = vpop.f32.mrb[0].mxu0
        %3738 = vmatprep.mubr.bf16.mxu0 0
        %3739 = vmatmul.mubr.bf16.gmra.mrb[0].mxu0 %v3592
        %v3740 = vpop.f32.mrb[0].mxu0
        %v3741 = vadd.f32 0.0, %v3740
        %v3742 = vpop.f32.mrb[0].mxu0
        %v3743 = vpop.f32.mrb[0].mxu0
        %v3744 = vadd.f32 0.0, %v3743
        %v3745 = vpop.f32.mrb[0].mxu0
        %3746 = vmatprep.mubr.bf16.mxu0 0
        %3747 = vmatmul.mubr.bf16.gmra.mrb[0].mxu0 %v3593
        %v3748 = vpop.f32.mrb[0].mxu0
        %v3749 = vadd.f32 0.0, %v3748
        %v3750 = vpop.f32.mrb[0].mxu0
        %v3751 = vpop.f32.mrb[0].mxu0
        %v3752 = vadd.f32 0.0, %v3751
        %v3753 = vpop.f32.mrb[0].mxu0
        %3754 = vdwg.mxu0
        %v3755 = vadd.f32 %v513, %v3693
        %v3756 = vadd.f32 %v514, %v3696
        %v3757 = vadd.f32 %v515, %v3701
        %v3758 = vadd.f32 %v516, %v3704
        %v3759 = vadd.f32 %v517, %v3709
        %v3760 = vadd.f32 %v518, %v3712
        %v3761 = vadd.f32 %v519, %v3717
        %v3762 = vadd.f32 %v520, %v3720
        %v3763 = vadd.f32 %v521, %v3725
        %v3764 = vadd.f32 %v522, %v3728
        %v3765 = vadd.f32 %v523, %v3733
        %v3766 = vadd.f32 %v524, %v3736
        %v3767 = vadd.f32 %v525, %v3741
        %v3768 = vadd.f32 %v526, %v3744
        %v3769 = vadd.f32 %v527, %v3749
        %v3770 = vadd.f32 %v528, %v3752
        %3771 = vadd.xlane.f32.xlu0 %v3755
        %v3772 = vpop.xlane.xlu0 %3771
        %3773 = vadd.xlane.f32.xlu0 %v3756
        %v3774 = vpop.xlane.xlu0 %3773
        %3775 = vadd.xlane.f32.xlu0 %v3757
        %v3776 = vpop.xlane.xlu0 %3775
        %3777 = vadd.xlane.f32.xlu0 %v3758
        %v3778 = vpop.xlane.xlu0 %3777
        %3779 = vadd.xlane.f32.xlu0 %v3759
        %v3780 = vpop.xlane.xlu0 %3779
        %3781 = vadd.xlane.f32.xlu0 %v3760
        %v3782 = vpop.xlane.xlu0 %3781
        %3783 = vadd.xlane.f32.xlu0 %v3761
        %v3784 = vpop.xlane.xlu0 %3783
        %3785 = vadd.xlane.f32.xlu0 %v3762
        %v3786 = vpop.xlane.xlu0 %3785
        %3787 = vadd.xlane.f32.xlu0 %v3763
        %v3788 = vpop.xlane.xlu0 %3787
        %3789 = vadd.xlane.f32.xlu0 %v3764
        %v3790 = vpop.xlane.xlu0 %3789
        %3791 = vadd.xlane.f32.xlu0 %v3765
        %v3792 = vpop.xlane.xlu0 %3791
        %3793 = vadd.xlane.f32.xlu0 %v3766
        %v3794 = vpop.xlane.xlu0 %3793
        %3795 = vadd.xlane.f32.xlu0 %v3767
        %v3796 = vpop.xlane.xlu0 %3795
        %3797 = vadd.xlane.f32.xlu0 %v3768
        %v3798 = vpop.xlane.xlu0 %3797
        %3799 = vadd.xlane.f32.xlu0 %v3769
        %v3800 = vpop.xlane.xlu0 %3799
        %3801 = vadd.xlane.f32.xlu0 %v3770
        %v3802 = vpop.xlane.xlu0 %3801
        %v3803 = vmul.f32 %v3772, %v562
        %v3804 = vmul.f32 %v3774, %v562
        %v3805 = vmul.f32 %v3776, %v562
        %v3806 = vmul.f32 %v3778, %v562
        %v3807 = vmul.f32 %v3780, %v562
        %v3808 = vmul.f32 %v3782, %v562
        %v3809 = vmul.f32 %v3784, %v562
        %v3810 = vmul.f32 %v3786, %v562
        %v3811 = vmul.f32 %v3788, %v562
        %v3812 = vmul.f32 %v3790, %v562
        %v3813 = vmul.f32 %v3792, %v562
        %v3814 = vmul.f32 %v3794, %v562
        %v3815 = vmul.f32 %v3796, %v562
        %v3816 = vmul.f32 %v3798, %v562
        %v3817 = vmul.f32 %v3800, %v562
        %v3818 = vmul.f32 %v3802, %v562
        %v3819 = vsub.f32 %v3755, %v3803
        %v3820 = vsub.f32 %v3756, %v3804
        %v3821 = vsub.f32 %v3757, %v3805
        %v3822 = vsub.f32 %v3758, %v3806
        %v3823 = vsub.f32 %v3759, %v3807
        %v3824 = vsub.f32 %v3760, %v3808
        %v3825 = vsub.f32 %v3761, %v3809
        %v3826 = vsub.f32 %v3762, %v3810
        %v3827 = vsub.f32 %v3763, %v3811
        %v3828 = vsub.f32 %v3764, %v3812
        %v3829 = vsub.f32 %v3765, %v3813
        %v3830 = vsub.f32 %v3766, %v3814
        %v3831 = vsub.f32 %v3767, %v3815
        %v3832 = vsub.f32 %v3768, %v3816
        %v3833 = vsub.f32 %v3769, %v3817
        %v3834 = vsub.f32 %v3770, %v3818
        %v3835 = vmul.f32 %v3819, %v3819
        %v3836 = vmul.f32 %v3820, %v3820
        %v3837 = vmul.f32 %v3821, %v3821
        %v3838 = vmul.f32 %v3822, %v3822
        %v3839 = vmul.f32 %v3823, %v3823
        %v3840 = vmul.f32 %v3824, %v3824
        %v3841 = vmul.f32 %v3825, %v3825
        %v3842 = vmul.f32 %v3826, %v3826
        %v3843 = vmul.f32 %v3827, %v3827
        %v3844 = vmul.f32 %v3828, %v3828
        %v3845 = vmul.f32 %v3829, %v3829
        %v3846 = vmul.f32 %v3830, %v3830
        %v3847 = vmul.f32 %v3831, %v3831
        %v3848 = vmul.f32 %v3832, %v3832
        %v3849 = vmul.f32 %v3833, %v3833
        %v3850 = vmul.f32 %v3834, %v3834
        %3851 = vadd.xlane.f32.xlu0 %v3835
        %v3852 = vpop.xlane.xlu0 %3851
        %3853 = vadd.xlane.f32.xlu0 %v3836
        %v3854 = vpop.xlane.xlu0 %3853
        %3855 = vadd.xlane.f32.xlu0 %v3837
        %v3856 = vpop.xlane.xlu0 %3855
        %3857 = vadd.xlane.f32.xlu0 %v3838
        %v3858 = vpop.xlane.xlu0 %3857
        %3859 = vadd.xlane.f32.xlu0 %v3839
        %v3860 = vpop.xlane.xlu0 %3859
        %3861 = vadd.xlane.f32.xlu0 %v3840
        %v3862 = vpop.xlane.xlu0 %3861
        %3863 = vadd.xlane.f32.xlu0 %v3841
        %v3864 = vpop.xlane.xlu0 %3863
        %3865 = vadd.xlane.f32.xlu0 %v3842
        %v3866 = vpop.xlane.xlu0 %3865
        %3867 = vadd.xlane.f32.xlu0 %v3843
        %v3868 = vpop.xlane.xlu0 %3867
        %3869 = vadd.xlane.f32.xlu0 %v3844
        %v3870 = vpop.xlane.xlu0 %3869
        %3871 = vadd.xlane.f32.xlu0 %v3845
        %v3872 = vpop.xlane.xlu0 %3871
        %3873 = vadd.xlane.f32.xlu0 %v3846
        %v3874 = vpop.xlane.xlu0 %3873
        %3875 = vadd.xlane.f32.xlu0 %v3847
        %v3876 = vpop.xlane.xlu0 %3875
        %3877 = vadd.xlane.f32.xlu0 %v3848
        %v3878 = vpop.xlane.xlu0 %3877
        %3879 = vadd.xlane.f32.xlu0 %v3849
        %v3880 = vpop.xlane.xlu0 %3879
        %3881 = vadd.xlane.f32.xlu0 %v3850
        %v3882 = vpop.xlane.xlu0 %3881
        %v3883 = vmul.f32 %v3852, %v562
        %v3884 = vmul.f32 %v3854, %v562
        %v3885 = vmul.f32 %v3856, %v562
        %v3886 = vmul.f32 %v3858, %v562
        %v3887 = vmul.f32 %v3860, %v562
        %v3888 = vmul.f32 %v3862, %v562
        %v3889 = vmul.f32 %v3864, %v562
        %v3890 = vmul.f32 %v3866, %v562
        %v3891 = vmul.f32 %v3868, %v562
        %v3892 = vmul.f32 %v3870, %v562
        %v3893 = vmul.f32 %v3872, %v562
        %v3894 = vmul.f32 %v3874, %v562
        %v3895 = vmul.f32 %v3876, %v562
        %v3896 = vmul.f32 %v3878, %v562
        %v3897 = vmul.f32 %v3880, %v562
        %v3898 = vmul.f32 %v3882, %v562
        %v3899 = vadd.f32 %v3883, 1e-05
        %v3900 = vadd.f32 %v3884, 1e-05
        %v3901 = vadd.f32 %v3885, 1e-05
        %v3902 = vadd.f32 %v3886, 1e-05
        %v3903 = vadd.f32 %v3887, 1e-05
        %v3904 = vadd.f32 %v3888, 1e-05
        %v3905 = vadd.f32 %v3889, 1e-05
        %v3906 = vadd.f32 %v3890, 1e-05
        %v3907 = vadd.f32 %v3891, 1e-05
        %v3908 = vadd.f32 %v3892, 1e-05
        %v3909 = vadd.f32 %v3893, 1e-05
        %v3910 = vadd.f32 %v3894, 1e-05
        %v3911 = vadd.f32 %v3895, 1e-05
        %v3912 = vadd.f32 %v3896, 1e-05
        %v3913 = vadd.f32 %v3897, 1e-05
        %v3914 = vadd.f32 %v3898, 1e-05
        %v3915 = vrsqrt.pop %v3899
        %v3916 = vrsqrt.pop %v3900
        %v3917 = vrsqrt.pop %v3901
        %v3918 = vrsqrt.pop %v3902
        %v3919 = vrsqrt.pop %v3903
        %v3920 = vrsqrt.pop %v3904
        %v3921 = vrsqrt.pop %v3905
        %v3922 = vrsqrt.pop %v3906
        %v3923 = vrsqrt.pop %v3907
        %v3924 = vrsqrt.pop %v3908
        %v3925 = vrsqrt.pop %v3909
        %v3926 = vrsqrt.pop %v3910
        %v3927 = vrsqrt.pop %v3911
        %v3928 = vrsqrt.pop %v3912
        %v3929 = vrsqrt.pop %v3913
        %v3930 = vrsqrt.pop %v3914
        %v3931 = vmul.f32 %v3819, %v3915
        %v3932 = vmul.f32 %v3820, %v3916
        %v3933 = vmul.f32 %v3821, %v3917
        %v3934 = vmul.f32 %v3822, %v3918
        %v3935 = vmul.f32 %v3823, %v3919
        %v3936 = vmul.f32 %v3824, %v3920
        %v3937 = vmul.f32 %v3825, %v3921
        %v3938 = vmul.f32 %v3826, %v3922
        %v3939 = vmul.f32 %v3827, %v3923
        %v3940 = vmul.f32 %v3828, %v3924
        %v3941 = vmul.f32 %v3829, %v3925
        %v3942 = vmul.f32 %v3830, %v3926
        %v3943 = vmul.f32 %v3831, %v3927
        %v3944 = vmul.f32 %v3832, %v3928
        %v3945 = vmul.f32 %v3833, %v3929
        %v3946 = vmul.f32 %v3834, %v3930
        %v3947 = vlaneseq
        %v3948 = vshrl.u32 %v3947, 7
        %v3949 = vsub.s32 2, %v3948
        %v3950 = vrot.slane %v529, %v3949
        %v3951 = vmul.f32 %v3931, %v3950
        %v3952 = vmul.f32 %v3932, %v3950
        %v3953 = vmul.f32 %v3933, %v3950
        %v3954 = vmul.f32 %v3934, %v3950
        %v3955 = vmul.f32 %v3935, %v3950
        %v3956 = vmul.f32 %v3936, %v3950
        %v3957 = vmul.f32 %v3937, %v3950
        %v3958 = vmul.f32 %v3938, %v3950
        %v3959 = vmul.f32 %v3939, %v3950
        %v3960 = vmul.f32 %v3940, %v3950
        %v3961 = vmul.f32 %v3941, %v3950
        %v3962 = vmul.f32 %v3942, %v3950
        %v3963 = vmul.f32 %v3943, %v3950
        %v3964 = vmul.f32 %v3944, %v3950
        %v3965 = vmul.f32 %v3945, %v3950
        %v3966 = vmul.f32 %v3946, %v3950
        %v3967 = vlaneseq
        %v3968 = vshrl.u32 %v3967, 7
        %v3969 = vsub.s32 3, %v3968
        %v3970 = vrot.slane %v529, %v3969
        %v3971 = vadd.f32 %v3951, %v3970
        %v3972 = vadd.f32 %v3952, %v3970
        %v3973 = vadd.f32 %v3953, %v3970
        %v3974 = vadd.f32 %v3954, %v3970
        %v3975 = vadd.f32 %v3955, %v3970
        %v3976 = vadd.f32 %v3956, %v3970
        %v3977 = vadd.f32 %v3957, %v3970
        %v3978 = vadd.f32 %v3958, %v3970
        %v3979 = vadd.f32 %v3959, %v3970
        %v3980 = vadd.f32 %v3960, %v3970
        %v3981 = vadd.f32 %v3961, %v3970
        %v3982 = vadd.f32 %v3962, %v3970
        %v3983 = vadd.f32 %v3963, %v3970
        %v3984 = vadd.f32 %v3964, %v3970
        %v3985 = vadd.f32 %v3965, %v3970
        %v3986 = vadd.f32 %v3966, %v3970
        %v3987 = vpack.c.bf16 %v3972, %v3971
        %v3988 = vpack.c.bf16 %v3974, %v3973
        %v3989 = vpack.c.bf16 %v3976, %v3975
        %v3990 = vpack.c.bf16 %v3978, %v3977
        %v3991 = vpack.c.bf16 %v3980, %v3979
        %v3992 = vpack.c.bf16 %v3982, %v3981
        %v3993 = vpack.c.bf16 %v3984, %v3983
        %v3994 = vpack.c.bf16 %v3986, %v3985
        %v3995 = vld [vmem:[%s411] sm:$0xf]
        %v3996 = vld [vmem:[%s411 + $0x4] sm:$0xf]
        %v3997 = vld [vmem:[%s411 + $0x8] sm:$0xf]
        %v3998 = vld [vmem:[%s411 + $0xc] sm:$0xf]
        %v3999 = vld [vmem:[%s411 + $0x10] sm:$0xf]
        %v4000 = vld [vmem:[%s411 + $0x14] sm:$0xf]
        %v4001 = vld [vmem:[%s411 + $0x18] sm:$0xf]
        %v4002 = vld [vmem:[%s411 + $0x1c] sm:$0xf]
        %v4003 = vld [vmem:[%s411 + $0x20] sm:$0xf]
        %v4004 = vld [vmem:[%s411 + $0x24] sm:$0xf]
        %v4005 = vld [vmem:[%s411 + $0x28] sm:$0xf]
        %v4006 = vld [vmem:[%s411 + $0x2c] sm:$0xf]
        %v4007 = vld [vmem:[%s411 + $0x30] sm:$0xf]
        %v4008 = vld [vmem:[%s411 + $0x34] sm:$0xf]
        %v4009 = vld [vmem:[%s411 + $0x38] sm:$0xf]
        %v4010 = vld [vmem:[%s411 + $0x3c] sm:$0xf]
        %v4011 = vlaneseq
        %v4012 = vshrl.u32 %v4011, 7
        %v4013 = vsub.s32 4, %v4012
        %v4014 = vrot.slane %v529, %v4013
        %v4031 = vunpack.c.l.b16 %v3995
        %v4032 = vunpack.c.l.b16 %v3996
        %v4033 = vunpack.c.l.b16 %v3997
        %v4034 = vunpack.c.l.b16 %v3998
        %v4035 = vunpack.c.l.b16 %v3999
        %v4036 = vunpack.c.l.b16 %v4000
        %v4037 = vunpack.c.l.b16 %v4001
        %v4038 = vunpack.c.l.b16 %v4002
        %v4039 = vunpack.c.l.b16 %v4003
        %v4040 = vunpack.c.l.b16 %v4004
        %v4041 = vunpack.c.l.b16 %v4005
        %v4042 = vunpack.c.l.b16 %v4006
        %v4043 = vunpack.c.l.b16 %v4007
        %v4044 = vunpack.c.l.b16 %v4008
        %v4045 = vunpack.c.l.b16 %v4009
        %v4046 = vunpack.c.l.b16 %v4010
        %v4047 = vpack.c.b16 %v4032, %v4031
        %v4048 = vpack.c.b16 %v4034, %v4033
        %v4049 = vpack.c.b16 %v4036, %v4035
        %v4050 = vpack.c.b16 %v4038, %v4037
        %v4051 = vpack.c.b16 %v4040, %v4039
        %v4052 = vpack.c.b16 %v4042, %v4041
        %v4053 = vpack.c.b16 %v4044, %v4043
        %v4054 = vpack.c.b16 %v4046, %v4045
        %4063 = vmatprep.subr.bf16.mxu0 0
        %4064 = vmatpush1.bf16.msra.mxu0 %v4047
        %4065 = vmatprep.subr.bf16.mxu0 0
        %4066 = vmatpush1.bf16.msra.mxu0 %v4048
        %4067 = vmatprep.subr.bf16.mxu0 0
        %4068 = vmatpush1.bf16.msra.mxu0 %v4049
        %4069 = vmatprep.subr.bf16.mxu0 0
        %4070 = vmatpush1.bf16.msra.mxu0 %v4050
        %4071 = vmatprep.subr.bf16.mxu0 0
        %4072 = vmatpush1.bf16.msra.mxu0 %v4051
        %4073 = vmatprep.subr.bf16.mxu0 0
        %4074 = vmatpush1.bf16.msra.mxu0 %v4052
        %4075 = vmatprep.subr.bf16.mxu0 0
        %4076 = vmatpush1.bf16.msra.mxu0 %v4053
        %4077 = vmatprep.subr.bf16.mxu0 0
        %4078 = vmatpush1.bf16.msra.mxu0 %v4054
        %4079 = vmatprep.subr.bf16.mxu0 0
        %4080 = vmatpush1.bf16.msra.mxu0 0
        %4081 = vmatprep.subr.bf16.mxu0 0
        %4082 = vmatpush1.bf16.msra.mxu0 0
        %4083 = vmatprep.subr.bf16.mxu0 0
        %4084 = vmatpush1.bf16.msra.mxu0 0
        %4085 = vmatprep.subr.bf16.mxu0 0
        %4086 = vmatpush1.bf16.msra.mxu0 0
        %4087 = vmatprep.subr.bf16.mxu0 0
        %4088 = vmatpush1.bf16.msra.mxu0 0
        %4089 = vmatprep.subr.bf16.mxu0 0
        %4090 = vmatpush1.bf16.msra.mxu0 0
        %4091 = vmatprep.subr.bf16.mxu0 0
        %4092 = vmatpush1.bf16.msra.mxu0 0
        %4093 = vmatprep.subr.bf16.mxu0 0
        %4094 = vmatpush1.bf16.msra.mxu0 0
        %4095 = vmatprep.mubr.bf16.mxu0 0
        %4096 = vmatmul.mubr.bf16.gmra.mrb[0].mxu0 %v3987
        %v4097 = vpop.f32.mrb[0].mxu0
        %v4098 = vadd.f32 %v4014, %v4097
        %v4099 = vpop.f32.mrb[0].mxu0
        %v4100 = vpop.f32.mrb[0].mxu0
        %v4101 = vadd.f32 %v4014, %v4100
        %v4102 = vpop.f32.mrb[0].mxu0
        %4103 = vmatprep.mubr.bf16.mxu0 0
        %4104 = vmatmul.mubr.bf16.gmra.mrb[0].mxu0 %v3988
        %v4105 = vpop.f32.mrb[0].mxu0
        %v4106 = vadd.f32 %v4014, %v4105
        %v4107 = vpop.f32.mrb[0].mxu0
        %v4108 = vpop.f32.mrb[0].mxu0
        %v4109 = vadd.f32 %v4014, %v4108
        %v4110 = vpop.f32.mrb[0].mxu0
        %4111 = vmatprep.mubr.bf16.mxu0 0
        %4112 = vmatmul.mubr.bf16.gmra.mrb[0].mxu0 %v3989
        %v4113 = vpop.f32.mrb[0].mxu0
        %v4114 = vadd.f32 %v4014, %v4113
        %v4115 = vpop.f32.mrb[0].mxu0
        %v4116 = vpop.f32.mrb[0].mxu0
        %v4117 = vadd.f32 %v4014, %v4116
        %v4118 = vpop.f32.mrb[0].mxu0
        %4119 = vmatprep.mubr.bf16.mxu0 0
        %4120 = vmatmul.mubr.bf16.gmra.mrb[0].mxu0 %v3990
        %v4121 = vpop.f32.mrb[0].mxu0
        %v4122 = vadd.f32 %v4014, %v4121
        %v4123 = vpop.f32.mrb[0].mxu0
        %v4124 = vpop.f32.mrb[0].mxu0
        %v4125 = vadd.f32 %v4014, %v4124
        %v4126 = vpop.f32.mrb[0].mxu0
        %4127 = vmatprep.mubr.bf16.mxu0 0
        %4128 = vmatmul.mubr.bf16.gmra.mrb[0].mxu0 %v3991
        %v4129 = vpop.f32.mrb[0].mxu0
        %v4130 = vadd.f32 %v4014, %v4129
        %v4131 = vpop.f32.mrb[0].mxu0
        %v4132 = vpop.f32.mrb[0].mxu0
        %v4133 = vadd.f32 %v4014, %v4132
        %v4134 = vpop.f32.mrb[0].mxu0
        %4135 = vmatprep.mubr.bf16.mxu0 0
        %4136 = vmatmul.mubr.bf16.gmra.mrb[0].mxu0 %v3992
        %v4137 = vpop.f32.mrb[0].mxu0
        %v4138 = vadd.f32 %v4014, %v4137
        %v4139 = vpop.f32.mrb[0].mxu0
        %v4140 = vpop.f32.mrb[0].mxu0
        %v4141 = vadd.f32 %v4014, %v4140
        %v4142 = vpop.f32.mrb[0].mxu0
        %4143 = vmatprep.mubr.bf16.mxu0 0
        %4144 = vmatmul.mubr.bf16.gmra.mrb[0].mxu0 %v3993
        %v4145 = vpop.f32.mrb[0].mxu0
        %v4146 = vadd.f32 %v4014, %v4145
        %v4147 = vpop.f32.mrb[0].mxu0
        %v4148 = vpop.f32.mrb[0].mxu0
        %v4149 = vadd.f32 %v4014, %v4148
        %v4150 = vpop.f32.mrb[0].mxu0
        %4151 = vmatprep.mubr.bf16.mxu0 0
        %4152 = vmatmul.mubr.bf16.gmra.mrb[0].mxu0 %v3994
        %v4153 = vpop.f32.mrb[0].mxu0
        %v4154 = vadd.f32 %v4014, %v4153
        %v4155 = vpop.f32.mrb[0].mxu0
        %v4156 = vpop.f32.mrb[0].mxu0
        %v4157 = vadd.f32 %v4014, %v4156
        %v4158 = vpop.f32.mrb[0].mxu0
        %4159 = vdwg.mxu0
        %v4160 = vmul.f32 %v4098, 0.5
        %v4161 = vmul.f32 %v4101, 0.5
        %v4162 = vmul.f32 %v4106, 0.5
        %v4163 = vmul.f32 %v4109, 0.5
        %v4164 = vmul.f32 %v4114, 0.5
        %v4165 = vmul.f32 %v4117, 0.5
        %v4166 = vmul.f32 %v4122, 0.5
        %v4167 = vmul.f32 %v4125, 0.5
        %v4168 = vmul.f32 %v4130, 0.5
        %v4169 = vmul.f32 %v4133, 0.5
        %v4170 = vmul.f32 %v4138, 0.5
        %v4171 = vmul.f32 %v4141, 0.5
        %v4172 = vmul.f32 %v4146, 0.5
        %v4173 = vmul.f32 %v4149, 0.5
        %v4174 = vmul.f32 %v4154, 0.5
        %v4175 = vmul.f32 %v4157, 0.5
        %v4176 = vmul.f32 %v4098, 0.70710677
        %v4177 = vmul.f32 %v4101, 0.70710677
        %v4178 = vmul.f32 %v4106, 0.70710677
        %v4179 = vmul.f32 %v4109, 0.70710677
        %v4180 = vmul.f32 %v4114, 0.70710677
        %v4181 = vmul.f32 %v4117, 0.70710677
        %v4182 = vmul.f32 %v4122, 0.70710677
        %v4183 = vmul.f32 %v4125, 0.70710677
        %v4184 = vmul.f32 %v4130, 0.70710677
        %v4185 = vmul.f32 %v4133, 0.70710677
        %v4186 = vmul.f32 %v4138, 0.70710677
        %v4187 = vmul.f32 %v4141, 0.70710677
        %v4188 = vmul.f32 %v4146, 0.70710677
        %v4189 = vmul.f32 %v4149, 0.70710677
        %v4190 = vmul.f32 %v4154, 0.70710677
        %v4191 = vmul.f32 %v4157, 0.70710677
        %v4192 = verf.f32.pop %v4176
        %v4193 = verf.f32.pop %v4177
        %v4194 = verf.f32.pop %v4178
        %v4195 = verf.f32.pop %v4179
        %v4196 = verf.f32.pop %v4180
        %v4197 = verf.f32.pop %v4181
        %v4198 = verf.f32.pop %v4182
        %v4199 = verf.f32.pop %v4183
        %v4200 = verf.f32.pop %v4184
        %v4201 = verf.f32.pop %v4185
        %v4202 = verf.f32.pop %v4186
        %v4203 = verf.f32.pop %v4187
        %v4204 = verf.f32.pop %v4188
        %v4205 = verf.f32.pop %v4189
        %v4206 = verf.f32.pop %v4190
        %v4207 = verf.f32.pop %v4191
        %v4208 = vadd.f32 %v4192, 1.0
        %v4209 = vadd.f32 %v4193, 1.0
        %v4210 = vadd.f32 %v4194, 1.0
        %v4211 = vadd.f32 %v4195, 1.0
        %v4212 = vadd.f32 %v4196, 1.0
        %v4213 = vadd.f32 %v4197, 1.0
        %v4214 = vadd.f32 %v4198, 1.0
        %v4215 = vadd.f32 %v4199, 1.0
        %v4216 = vadd.f32 %v4200, 1.0
        %v4217 = vadd.f32 %v4201, 1.0
        %v4218 = vadd.f32 %v4202, 1.0
        %v4219 = vadd.f32 %v4203, 1.0
        %v4220 = vadd.f32 %v4204, 1.0
        %v4221 = vadd.f32 %v4205, 1.0
        %v4222 = vadd.f32 %v4206, 1.0
        %v4223 = vadd.f32 %v4207, 1.0
        %v4224 = vmul.f32 %v4160, %v4208
        %v4225 = vmul.f32 %v4161, %v4209
        %v4226 = vmul.f32 %v4162, %v4210
        %v4227 = vmul.f32 %v4163, %v4211
        %v4228 = vmul.f32 %v4164, %v4212
        %v4229 = vmul.f32 %v4165, %v4213
        %v4230 = vmul.f32 %v4166, %v4214
        %v4231 = vmul.f32 %v4167, %v4215
        %v4232 = vmul.f32 %v4168, %v4216
        %v4233 = vmul.f32 %v4169, %v4217
        %v4234 = vmul.f32 %v4170, %v4218
        %v4235 = vmul.f32 %v4171, %v4219
        %v4236 = vmul.f32 %v4172, %v4220
        %v4237 = vmul.f32 %v4173, %v4221
        %v4238 = vmul.f32 %v4174, %v4222
        %v4239 = vmul.f32 %v4175, %v4223
        %v4240 = vpack.c.bf16 %v4225, %v4224
        %v4241 = vpack.c.bf16 %v4227, %v4226
        %v4242 = vpack.c.bf16 %v4229, %v4228
        %v4243 = vpack.c.bf16 %v4231, %v4230
        %v4244 = vpack.c.bf16 %v4233, %v4232
        %v4245 = vpack.c.bf16 %v4235, %v4234
        %v4246 = vpack.c.bf16 %v4237, %v4236
        %v4247 = vpack.c.bf16 %v4239, %v4238
        %v4248 = vld [vmem:[%s420] sm:$0xf]
        %v4249 = vld [vmem:[%s420 + $0x4] sm:$0xf]
        %v4250 = vld [vmem:[%s420 + $0x8] sm:$0xf]
        %v4251 = vld [vmem:[%s420 + $0xc] sm:$0xf]
        %v4252 = vld [vmem:[%s420 + $0x10] sm:$0xf]
        %v4253 = vld [vmem:[%s420 + $0x14] sm:$0xf]
        %v4254 = vld [vmem:[%s420 + $0x18] sm:$0xf]
        %v4255 = vld [vmem:[%s420 + $0x1c] sm:$0xf]
        %v4256 = vld [vmem:[%s420 + $0x20] sm:$0xf]
        %v4257 = vld [vmem:[%s420 + $0x24] sm:$0xf]
        %v4258 = vld [vmem:[%s420 + $0x28] sm:$0xf]
        %v4259 = vld [vmem:[%s420 + $0x2c] sm:$0xf]
        %v4260 = vld [vmem:[%s420 + $0x30] sm:$0xf]
        %v4261 = vld [vmem:[%s420 + $0x34] sm:$0xf]
        %v4262 = vld [vmem:[%s420 + $0x38] sm:$0xf]
        %v4263 = vld [vmem:[%s420 + $0x3c] sm:$0xf]
        %v4264 = vlaneseq
        %v4265 = vshrl.u32 %v4264, 7
        %v4266 = vsub.s32 5, %v4265
        %v4267 = vrot.slane %v529, %v4266
        %v4284 = vunpack.c.l.b16 %v4248
        %v4285 = vunpack.c.l.b16 %v4249
        %v4286 = vunpack.c.l.b16 %v4250
        %v4287 = vunpack.c.l.b16 %v4251
        %v4288 = vunpack.c.l.b16 %v4252
        %v4289 = vunpack.c.l.b16 %v4253
        %v4290 = vunpack.c.l.b16 %v4254
        %v4291 = vunpack.c.l.b16 %v4255
        %v4292 = vunpack.c.l.b16 %v4256
        %v4293 = vunpack.c.l.b16 %v4257
        %v4294 = vunpack.c.l.b16 %v4258
        %v4295 = vunpack.c.l.b16 %v4259
        %v4296 = vunpack.c.l.b16 %v4260
        %v4297 = vunpack.c.l.b16 %v4261
        %v4298 = vunpack.c.l.b16 %v4262
        %v4299 = vunpack.c.l.b16 %v4263
        %v4300 = vpack.c.b16 %v4285, %v4284
        %v4301 = vpack.c.b16 %v4287, %v4286
        %v4302 = vpack.c.b16 %v4289, %v4288
        %v4303 = vpack.c.b16 %v4291, %v4290
        %v4304 = vpack.c.b16 %v4293, %v4292
        %v4305 = vpack.c.b16 %v4295, %v4294
        %v4306 = vpack.c.b16 %v4297, %v4296
        %v4307 = vpack.c.b16 %v4299, %v4298
        %4316 = vmatprep.subr.bf16.mxu0 0
        %4317 = vmatpush1.bf16.msra.mxu0 %v4300
        %4318 = vmatprep.subr.bf16.mxu0 0
        %4319 = vmatpush1.bf16.msra.mxu0 %v4301
        %4320 = vmatprep.subr.bf16.mxu0 0
        %4321 = vmatpush1.bf16.msra.mxu0 %v4302
        %4322 = vmatprep.subr.bf16.mxu0 0
        %4323 = vmatpush1.bf16.msra.mxu0 %v4303
        %4324 = vmatprep.subr.bf16.mxu0 0
        %4325 = vmatpush1.bf16.msra.mxu0 %v4304
        %4326 = vmatprep.subr.bf16.mxu0 0
        %4327 = vmatpush1.bf16.msra.mxu0 %v4305
        %4328 = vmatprep.subr.bf16.mxu0 0
        %4329 = vmatpush1.bf16.msra.mxu0 %v4306
        %4330 = vmatprep.subr.bf16.mxu0 0
        %4331 = vmatpush1.bf16.msra.mxu0 %v4307
        %4332 = vmatprep.subr.bf16.mxu0 0
        %4333 = vmatpush1.bf16.msra.mxu0 0
        %4334 = vmatprep.subr.bf16.mxu0 0
        %4335 = vmatpush1.bf16.msra.mxu0 0
        %4336 = vmatprep.subr.bf16.mxu0 0
        %4337 = vmatpush1.bf16.msra.mxu0 0
        %4338 = vmatprep.subr.bf16.mxu0 0
        %4339 = vmatpush1.bf16.msra.mxu0 0
        %4340 = vmatprep.subr.bf16.mxu0 0
        %4341 = vmatpush1.bf16.msra.mxu0 0
        %4342 = vmatprep.subr.bf16.mxu0 0
        %4343 = vmatpush1.bf16.msra.mxu0 0
        %4344 = vmatprep.subr.bf16.mxu0 0
        %4345 = vmatpush1.bf16.msra.mxu0 0
        %4346 = vmatprep.subr.bf16.mxu0 0
        %4347 = vmatpush1.bf16.msra.mxu0 0
        %4348 = vmatprep.mubr.bf16.mxu0 0
        %4349 = vmatmul.mubr.bf16.gmra.mrb[0].mxu0 %v4240
        %v4350 = vpop.f32.mrb[0].mxu0
        %v4351 = vadd.f32 %v4267, %v4350
        %v4352 = vpop.f32.mrb[0].mxu0
        %v4353 = vpop.f32.mrb[0].mxu0
        %v4354 = vadd.f32 %v4267, %v4353
        %v4355 = vpop.f32.mrb[0].mxu0
        %4356 = vmatprep.mubr.bf16.mxu0 0
        %4357 = vmatmul.mubr.bf16.gmra.mrb[0].mxu0 %v4241
        %v4358 = vpop.f32.mrb[0].mxu0
        %v4359 = vadd.f32 %v4267, %v4358
        %v4360 = vpop.f32.mrb[0].mxu0
        %v4361 = vpop.f32.mrb[0].mxu0
        %v4362 = vadd.f32 %v4267, %v4361
        %v4363 = vpop.f32.mrb[0].mxu0
        %4364 = vmatprep.mubr.bf16.mxu0 0
        %4365 = vmatmul.mubr.bf16.gmra.mrb[0].mxu0 %v4242
        %v4366 = vpop.f32.mrb[0].mxu0
        %v4367 = vadd.f32 %v4267, %v4366
        %v4368 = vpop.f32.mrb[0].mxu0
        %v4369 = vpop.f32.mrb[0].mxu0
        %v4370 = vadd.f32 %v4267, %v4369
        %v4371 = vpop.f32.mrb[0].mxu0
        %4372 = vmatprep.mubr.bf16.mxu0 0
        %4373 = vmatmul.mubr.bf16.gmra.mrb[0].mxu0 %v4243
        %v4374 = vpop.f32.mrb[0].mxu0
        %v4375 = vadd.f32 %v4267, %v4374
        %v4376 = vpop.f32.mrb[0].mxu0
        %v4377 = vpop.f32.mrb[0].mxu0
        %v4378 = vadd.f32 %v4267, %v4377
        %v4379 = vpop.f32.mrb[0].mxu0
        %4380 = vmatprep.mubr.bf16.mxu0 0
        %4381 = vmatmul.mubr.bf16.gmra.mrb[0].mxu0 %v4244
        %v4382 = vpop.f32.mrb[0].mxu0
        %v4383 = vadd.f32 %v4267, %v4382
        %v4384 = vpop.f32.mrb[0].mxu0
        %v4385 = vpop.f32.mrb[0].mxu0
        %v4386 = vadd.f32 %v4267, %v4385
        %v4387 = vpop.f32.mrb[0].mxu0
        %4388 = vmatprep.mubr.bf16.mxu0 0
        %4389 = vmatmul.mubr.bf16.gmra.mrb[0].mxu0 %v4245
        %v4390 = vpop.f32.mrb[0].mxu0
        %v4391 = vadd.f32 %v4267, %v4390
        %v4392 = vpop.f32.mrb[0].mxu0
        %v4393 = vpop.f32.mrb[0].mxu0
        %v4394 = vadd.f32 %v4267, %v4393
        %v4395 = vpop.f32.mrb[0].mxu0
        %4396 = vmatprep.mubr.bf16.mxu0 0
        %4397 = vmatmul.mubr.bf16.gmra.mrb[0].mxu0 %v4246
        %v4398 = vpop.f32.mrb[0].mxu0
        %v4399 = vadd.f32 %v4267, %v4398
        %v4400 = vpop.f32.mrb[0].mxu0
        %v4401 = vpop.f32.mrb[0].mxu0
        %v4402 = vadd.f32 %v4267, %v4401
        %v4403 = vpop.f32.mrb[0].mxu0
        %4404 = vmatprep.mubr.bf16.mxu0 0
        %4405 = vmatmul.mubr.bf16.gmra.mrb[0].mxu0 %v4247
        %v4406 = vpop.f32.mrb[0].mxu0
        %v4407 = vadd.f32 %v4267, %v4406
        %v4408 = vpop.f32.mrb[0].mxu0
        %v4409 = vpop.f32.mrb[0].mxu0
        %v4410 = vadd.f32 %v4267, %v4409
        %v4411 = vpop.f32.mrb[0].mxu0
        %4412 = vdwg.mxu0
        %v4413 = vadd.f32 %v3755, %v4351
        %v4414 = vadd.f32 %v3756, %v4354
        %v4415 = vadd.f32 %v3757, %v4359
        %v4416 = vadd.f32 %v3758, %v4362
        %v4417 = vadd.f32 %v3759, %v4367
        %v4418 = vadd.f32 %v3760, %v4370
        %v4419 = vadd.f32 %v3761, %v4375
        %v4420 = vadd.f32 %v3762, %v4378
        %v4421 = vadd.f32 %v3763, %v4383
        %v4422 = vadd.f32 %v3764, %v4386
        %v4423 = vadd.f32 %v3765, %v4391
        %v4424 = vadd.f32 %v3766, %v4394
        %v4425 = vadd.f32 %v3767, %v4399
        %v4426 = vadd.f32 %v3768, %v4402
        %v4427 = vadd.f32 %v3769, %v4407
        %v4428 = vadd.f32 %v3770, %v4410
        %4429 = vst [vmem:[%s473] sm:$0xff] %v4413
        %4430 = vst [vmem:[%s473 + $0x8] sm:$0xff] %v4414
        %4431 = vst [vmem:[%s473 + $0x10] sm:$0xff] %v4415
        %4432 = vst [vmem:[%s473 + $0x18] sm:$0xff] %v4416
        %4433 = vst [vmem:[%s473 + $0x20] sm:$0xff] %v4417
        %4434 = vst [vmem:[%s473 + $0x28] sm:$0xff] %v4418
        %4435 = vst [vmem:[%s473 + $0x30] sm:$0xff] %v4419
        %4436 = vst [vmem:[%s473 + $0x38] sm:$0xff] %v4420
        %4437 = vst [vmem:[%s473 + $0x40] sm:$0xff] %v4421
        %4438 = vst [vmem:[%s473 + $0x48] sm:$0xff] %v4422
        %4439 = vst [vmem:[%s473 + $0x50] sm:$0xff] %v4423
        %4440 = vst [vmem:[%s473 + $0x58] sm:$0xff] %v4424
        %4441 = vst [vmem:[%s473 + $0x60] sm:$0xff] %v4425
        %4442 = vst [vmem:[%s473 + $0x68] sm:$0xff] %v4426
        %4443 = vst [vmem:[%s473 + $0x70] sm:$0xff] %v4427
        %4444 = vst [vmem:[%s473 + $0x78] sm:$0xff] %v4428
        %s4445 = sand.u32 %s208, 1
        %s4446 = scalar_lea.sflag [#allocation5], %s4445
        %s4447 = sand.u32 %s208, 1
        %s4448 = smul.addr %s4447, 128
        %s4449 = scalar_lea.vmem [#allocation14], %s4448
        // Predicated region
        $region73: #{tpu_custom_call.1} parent=43 // pred_check
          %p4450 = pneg %p218
        $region74: #{tpu_custom_call.1} parent=43 // pred_check_branch
          %4452 = sbr.rel (%p4450) target = $region76
        $region75: #{tpu_custom_call.1} parent=43 // pred_region
          %s4453 = smul.u32 2, %s36
          %s4455 = ssub.s32 2048, 2048
          %4456 = vsyncadd %s4446, %s4455
          %s4457 = smul.addr %s4453, 8
          %s4458 = smul.addr %s4457, 128
          %s4459 = scalar_lea.hbm %s6, %s4458
          %s4460 = sshll.u32 %s4449, 4
          %s4461 = int_to_ptr.vmem [resolvable:$true] %s4460
          %4466 = dma.vmem_to_hbm [thread:$0]  %s4461, 2048, %s4459, %s4446, 128, 128, 8
        $region76: #{tpu_custom_call.1} parent=43 // pred_fallthru
          _
      $region44: #{tpu_custom_call.1} parent=5 // pred_fallthru
        _
      %p4467 = scmp.le.s32.totalorder 2, %s27
      // Predicated region
      $region77: #{tpu_custom_call.1} parent=5 // pred_check
        %p4468 = pneg %p4467
      $region78: #{tpu_custom_call.1} parent=5 // pred_check_branch
        %4470 = sbr.rel (%p4468) target = $region80
      $region79: #{tpu_custom_call.1} parent=5 // pred_region
        %s4471 = ssub.s32 %s27, 2
        // Predicated region
        $region81: #{tpu_custom_call.1} parent=79 // pred_check
          %p4472 = pneg %p224
        $region82: #{tpu_custom_call.1} parent=79 // pred_check_branch
          %4474 = sbr.rel (%p4472) target = $region84
        $region83: #{tpu_custom_call.1} parent=79 // pred_region
          %s4475 = sand.u32 %s209, 1
          %s4476 = scalar_lea.sflag [#allocation5], %s4475
          %s4477 = sand.u32 %s209, 1
          %s4478 = smul.addr %s4477, 128
          %s4479 = scalar_lea.vmem [#allocation14], %s4478
          %4480 = dma.done %s4476, 2048
        $region84: #{tpu_custom_call.1} parent=79 // pred_fallthru
          _
      $region80: #{tpu_custom_call.1} parent=5 // pred_fallthru
        _
    $region6: #{tpu_custom_call.1} parent=1 // loop_footer
      %s31 = sadd.s32 1, %s27
    $region7: #{tpu_custom_call.1} parent=1 // loop_footer_branch
      %26 = sbr.rel target = $region3
    $region8: #{tpu_custom_call.1} parent=1 // loop_exit
      _
    %4481 = vsyncpa [#allocation4], 1
    %s4482 = scalar_lea.sflag [#allocation4], 1
    %4483 = vsyncpa %s4482, 1
    %4484 = vsyncpa [#allocation7], 1
    %s4485 = scalar_lea.sflag [#allocation7], 1
    %4486 = vsyncpa %s4485, 1
    %4487 = vsyncpa [#allocation10], 1
    %s4488 = scalar_lea.sflag [#allocation10], 1
    %4489 = vsyncpa %s4488, 1
    %4490 = vsyncpa [#allocation13], 1
    %s4491 = scalar_lea.sflag [#allocation13], 1
    %4492 = vsyncpa %s4491, 1
    %4493 = vsyncpa [#allocation5], 1
    %s4494 = scalar_lea.sflag [#allocation5], 1
    %4495 = vsyncpa %s4494, 1

</llo_original>
